<compile_context>
chip_gen: v7x
topology: tpu7x:2x2x1
jax: 0.10.0
libtpu: 0.0.40
codegen_flags: <defaults>
</compile_context>

<pallas_src>
import math

import jax
import jax.numpy as jnp
from jax.experimental import pallas as pl
from jax.experimental.pallas import tpu as pltpu

EPS = 1e-5
SQRT_HALF = 0.7071067811865476  # sqrt(0.5)


def _make_kernel(num_layers, mm_dtype):
    """TabNetDecoder body with all decoder-step chains fused along lanes."""

    def kernel(x_ref, wa_ref, wb_ref, wfc_ref, avg_ref, exp_ref, out_ref):
        avg = avg_ref[...]     # (nct, TB): each row averages one GBN chunk (1/vbs)
        exp = exp_ref[...]     # (TB, nct): broadcast per-chunk stats back to rows

        def gbn(z):
            # Training-mode BatchNorm per virtual-batch chunk (gamma=1, beta=0),
            # independently per feature column.  Chunk stats via tiny MXU
            # matmuls; two-pass (centered) variance; rsqrt on the EUP.
            mu_c = jnp.dot(avg, z, preferred_element_type=jnp.float32)
            mu = jnp.dot(exp, mu_c, preferred_element_type=jnp.float32)
            d = z - mu
            var_c = jnp.dot(avg, d * d, preferred_element_type=jnp.float32)
            var = jnp.dot(exp, var_c, preferred_element_type=jnp.float32)
            return d * jax.lax.rsqrt(var + EPS)

        def glu(h, wa, wb):
            # Two block-diagonal matmuls give both GLU halves for all steps at
            # once (lane-aligned; no in-kernel slicing or transposes).
            hm = h.astype(mm_dtype)
            za = jnp.dot(hm, wa, preferred_element_type=jnp.float32)  # (TB, SR)
            zb = jnp.dot(hm, wb, preferred_element_type=jnp.float32)  # (TB, SR)
            return gbn(za) * jax.nn.sigmoid(gbn(zb))

        h = glu(x_ref[...], wa_ref[0], wb_ref[0])        # first GLU: no residual
        for i in range(1, num_layers):
            h = (h + glu(h, wa_ref[i], wb_ref[i])) * SQRT_HALF
        # Stacked per-step fc: the sum over decoder steps falls out of one
        # matmul, and the (TB, D) output is written exactly once per tile.
        out_ref[...] = jnp.dot(h.astype(mm_dtype), wfc_ref[...],
                               preferred_element_type=jnp.float32
                               ).astype(out_ref.dtype)

    return kernel


def _pick_batch_tile(B, vbs_eff, max_tile):
    """Return (TB, B_pad).  Tiles hold whole GBN chunks and are 8-sublane
    aligned whenever the batch is actually tiled; >=2 tiles preferred (v7x has
    2 TensorCores and the parallel batch axis is what shards across them);
    awkward batch sizes are padded with whole dummy GBN chunks instead of
    silently becoming one huge tile."""
    step = vbs_eff * 8 // math.gcd(vbs_eff, 8)           # lcm(vbs_eff, 8)
    limit = min(max_tile, B // 2)
    exact = [tb for tb in range(step, limit + 1, step) if B % tb == 0]
    best = exact[-1] if exact else 0
    if best and 8 * best >= limit:
        return best, B                                   # big exact tile, nb >= 2
    if B <= max_tile:
        return B, B                                      # whole batch in one tile
    if best and 8 * best >= max_tile:
        return best, B
    tb = max((max_tile // step) * step, step)
    return tb, -(-B // tb) * tb                          # pad with dummy chunks


def _block_diag(blocks):
    """(S, R, R) per-step blocks -> (S*R, S*R) block-diagonal (host-side prep)."""
    S, R1, R2 = blocks.shape
    out = jnp.zeros((S, R1, S, R2), blocks.dtype)
    out = out.at[jnp.arange(S), :, jnp.arange(S), :].set(blocks)
    return out.reshape(S * R1, S * R2)


def _default_bf16_matmul():
    # bf16 MXU operands are the clear win on v6e / v7x; keep f32 on v5e & older
    # (no bf16 VPU there, and the cast becomes real packing work).
    try:
        kind = jax.devices()[0].device_kind.lower()
    except Exception:
        return False
    return ("v6" in kind) or ("v7" in kind)


def tabnet_decoder_forward(xs, w_shared, w_indep, w_fc, virtual_batch_size,
                           *, use_bf16_matmul=None, max_batch_tile=2048):
    """xs: (num_steps, B, R); w_shared: (num_shared, 2R, R);
    w_indep: (num_steps, num_indep, 2R, R); w_fc: (num_steps, D, R).
    Weights follow the PyTorch nn.Linear (out, in) convention."""
    num_steps, B, R = xs.shape
    num_shared = w_shared.shape[0]
    num_indep = w_indep.shape[1]
    D = w_fc.shape[1]
    SR = num_steps * R
    L = num_shared + num_indep
    assert L >= 1, "kernel assumes at least one GLU block per step"
    # TODO(synk): num_shared == num_indep == 0 (identity feature transformer)
    # is not handled by the fused kernel.

    if use_bf16_matmul is None:
        use_bf16_matmul = _default_bf16_matmul()
    mm_dtype = jnp.bfloat16 if use_bf16_matmul else jnp.float32

    # Ghost-batch-norm chunking (training semantics).
    n_chunks = max(B // virtual_batch_size, 1)
    assert B % n_chunks == 0, "batch must split evenly into virtual batches"
    # TODO(synk): pytorch-tabnet tolerates a smaller ragged last chunk
    # (ceil-chunking); unequal chunk sizes are not supported here.
    vbs_eff = B // n_chunks

    # Batch tiling: tiles contain whole GBN chunks so statistics match.
    TB, B_pad = _pick_batch_tile(B, vbs_eff, max_batch_tile)
    nct = TB // vbs_eff                      # GBN chunks per batch tile
    nb = B_pad // TB

    # ---- wrapper-side layout plumbing (free; enables step fusion) ----
    # Inputs: (num_steps, B, R) -> (B, num_steps*R), contiguous per batch tile.
    x2 = jnp.transpose(xs, (1, 0, 2)).reshape(B, SR).astype(mm_dtype)
    if B_pad != B:
        x2 = jnp.pad(x2, ((0, B_pad - B), (0, 0)))   # dummy chunks, discarded later

    # GLU weights: split (2R, R) -> two (R, R) halves, transpose to (in, out),
    # then block-diagonalize over steps (shared layers repeat the same block).
    glu_a, glu_b = [], []
    for i in range(num_shared):
        a = jnp.tile(w_shared[i, :R, :].T[None], (num_steps, 1, 1))
        b = jnp.tile(w_shared[i, R:, :].T[None], (num_steps, 1, 1))
        glu_a.append(_block_diag(a))
        glu_b.append(_block_diag(b))
    for i in range(num_indep):
        glu_a.append(_block_diag(jnp.swapaxes(w_indep[:, i, :R, :], 1, 2)))
        glu_b.append(_block_diag(jnp.swapaxes(w_indep[:, i, R:, :], 1, 2)))
    wglu_a = jnp.stack(glu_a, axis=0).astype(mm_dtype)     # (L, SR, SR)
    wglu_b = jnp.stack(glu_b, axis=0).astype(mm_dtype)     # (L, SR, SR)

    # Final fc: stack per-step (R, D) so one matmul also sums over steps.
    wfc = jnp.swapaxes(w_fc, 1, 2).reshape(SR, D).astype(mm_dtype)  # (SR, D)

    # Chunk-averaging / chunk-broadcast matrices (same for every batch tile).
    rows = jnp.arange(TB) // vbs_eff
    expand = (rows[:, None] == jnp.arange(nct)[None, :]).astype(jnp.float32)  # (TB, nct)
    average = expand.T / float(vbs_eff)                                       # (nct, TB)

    kernel = _make_kernel(L, mm_dtype)

    grid_spec = pltpu.PrefetchScalarGridSpec(
        num_scalar_prefetch=0,
        grid=(nb,),
        in_specs=[
            pl.BlockSpec((TB, SR), lambda b: (b, 0)),            # fused activations
            pl.BlockSpec((L, SR, SR), lambda b: (0, 0, 0)),       # GLU first halves
            pl.BlockSpec((L, SR, SR), lambda b: (0, 0, 0)),       # GLU gate halves
            pl.BlockSpec((SR, D), lambda b: (0, 0)),              # stacked fc
            pl.BlockSpec((nct, TB), lambda b: (0, 0)),            # chunk-average
            pl.BlockSpec((TB, nct), lambda b: (0, 0)),            # chunk-broadcast
        ],
        out_specs=pl.BlockSpec((TB, D), lambda b: (b, 0)),        # unpadded output
    )

    # VMEM budget: pipelined buffers + resident weights + in-kernel temporaries.
    def pad128(n):
        return ((n + 127) // 128) * 128
    itm = jnp.dtype(mm_dtype).itemsize
    est = (2 * TB * pad128(SR) * itm                      # x tile (double-buffered)
           + 2 * TB * pad128(D) * 4                       # output tile
           + 2 * (nct * pad128(TB) + TB * pad128(nct)) * 4
           + 2 * (2 * L * SR * pad128(SR) + SR * pad128(D)) * itm
           + 12 * TB * pad128(SR) * 4)                    # live f32 temporaries
    vmem_limit = int(min(48 << 20, max(24 << 20, 2 * est)))

    out = pl.pallas_call(
        kernel,
        out_shape=jax.ShapeDtypeStruct((B_pad, D), jnp.float32),
        grid_spec=grid_spec,
        compiler_params=pltpu.CompilerParams(
            dimension_semantics=("parallel",),
            vmem_limit_bytes=vmem_limit),
    )(x2, wglu_a, wglu_b, wfc, average, expand)

    return out[:B] if B_pad != B else out


def tabnet_decoder_reference(xs, w_shared, w_indep, w_fc, virtual_batch_size):
    """Pure-JAX reference mirroring the PyTorch forward (training-mode BN)."""
    num_steps, B, R = xs.shape
    n_chunks = max(B // virtual_batch_size, 1)
    vbs_eff = B // n_chunks

    def glu(h, w):
        z = h @ w.T
        zc = z.reshape(n_chunks, vbs_eff, 2 * R)
        mu = jnp.mean(zc, axis=1, keepdims=True)
        var = jnp.mean((zc - mu) ** 2, axis=1, keepdims=True)
        zn = ((zc - mu) / jnp.sqrt(var + EPS)).reshape(B, 2 * R)
        return zn[:, :R] * jax.nn.sigmoid(zn[:, R:])

    r = 0.0
    for s in range(num_steps):
        h = glu(xs[s], w_shared[0])
        for i in range(1, w_shared.shape[0]):
            h = (h + glu(h, w_shared[i])) * SQRT_HALF
        for i in range(w_indep.shape[1]):
            h = (h + glu(h, w_indep[s, i])) * SQRT_HALF
        r = r + h @ w_fc[s].T
    return r


if __name__ == "__main__":
    # Small config consistent with TabNetDecoder defaults.
    input_dims = 16
    reprs_dims = 8
    num_steps = 3
    num_indep = 2
    num_shared = 2
    virtual_batch_size = 4   # B=8 -> 2 ghost-batch chunks of 4
    batch = 8

    key = jax.random.PRNGKey(0)
    k_x, k_sh, k_ind, k_fc = jax.random.split(key, 4)

    # Encoder outputs: list of num_steps tensors (B, reprs_dims), stacked.
    xs = jax.random.normal(k_x, (num_steps, batch, reprs_dims), jnp.float32)

    # Deterministic synthetic parameters (PyTorch Linear convention: (out, in)).
    w_shared = 0.3 * jax.random.normal(
        k_sh, (num_shared, 2 * reprs_dims, reprs_dims), jnp.float32)
    w_indep = 0.3 * jax.random.normal(
        k_ind, (num_steps, num_indep, 2 * reprs_dims, reprs_dims), jnp.float32)
    w_fc = 0.3 * jax.random.normal(
        k_fc, (num_steps, input_dims, reprs_dims), jnp.float32)

    ref = tabnet_decoder_reference(xs, w_shared, w_indep, w_fc, virtual_batch_size)

    # Strict f32 path (matches the training-mode PyTorch forward).
    out = tabnet_decoder_forward(xs, w_shared, w_indep, w_fc, virtual_batch_size,
                                 use_bf16_matmul=False)
    out = jax.block_until_ready(out)
    assert out.shape == (batch, input_dims)
    assert jnp.allclose(out, ref, atol=2e-4, rtol=2e-4), "f32 mismatch vs reference"

    # Default path (bf16 MXU operands auto-enabled on v6e/v7x): looser check.
    out_fast = tabnet_decoder_forward(xs, w_shared, w_indep, w_fc,
                                      virtual_batch_size)
    out_fast = jax.block_until_ready(out_fast)
    assert bool(jnp.all(jnp.isfinite(out_fast)))
    assert jnp.allclose(out_fast, ref, atol=5e-2, rtol=5e-2), "fast-path mismatch"

    print("KERNEL_OK")
</pallas_src>

<mosaic_0001>
module attributes {stable_mosaic.version = 11 : i64} {
  func.func @kernel(%arg0: i32, %arg1: memref<8x24xf32, #tpu.memory_space<vmem>>, %arg2: memref<4x24x24xf32, #tpu.memory_space<vmem>>, %arg3: memref<4x24x24xf32, #tpu.memory_space<vmem>>, %arg4: memref<24x16xf32, #tpu.memory_space<vmem>>, %arg5: memref<2x8xf32, #tpu.memory_space<vmem>>, %arg6: memref<8x2xf32, #tpu.memory_space<vmem>>, %arg7: memref<8x16xf32, #tpu.memory_space<vmem>>) attributes {dimension_semantics = [#tpu.dimension_semantics<parallel>], iteration_bounds = array<i64: 1>, scalar_prefetch = 0 : i64, scratch_operands = 0 : i64, tpu.core_type = #tpu.core_type<tc>, window_params = [{transform_indices = @transform_0, window_bounds = array<i64: 8, 24>}, {pipeline_mode = #tpu.pipeline_mode<synchronous>, transform_indices = @transform_1, window_bounds = array<i64: 4, 24, 24>}, {pipeline_mode = #tpu.pipeline_mode<synchronous>, transform_indices = @transform_2, window_bounds = array<i64: 4, 24, 24>}, {pipeline_mode = #tpu.pipeline_mode<synchronous>, transform_indices = @transform_3, window_bounds = array<i64: 24, 16>}, {pipeline_mode = #tpu.pipeline_mode<synchronous>, transform_indices = @transform_4, window_bounds = array<i64: 2, 8>}, {pipeline_mode = #tpu.pipeline_mode<synchronous>, transform_indices = @transform_5, window_bounds = array<i64: 8, 2>}, {transform_indices = @transform_6, window_bounds = array<i64: 8, 16>}]} {
    %c0 = arith.constant 0 : index
    %c0_0 = arith.constant 0 : index
    %0 = vector.load %arg5[%c0, %c0_0] : memref<2x8xf32, #tpu.memory_space<vmem>>, vector<2x8xf32>
    %c0_1 = arith.constant 0 : index
    %c0_2 = arith.constant 0 : index
    %1 = vector.load %arg6[%c0_1, %c0_2] : memref<8x2xf32, #tpu.memory_space<vmem>>, vector<8x2xf32>
    %c0_3 = arith.constant 0 : index
    %c0_4 = arith.constant 0 : index
    %2 = vector.load %arg1[%c0_3, %c0_4] : memref<8x24xf32, #tpu.memory_space<vmem>>, vector<8x24xf32>
    %c0_5 = arith.constant 0 : index
    %c0_6 = arith.constant 0 : index
    %c0_7 = arith.constant 0 : index
    %3 = vector.load %arg2[%c0_5, %c0_6, %c0_7] : memref<4x24x24xf32, #tpu.memory_space<vmem>>, vector<1x24x24xf32>
    %4 = vector.shape_cast %3 : vector<1x24x24xf32> to vector<24x24xf32>
    %c0_8 = arith.constant 0 : index
    %c0_9 = arith.constant 0 : index
    %c0_10 = arith.constant 0 : index
    %5 = vector.load %arg3[%c0_8, %c0_9, %c0_10] : memref<4x24x24xf32, #tpu.memory_space<vmem>>, vector<1x24x24xf32>
    %6 = vector.shape_cast %5 : vector<1x24x24xf32> to vector<24x24xf32>
    %cst = arith.constant dense<0.000000e+00> : vector<8x24xf32>
    %7 = tpu.matmul %2, %4, %cst {dimension_numbers = #tpu.dot_dimension_numbers<[1], [0], [0], [1], [0, 0, 1, 1], [], []>} : vector<8x24xf32>, vector<24x24xf32>, vector<8x24xf32> -> vector<8x24xf32>
    %cst_11 = arith.constant dense<0.000000e+00> : vector<8x24xf32>
    %8 = tpu.matmul %2, %6, %cst_11 {dimension_numbers = #tpu.dot_dimension_numbers<[1], [0], [0], [1], [0, 0, 1, 1], [], []>} : vector<8x24xf32>, vector<24x24xf32>, vector<8x24xf32> -> vector<8x24xf32>
    %cst_12 = arith.constant dense<0.000000e+00> : vector<2x24xf32>
    %9 = tpu.matmul %0, %7, %cst_12 {dimension_numbers = #tpu.dot_dimension_numbers<[1], [0], [0], [1], [0, 0, 1, 1], [], []>} : vector<2x8xf32>, vector<8x24xf32>, vector<2x24xf32> -> vector<2x24xf32>
    %cst_13 = arith.constant dense<0.000000e+00> : vector<8x24xf32>
    %10 = tpu.matmul %1, %9, %cst_13 {dimension_numbers = #tpu.dot_dimension_numbers<[1], [0], [0], [1], [0, 0, 1, 1], [], []>} : vector<8x2xf32>, vector<2x24xf32>, vector<8x24xf32> -> vector<8x24xf32>
    %11 = arith.subf %7, %10 : vector<8x24xf32>
    %12 = arith.mulf %11, %11 : vector<8x24xf32>
    %cst_14 = arith.constant dense<0.000000e+00> : vector<2x24xf32>
    %13 = tpu.matmul %0, %12, %cst_14 {dimension_numbers = #tpu.dot_dimension_numbers<[1], [0], [0], [1], [0, 0, 1, 1], [], []>} : vector<2x8xf32>, vector<8x24xf32>, vector<2x24xf32> -> vector<2x24xf32>
    %cst_15 = arith.constant dense<0.000000e+00> : vector<8x24xf32>
    %14 = tpu.matmul %1, %13, %cst_15 {dimension_numbers = #tpu.dot_dimension_numbers<[1], [0], [0], [1], [0, 0, 1, 1], [], []>} : vector<8x2xf32>, vector<2x24xf32>, vector<8x24xf32> -> vector<8x24xf32>
    %cst_16 = arith.constant 9.99999974E-6 : f32
    %15 = vector.broadcast %cst_16 : f32 to vector<8x24xf32>
    %16 = arith.addf %14, %15 : vector<8x24xf32>
    %17 = math.rsqrt %16 : vector<8x24xf32>
    %18 = arith.mulf %11, %17 : vector<8x24xf32>
    %cst_17 = arith.constant dense<0.000000e+00> : vector<2x24xf32>
    %19 = tpu.matmul %0, %8, %cst_17 {dimension_numbers = #tpu.dot_dimension_numbers<[1], [0], [0], [1], [0, 0, 1, 1], [], []>} : vector<2x8xf32>, vector<8x24xf32>, vector<2x24xf32> -> vector<2x24xf32>
    %cst_18 = arith.constant dense<0.000000e+00> : vector<8x24xf32>
    %20 = tpu.matmul %1, %19, %cst_18 {dimension_numbers = #tpu.dot_dimension_numbers<[1], [0], [0], [1], [0, 0, 1, 1], [], []>} : vector<8x2xf32>, vector<2x24xf32>, vector<8x24xf32> -> vector<8x24xf32>
    %21 = arith.subf %8, %20 : vector<8x24xf32>
    %22 = arith.mulf %21, %21 : vector<8x24xf32>
    %cst_19 = arith.constant dense<0.000000e+00> : vector<2x24xf32>
    %23 = tpu.matmul %0, %22, %cst_19 {dimension_numbers = #tpu.dot_dimension_numbers<[1], [0], [0], [1], [0, 0, 1, 1], [], []>} : vector<2x8xf32>, vector<8x24xf32>, vector<2x24xf32> -> vector<2x24xf32>
    %cst_20 = arith.constant dense<0.000000e+00> : vector<8x24xf32>
    %24 = tpu.matmul %1, %23, %cst_20 {dimension_numbers = #tpu.dot_dimension_numbers<[1], [0], [0], [1], [0, 0, 1, 1], [], []>} : vector<8x2xf32>, vector<2x24xf32>, vector<8x24xf32> -> vector<8x24xf32>
    %cst_21 = arith.constant 9.99999974E-6 : f32
    %25 = vector.broadcast %cst_21 : f32 to vector<8x24xf32>
    %26 = arith.addf %24, %25 : vector<8x24xf32>
    %27 = math.rsqrt %26 : vector<8x24xf32>
    %28 = arith.mulf %21, %27 : vector<8x24xf32>
    %29 = arith.negf %28 : vector<8x24xf32>
    %30 = math.exp %29 : vector<8x24xf32>
    %cst_22 = arith.constant 1.000000e+00 : f32
    %31 = vector.broadcast %cst_22 : f32 to vector<8x24xf32>
    %32 = arith.addf %31, %30 : vector<8x24xf32>
    %33 = arith.divf %31, %32 : vector<8x24xf32>
    %34 = arith.mulf %18, %33 : vector<8x24xf32>
    %c1 = arith.constant 1 : index
    %c0_23 = arith.constant 0 : index
    %c0_24 = arith.constant 0 : index
    %35 = vector.load %arg2[%c1, %c0_23, %c0_24] : memref<4x24x24xf32, #tpu.memory_space<vmem>>, vector<1x24x24xf32>
    %36 = vector.shape_cast %35 : vector<1x24x24xf32> to vector<24x24xf32>
    %c1_25 = arith.constant 1 : index
    %c0_26 = arith.constant 0 : index
    %c0_27 = arith.constant 0 : index
    %37 = vector.load %arg3[%c1_25, %c0_26, %c0_27] : memref<4x24x24xf32, #tpu.memory_space<vmem>>, vector<1x24x24xf32>
    %38 = vector.shape_cast %37 : vector<1x24x24xf32> to vector<24x24xf32>
    %cst_28 = arith.constant dense<0.000000e+00> : vector<8x24xf32>
    %39 = tpu.matmul %34, %36, %cst_28 {dimension_numbers = #tpu.dot_dimension_numbers<[1], [0], [0], [1], [0, 0, 1, 1], [], []>} : vector<8x24xf32>, vector<24x24xf32>, vector<8x24xf32> -> vector<8x24xf32>
    %cst_29 = arith.constant dense<0.000000e+00> : vector<8x24xf32>
    %40 = tpu.matmul %34, %38, %cst_29 {dimension_numbers = #tpu.dot_dimension_numbers<[1], [0], [0], [1], [0, 0, 1, 1], [], []>} : vector<8x24xf32>, vector<24x24xf32>, vector<8x24xf32> -> vector<8x24xf32>
    %cst_30 = arith.constant dense<0.000000e+00> : vector<2x24xf32>
    %41 = tpu.matmul %0, %39, %cst_30 {dimension_numbers = #tpu.dot_dimension_numbers<[1], [0], [0], [1], [0, 0, 1, 1], [], []>} : vector<2x8xf32>, vector<8x24xf32>, vector<2x24xf32> -> vector<2x24xf32>
    %cst_31 = arith.constant dense<0.000000e+00> : vector<8x24xf32>
    %42 = tpu.matmul %1, %41, %cst_31 {dimension_numbers = #tpu.dot_dimension_numbers<[1], [0], [0], [1], [0, 0, 1, 1], [], []>} : vector<8x2xf32>, vector<2x24xf32>, vector<8x24xf32> -> vector<8x24xf32>
    %43 = arith.subf %39, %42 : vector<8x24xf32>
    %44 = arith.mulf %43, %43 : vector<8x24xf32>
    %cst_32 = arith.constant dense<0.000000e+00> : vector<2x24xf32>
    %45 = tpu.matmul %0, %44, %cst_32 {dimension_numbers = #tpu.dot_dimension_numbers<[1], [0], [0], [1], [0, 0, 1, 1], [], []>} : vector<2x8xf32>, vector<8x24xf32>, vector<2x24xf32> -> vector<2x24xf32>
    %cst_33 = arith.constant dense<0.000000e+00> : vector<8x24xf32>
    %46 = tpu.matmul %1, %45, %cst_33 {dimension_numbers = #tpu.dot_dimension_numbers<[1], [0], [0], [1], [0, 0, 1, 1], [], []>} : vector<8x2xf32>, vector<2x24xf32>, vector<8x24xf32> -> vector<8x24xf32>
    %cst_34 = arith.constant 9.99999974E-6 : f32
    %47 = vector.broadcast %cst_34 : f32 to vector<8x24xf32>
    %48 = arith.addf %46, %47 : vector<8x24xf32>
    %49 = math.rsqrt %48 : vector<8x24xf32>
    %50 = arith.mulf %43, %49 : vector<8x24xf32>
    %cst_35 = arith.constant dense<0.000000e+00> : vector<2x24xf32>
    %51 = tpu.matmul %0, %40, %cst_35 {dimension_numbers = #tpu.dot_dimension_numbers<[1], [0], [0], [1], [0, 0, 1, 1], [], []>} : vector<2x8xf32>, vector<8x24xf32>, vector<2x24xf32> -> vector<2x24xf32>
    %cst_36 = arith.constant dense<0.000000e+00> : vector<8x24xf32>
    %52 = tpu.matmul %1, %51, %cst_36 {dimension_numbers = #tpu.dot_dimension_numbers<[1], [0], [0], [1], [0, 0, 1, 1], [], []>} : vector<8x2xf32>, vector<2x24xf32>, vector<8x24xf32> -> vector<8x24xf32>
    %53 = arith.subf %40, %52 : vector<8x24xf32>
    %54 = arith.mulf %53, %53 : vector<8x24xf32>
    %cst_37 = arith.constant dense<0.000000e+00> : vector<2x24xf32>
    %55 = tpu.matmul %0, %54, %cst_37 {dimension_numbers = #tpu.dot_dimension_numbers<[1], [0], [0], [1], [0, 0, 1, 1], [], []>} : vector<2x8xf32>, vector<8x24xf32>, vector<2x24xf32> -> vector<2x24xf32>
    %cst_38 = arith.constant dense<0.000000e+00> : vector<8x24xf32>
    %56 = tpu.matmul %1, %55, %cst_38 {dimension_numbers = #tpu.dot_dimension_numbers<[1], [0], [0], [1], [0, 0, 1, 1], [], []>} : vector<8x2xf32>, vector<2x24xf32>, vector<8x24xf32> -> vector<8x24xf32>
    %cst_39 = arith.constant 9.99999974E-6 : f32
    %57 = vector.broadcast %cst_39 : f32 to vector<8x24xf32>
    %58 = arith.addf %56, %57 : vector<8x24xf32>
    %59 = math.rsqrt %58 : vector<8x24xf32>
    %60 = arith.mulf %53, %59 : vector<8x24xf32>
    %61 = arith.negf %60 : vector<8x24xf32>
    %62 = math.exp %61 : vector<8x24xf32>
    %cst_40 = arith.constant 1.000000e+00 : f32
    %63 = vector.broadcast %cst_40 : f32 to vector<8x24xf32>
    %64 = arith.addf %63, %62 : vector<8x24xf32>
    %65 = arith.divf %63, %64 : vector<8x24xf32>
    %66 = arith.mulf %50, %65 : vector<8x24xf32>
    %67 = arith.addf %34, %66 : vector<8x24xf32>
    %cst_41 = arith.constant 0.707106769 : f32
    %68 = vector.broadcast %cst_41 : f32 to vector<8x24xf32>
    %69 = arith.mulf %67, %68 : vector<8x24xf32>
    %c2 = arith.constant 2 : index
    %c0_42 = arith.constant 0 : index
    %c0_43 = arith.constant 0 : index
    %70 = vector.load %arg2[%c2, %c0_42, %c0_43] : memref<4x24x24xf32, #tpu.memory_space<vmem>>, vector<1x24x24xf32>
    %71 = vector.shape_cast %70 : vector<1x24x24xf32> to vector<24x24xf32>
    %c2_44 = arith.constant 2 : index
    %c0_45 = arith.constant 0 : index
    %c0_46 = arith.constant 0 : index
    %72 = vector.load %arg3[%c2_44, %c0_45, %c0_46] : memref<4x24x24xf32, #tpu.memory_space<vmem>>, vector<1x24x24xf32>
    %73 = vector.shape_cast %72 : vector<1x24x24xf32> to vector<24x24xf32>
    %cst_47 = arith.constant dense<0.000000e+00> : vector<8x24xf32>
    %74 = tpu.matmul %69, %71, %cst_47 {dimension_numbers = #tpu.dot_dimension_numbers<[1], [0], [0], [1], [0, 0, 1, 1], [], []>} : vector<8x24xf32>, vector<24x24xf32>, vector<8x24xf32> -> vector<8x24xf32>
    %cst_48 = arith.constant dense<0.000000e+00> : vector<8x24xf32>
    %75 = tpu.matmul %69, %73, %cst_48 {dimension_numbers = #tpu.dot_dimension_numbers<[1], [0], [0], [1], [0, 0, 1, 1], [], []>} : vector<8x24xf32>, vector<24x24xf32>, vector<8x24xf32> -> vector<8x24xf32>
    %cst_49 = arith.constant dense<0.000000e+00> : vector<2x24xf32>
    %76 = tpu.matmul %0, %74, %cst_49 {dimension_numbers = #tpu.dot_dimension_numbers<[1], [0], [0], [1], [0, 0, 1, 1], [], []>} : vector<2x8xf32>, vector<8x24xf32>, vector<2x24xf32> -> vector<2x24xf32>
    %cst_50 = arith.constant dense<0.000000e+00> : vector<8x24xf32>
    %77 = tpu.matmul %1, %76, %cst_50 {dimension_numbers = #tpu.dot_dimension_numbers<[1], [0], [0], [1], [0, 0, 1, 1], [], []>} : vector<8x2xf32>, vector<2x24xf32>, vector<8x24xf32> -> vector<8x24xf32>
    %78 = arith.subf %74, %77 : vector<8x24xf32>
    %79 = arith.mulf %78, %78 : vector<8x24xf32>
    %cst_51 = arith.constant dense<0.000000e+00> : vector<2x24xf32>
    %80 = tpu.matmul %0, %79, %cst_51 {dimension_numbers = #tpu.dot_dimension_numbers<[1], [0], [0], [1], [0, 0, 1, 1], [], []>} : vector<2x8xf32>, vector<8x24xf32>, vector<2x24xf32> -> vector<2x24xf32>
    %cst_52 = arith.constant dense<0.000000e+00> : vector<8x24xf32>
    %81 = tpu.matmul %1, %80, %cst_52 {dimension_numbers = #tpu.dot_dimension_numbers<[1], [0], [0], [1], [0, 0, 1, 1], [], []>} : vector<8x2xf32>, vector<2x24xf32>, vector<8x24xf32> -> vector<8x24xf32>
    %cst_53 = arith.constant 9.99999974E-6 : f32
    %82 = vector.broadcast %cst_53 : f32 to vector<8x24xf32>
    %83 = arith.addf %81, %82 : vector<8x24xf32>
    %84 = math.rsqrt %83 : vector<8x24xf32>
    %85 = arith.mulf %78, %84 : vector<8x24xf32>
    %cst_54 = arith.constant dense<0.000000e+00> : vector<2x24xf32>
    %86 = tpu.matmul %0, %75, %cst_54 {dimension_numbers = #tpu.dot_dimension_numbers<[1], [0], [0], [1], [0, 0, 1, 1], [], []>} : vector<2x8xf32>, vector<8x24xf32>, vector<2x24xf32> -> vector<2x24xf32>
    %cst_55 = arith.constant dense<0.000000e+00> : vector<8x24xf32>
    %87 = tpu.matmul %1, %86, %cst_55 {dimension_numbers = #tpu.dot_dimension_numbers<[1], [0], [0], [1], [0, 0, 1, 1], [], []>} : vector<8x2xf32>, vector<2x24xf32>, vector<8x24xf32> -> vector<8x24xf32>
    %88 = arith.subf %75, %87 : vector<8x24xf32>
    %89 = arith.mulf %88, %88 : vector<8x24xf32>
    %cst_56 = arith.constant dense<0.000000e+00> : vector<2x24xf32>
    %90 = tpu.matmul %0, %89, %cst_56 {dimension_numbers = #tpu.dot_dimension_numbers<[1], [0], [0], [1], [0, 0, 1, 1], [], []>} : vector<2x8xf32>, vector<8x24xf32>, vector<2x24xf32> -> vector<2x24xf32>
    %cst_57 = arith.constant dense<0.000000e+00> : vector<8x24xf32>
    %91 = tpu.matmul %1, %90, %cst_57 {dimension_numbers = #tpu.dot_dimension_numbers<[1], [0], [0], [1], [0, 0, 1, 1], [], []>} : vector<8x2xf32>, vector<2x24xf32>, vector<8x24xf32> -> vector<8x24xf32>
    %cst_58 = arith.constant 9.99999974E-6 : f32
    %92 = vector.broadcast %cst_58 : f32 to vector<8x24xf32>
    %93 = arith.addf %91, %92 : vector<8x24xf32>
    %94 = math.rsqrt %93 : vector<8x24xf32>
    %95 = arith.mulf %88, %94 : vector<8x24xf32>
    %96 = arith.negf %95 : vector<8x24xf32>
    %97 = math.exp %96 : vector<8x24xf32>
    %cst_59 = arith.constant 1.000000e+00 : f32
    %98 = vector.broadcast %cst_59 : f32 to vector<8x24xf32>
    %99 = arith.addf %98, %97 : vector<8x24xf32>
    %100 = arith.divf %98, %99 : vector<8x24xf32>
    %101 = arith.mulf %85, %100 : vector<8x24xf32>
    %102 = arith.addf %69, %101 : vector<8x24xf32>
    %cst_60 = arith.constant 0.707106769 : f32
    %103 = vector.broadcast %cst_60 : f32 to vector<8x24xf32>
    %104 = arith.mulf %102, %103 : vector<8x24xf32>
    %c3 = arith.constant 3 : index
    %c0_61 = arith.constant 0 : index
    %c0_62 = arith.constant 0 : index
    %105 = vector.load %arg2[%c3, %c0_61, %c0_62] : memref<4x24x24xf32, #tpu.memory_space<vmem>>, vector<1x24x24xf32>
    %106 = vector.shape_cast %105 : vector<1x24x24xf32> to vector<24x24xf32>
    %c3_63 = arith.constant 3 : index
    %c0_64 = arith.constant 0 : index
    %c0_65 = arith.constant 0 : index
    %107 = vector.load %arg3[%c3_63, %c0_64, %c0_65] : memref<4x24x24xf32, #tpu.memory_space<vmem>>, vector<1x24x24xf32>
    %108 = vector.shape_cast %107 : vector<1x24x24xf32> to vector<24x24xf32>
    %cst_66 = arith.constant dense<0.000000e+00> : vector<8x24xf32>
    %109 = tpu.matmul %104, %106, %cst_66 {dimension_numbers = #tpu.dot_dimension_numbers<[1], [0], [0], [1], [0, 0, 1, 1], [], []>} : vector<8x24xf32>, vector<24x24xf32>, vector<8x24xf32> -> vector<8x24xf32>
    %cst_67 = arith.constant dense<0.000000e+00> : vector<8x24xf32>
    %110 = tpu.matmul %104, %108, %cst_67 {dimension_numbers = #tpu.dot_dimension_numbers<[1], [0], [0], [1], [0, 0, 1, 1], [], []>} : vector<8x24xf32>, vector<24x24xf32>, vector<8x24xf32> -> vector<8x24xf32>
    %cst_68 = arith.constant dense<0.000000e+00> : vector<2x24xf32>
    %111 = tpu.matmul %0, %109, %cst_68 {dimension_numbers = #tpu.dot_dimension_numbers<[1], [0], [0], [1], [0, 0, 1, 1], [], []>} : vector<2x8xf32>, vector<8x24xf32>, vector<2x24xf32> -> vector<2x24xf32>
    %cst_69 = arith.constant dense<0.000000e+00> : vector<8x24xf32>
    %112 = tpu.matmul %1, %111, %cst_69 {dimension_numbers = #tpu.dot_dimension_numbers<[1], [0], [0], [1], [0, 0, 1, 1], [], []>} : vector<8x2xf32>, vector<2x24xf32>, vector<8x24xf32> -> vector<8x24xf32>
    %113 = arith.subf %109, %112 : vector<8x24xf32>
    %114 = arith.mulf %113, %113 : vector<8x24xf32>
    %cst_70 = arith.constant dense<0.000000e+00> : vector<2x24xf32>
    %115 = tpu.matmul %0, %114, %cst_70 {dimension_numbers = #tpu.dot_dimension_numbers<[1], [0], [0], [1], [0, 0, 1, 1], [], []>} : vector<2x8xf32>, vector<8x24xf32>, vector<2x24xf32> -> vector<2x24xf32>
    %cst_71 = arith.constant dense<0.000000e+00> : vector<8x24xf32>
    %116 = tpu.matmul %1, %115, %cst_71 {dimension_numbers = #tpu.dot_dimension_numbers<[1], [0], [0], [1], [0, 0, 1, 1], [], []>} : vector<8x2xf32>, vector<2x24xf32>, vector<8x24xf32> -> vector<8x24xf32>
    %cst_72 = arith.constant 9.99999974E-6 : f32
    %117 = vector.broadcast %cst_72 : f32 to vector<8x24xf32>
    %118 = arith.addf %116, %117 : vector<8x24xf32>
    %119 = math.rsqrt %118 : vector<8x24xf32>
    %120 = arith.mulf %113, %119 : vector<8x24xf32>
    %cst_73 = arith.constant dense<0.000000e+00> : vector<2x24xf32>
    %121 = tpu.matmul %0, %110, %cst_73 {dimension_numbers = #tpu.dot_dimension_numbers<[1], [0], [0], [1], [0, 0, 1, 1], [], []>} : vector<2x8xf32>, vector<8x24xf32>, vector<2x24xf32> -> vector<2x24xf32>
    %cst_74 = arith.constant dense<0.000000e+00> : vector<8x24xf32>
    %122 = tpu.matmul %1, %121, %cst_74 {dimension_numbers = #tpu.dot_dimension_numbers<[1], [0], [0], [1], [0, 0, 1, 1], [], []>} : vector<8x2xf32>, vector<2x24xf32>, vector<8x24xf32> -> vector<8x24xf32>
    %123 = arith.subf %110, %122 : vector<8x24xf32>
    %124 = arith.mulf %123, %123 : vector<8x24xf32>
    %cst_75 = arith.constant dense<0.000000e+00> : vector<2x24xf32>
    %125 = tpu.matmul %0, %124, %cst_75 {dimension_numbers = #tpu.dot_dimension_numbers<[1], [0], [0], [1], [0, 0, 1, 1], [], []>} : vector<2x8xf32>, vector<8x24xf32>, vector<2x24xf32> -> vector<2x24xf32>
    %cst_76 = arith.constant dense<0.000000e+00> : vector<8x24xf32>
    %126 = tpu.matmul %1, %125, %cst_76 {dimension_numbers = #tpu.dot_dimension_numbers<[1], [0], [0], [1], [0, 0, 1, 1], [], []>} : vector<8x2xf32>, vector<2x24xf32>, vector<8x24xf32> -> vector<8x24xf32>
    %cst_77 = arith.constant 9.99999974E-6 : f32
    %127 = vector.broadcast %cst_77 : f32 to vector<8x24xf32>
    %128 = arith.addf %126, %127 : vector<8x24xf32>
    %129 = math.rsqrt %128 : vector<8x24xf32>
    %130 = arith.mulf %123, %129 : vector<8x24xf32>
    %131 = arith.negf %130 : vector<8x24xf32>
    %132 = math.exp %131 : vector<8x24xf32>
    %cst_78 = arith.constant 1.000000e+00 : f32
    %133 = vector.broadcast %cst_78 : f32 to vector<8x24xf32>
    %134 = arith.addf %133, %132 : vector<8x24xf32>
    %135 = arith.divf %133, %134 : vector<8x24xf32>
    %136 = arith.mulf %120, %135 : vector<8x24xf32>
    %137 = arith.addf %104, %136 : vector<8x24xf32>
    %cst_79 = arith.constant 0.707106769 : f32
    %138 = vector.broadcast %cst_79 : f32 to vector<8x24xf32>
    %139 = arith.mulf %137, %138 : vector<8x24xf32>
    %c0_80 = arith.constant 0 : index
    %c0_81 = arith.constant 0 : index
    %140 = vector.load %arg4[%c0_80, %c0_81] : memref<24x16xf32, #tpu.memory_space<vmem>>, vector<24x16xf32>
    %cst_82 = arith.constant dense<0.000000e+00> : vector<8x16xf32>
    %141 = tpu.matmul %139, %140, %cst_82 {dimension_numbers = #tpu.dot_dimension_numbers<[1], [0], [0], [1], [0, 0, 1, 1], [], []>} : vector<8x24xf32>, vector<24x16xf32>, vector<8x16xf32> -> vector<8x16xf32>
    %c0_83 = arith.constant 0 : index
    %c0_84 = arith.constant 0 : index
    %142 = vector.load %arg7[%c0_83, %c0_84] : memref<8x16xf32, #tpu.memory_space<vmem>>, vector<8x16xf32>
    tpu.vector_store %arg7[%c0_83, %c0_84], %141 {strides = array<i32>} : memref<8x16xf32, #tpu.memory_space<vmem>>, vector<8x16xf32>,
    return
  }
  func.func @transform_0(%arg0: i32) -> (i32, i32) {
    %c0_i32 = arith.constant 0 : i32
    %c0_i32_0 = arith.constant 0 : i32
    return %arg0, %c0_i32 : i32, i32
  }
  func.func @transform_1(%arg0: i32) -> (i32, i32, i32) {
    %c0_i32 = arith.constant 0 : i32
    %c0_i32_0 = arith.constant 0 : i32
    %c0_i32_1 = arith.constant 0 : i32
    %c0_i32_2 = arith.constant 0 : i32
    return %c0_i32, %c0_i32_0, %c0_i32_1 : i32, i32, i32
  }
  func.func @transform_2(%arg0: i32) -> (i32, i32, i32) {
    %c0_i32 = arith.constant 0 : i32
    %c0_i32_0 = arith.constant 0 : i32
    %c0_i32_1 = arith.constant 0 : i32
    %c0_i32_2 = arith.constant 0 : i32
    return %c0_i32, %c0_i32_0, %c0_i32_1 : i32, i32, i32
  }
  func.func @transform_3(%arg0: i32) -> (i32, i32) {
    %c0_i32 = arith.constant 0 : i32
    %c0_i32_0 = arith.constant 0 : i32
    %c0_i32_1 = arith.constant 0 : i32
    return %c0_i32, %c0_i32_0 : i32, i32
  }
  func.func @transform_4(%arg0: i32) -> (i32, i32) {
    %c0_i32 = arith.constant 0 : i32
    %c0_i32_0 = arith.constant 0 : i32
    %c0_i32_1 = arith.constant 0 : i32
    return %c0_i32, %c0_i32_0 : i32, i32
  }
  func.func @transform_5(%arg0: i32) -> (i32, i32) {
    %c0_i32 = arith.constant 0 : i32
    %c0_i32_0 = arith.constant 0 : i32
    %c0_i32_1 = arith.constant 0 : i32
    return %c0_i32, %c0_i32_0 : i32, i32
  }
  func.func @transform_6(%arg0: i32) -> (i32, i32) {
    %c0_i32 = arith.constant 0 : i32
    %c0_i32_0 = arith.constant 0 : i32
    return %arg0, %c0_i32 : i32, i32
  }
}

</mosaic_0001>

<llo_original>
// kernel: tpu_custom_call.1
$region0: #{tpu_custom_call.1}
  #allocation0 [shape = 'u32[]', space=smem, size = 0x4, offset = 0x4, fixed_abs, tag = 'smem constant byte address 0x4 - core index']
  #allocation1 [shape = 'u32[144,128]{1,0:T(1,128)}', space=vmem, size = 0x12000, scoped, tag = 'internal scratch']
  %s0 = inlined_call_operand.vmem [shape: f32[8,24], index: 0, kind: input, shape index: {}]
  %s1 = inlined_call_operand.hbm [shape: f32[4,24,24], index: 1, kind: input, shape index: {}]
  %s2 = inlined_call_operand.hbm [shape: f32[4,24,24], index: 2, kind: input, shape index: {}]
  %s3 = inlined_call_operand.vmem [shape: f32[24,16], index: 3, kind: input, shape index: {}]
  %s4 = inlined_call_operand.vmem [shape: f32[2,8], index: 4, kind: input, shape index: {}]
  %s5 = inlined_call_operand.vmem [shape: f32[8,2], index: 5, kind: input, shape index: {}]
  %s6 = inlined_call_operand.hbm [shape: f32[8,16], index: 6, kind: output, shape index: {}]
  %s7 = sld [smem:[#allocation0]]
  $region42: #{tpu_custom_call.1} parent=0
    _
  %s9 = ssub.s32 1, %s7
  %s10 = scalar_select 0, %s9, %s7
  $region1: #{tpu_custom_call.1} parent=0
    #allocation2 [shape = 'u8[49152]{0}', space=vmem, size = 0xc000, scoped, tag = 'input window, operand 1, single buffered']
    #allocation3 [shape = 's32[1]{0}', space=sflag, size = 0x4, scoped, tag = 'scoped memory for tpu_custom_call.1']
    #allocation4 [shape = 's32[1]{0}', space=sflag, size = 0x4, scoped, tag = 'scoped memory for tpu_custom_call.1']
    #allocation5 [shape = 'u8[49152]{0}', space=vmem, size = 0xc000, scoped, tag = 'input window, operand 2, single buffered']
    #allocation6 [shape = 's32[1]{0}', space=sflag, size = 0x4, scoped, tag = 'scoped memory for tpu_custom_call.1']
    #allocation7 [shape = 'u8[4096]{0}', space=vmem, size = 0x1000, scoped, tag = 'output window, operand 0, single buffered']
    %11 = vsyncpa [#allocation3], 0
    %12 = vsyncpa [#allocation6], 0
    %13 = vsyncpa [#allocation4], 0
    // Predicated region
    $region2: #{tpu_custom_call.1} parent=1 // pred_check
      _
    $region3: #{tpu_custom_call.1} parent=1 // pred_check_branch
      %15 = sbr.rel (0) target = $region5
    $region4: #{tpu_custom_call.1} parent=1 // pred_region
      _
    $region5: #{tpu_custom_call.1} parent=1 // pred_fallthru
      _
    // Predicated region
    $region6: #{tpu_custom_call.1} parent=1 // pred_check
      _
    $region7: #{tpu_custom_call.1} parent=1 // pred_check_branch
      %17 = sbr.rel (0) target = $region9
    $region8: #{tpu_custom_call.1} parent=1 // pred_region
      %s19 = ssub.s32 1536, 1536
      %20 = vsyncadd [#allocation3], %s19
      %s21 = sshll.u32 [#allocation2], 4
      %s22 = int_to_ptr.vmem [resolvable:$true] %s21
      %27 = dma.hbm_to_vmem [thread:$0]  %s1, 1536, %s22, [#allocation3], 128, 128, 8
    $region9: #{tpu_custom_call.1} parent=1 // pred_fallthru
      _
    // Predicated region
    $region10: #{tpu_custom_call.1} parent=1 // pred_check
      _
    $region11: #{tpu_custom_call.1} parent=1 // pred_check_branch
      %29 = sbr.rel (0) target = $region13
    $region12: #{tpu_custom_call.1} parent=1 // pred_region
      %s31 = ssub.s32 1536, 1536
      %32 = vsyncadd [#allocation6], %s31
      %s33 = sshll.u32 [#allocation5], 4
      %s34 = int_to_ptr.vmem [resolvable:$true] %s33
      %39 = dma.hbm_to_vmem [thread:$0]  %s2, 1536, %s34, [#allocation6], 128, 128, 8
    $region13: #{tpu_custom_call.1} parent=1 // pred_fallthru
      _
    // Predicated region
    $region14: #{tpu_custom_call.1} parent=1 // pred_check
      _
    $region15: #{tpu_custom_call.1} parent=1 // pred_check_branch
      %41 = sbr.rel (0) target = $region17
    $region16: #{tpu_custom_call.1} parent=1 // pred_region
      _
    $region17: #{tpu_custom_call.1} parent=1 // pred_fallthru
      _
    // Predicated region
    $region18: #{tpu_custom_call.1} parent=1 // pred_check
      _
    $region19: #{tpu_custom_call.1} parent=1 // pred_check_branch
      %43 = sbr.rel (0) target = $region21
    $region20: #{tpu_custom_call.1} parent=1 // pred_region
      _
    $region21: #{tpu_custom_call.1} parent=1 // pred_fallthru
      _
    // Predicated region
    $region22: #{tpu_custom_call.1} parent=1 // pred_check
      _
    $region23: #{tpu_custom_call.1} parent=1 // pred_check_branch
      %45 = sbr.rel (0) target = $region25
    $region24: #{tpu_custom_call.1} parent=1 // pred_region
      _
    $region25: #{tpu_custom_call.1} parent=1 // pred_fallthru
      _
    // Predicated region
    $region26: #{tpu_custom_call.1} parent=1 // pred_check
      _
    $region27: #{tpu_custom_call.1} parent=1 // pred_check_branch
      %47 = sbr.rel (0) target = $region29
    $region28: #{tpu_custom_call.1} parent=1 // pred_region
      %48 = dma.done [#allocation3], 1536
    $region29: #{tpu_custom_call.1} parent=1 // pred_fallthru
      _
    // Predicated region
    $region30: #{tpu_custom_call.1} parent=1 // pred_check
      _
    $region31: #{tpu_custom_call.1} parent=1 // pred_check_branch
      %50 = sbr.rel (0) target = $region33
    $region32: #{tpu_custom_call.1} parent=1 // pred_region
      %51 = dma.done [#allocation6], 1536
    $region33: #{tpu_custom_call.1} parent=1 // pred_fallthru
      _
    %v52 = vld [vmem:[%s4] sm:$0x3]
    %v53 = vld [vmem:[%s5] sm:$0xff]
    %v54 = vld [vmem:[%s0] sm:$0xff]
    %v55 = vld [vmem:[#allocation2] sm:$0xff]
    %v56 = vld [vmem:[#allocation2 + $0x8] sm:$0xff]
    %v57 = vld [vmem:[#allocation2 + $0x10] sm:$0xff]
    %v58 = vld [vmem:[#allocation5] sm:$0xff]
    %v59 = vld [vmem:[#allocation5 + $0x8] sm:$0xff]
    %v60 = vld [vmem:[#allocation5 + $0x10] sm:$0xff]
    %vm61 = vcmask 195584
    %v63 = vsel %vm61, %v54, 0
    %65 = vmatprep.subr.mxu0 0.0
    %66 = vmatpush1.msra.mxu0 %v55
    %67 = vmatprep.subr.mxu0 0.0
    %68 = vmatpush1.msra.mxu0 %v56
    %69 = vmatprep.subr.mxu0 0.0
    %70 = vmatpush1.msra.mxu0 %v57
    %71 = vmatprep.subr.mxu0 0.0
    %72 = vmatpush1.msra.mxu0 0.0
    %73 = vmatprep.subr.mxu0 0.0
    %74 = vmatpush1.msra.mxu0 0.0
    %75 = vmatprep.subr.mxu0 0.0
    %76 = vmatpush1.msra.mxu0 0.0
    %77 = vmatprep.subr.mxu0 0.0
    %78 = vmatpush1.msra.mxu0 0.0
    %79 = vmatprep.subr.mxu0 0.0
    %80 = vmatpush1.msra.mxu0 0.0
    %81 = vmatprep.subr.mxu0 0.0
    %82 = vmatpush1.msra.mxu0 0.0
    %83 = vmatprep.subr.mxu0 0.0
    %84 = vmatpush1.msra.mxu0 0.0
    %85 = vmatprep.subr.mxu0 0.0
    %86 = vmatpush1.msra.mxu0 0.0
    %87 = vmatprep.subr.mxu0 0.0
    %88 = vmatpush1.msra.mxu0 0.0
    %89 = vmatprep.subr.mxu0 0.0
    %90 = vmatpush1.msra.mxu0 0.0
    %91 = vmatprep.subr.mxu0 0.0
    %92 = vmatpush1.msra.mxu0 0.0
    %93 = vmatprep.subr.mxu0 0.0
    %94 = vmatpush1.msra.mxu0 0.0
    %95 = vmatprep.subr.mxu0 0.0
    %96 = vmatpush1.msra.mxu0 0.0
    %97 = vmatprep.subr.mxu0 0.0
    %98 = vmatpush1.msra.mxu0 0.0
    %99 = vmatprep.subr.mxu0 0.0
    %100 = vmatpush1.msra.mxu0 0.0
    %101 = vmatprep.subr.mxu0 0.0
    %102 = vmatpush1.msra.mxu0 0.0
    %103 = vmatprep.subr.mxu0 0.0
    %104 = vmatpush1.msra.mxu0 0.0
    %105 = vmatprep.subr.mxu0 0.0
    %106 = vmatpush1.msra.mxu0 0.0
    %107 = vmatprep.subr.mxu0 0.0
    %108 = vmatpush1.msra.mxu0 0.0
    %109 = vmatprep.subr.mxu0 0.0
    %110 = vmatpush1.msra.mxu0 0.0
    %111 = vmatprep.subr.mxu0 0.0
    %112 = vmatpush1.msra.mxu0 0.0
    %113 = vmatprep.subr.mxu0 0.0
    %114 = vmatpush1.msra.mxu0 0.0
    %115 = vmatprep.subr.mxu0 0.0
    %116 = vmatpush1.msra.mxu0 0.0
    %117 = vmatprep.subr.mxu0 0.0
    %118 = vmatpush1.msra.mxu0 0.0
    %119 = vmatprep.subr.mxu0 0.0
    %120 = vmatpush1.msra.mxu0 0.0
    %121 = vmatprep.subr.mxu0 0.0
    %122 = vmatpush1.msra.mxu0 0.0
    %123 = vmatprep.subr.mxu0 0.0
    %124 = vmatpush1.msra.mxu0 0.0
    %125 = vmatprep.subr.mxu0 0.0
    %126 = vmatpush1.msra.mxu0 0.0
    %127 = vmatprep.subr.mxu0 0.0
    %128 = vmatpush1.msra.mxu0 0.0
    %129 = vmatprep.mubr.f32.mxu0 0.0
    %130 = vmatmul.mubr.f32.gmra.mrb[0].mxu0 %v63
    %v131 = vpop.f32.mrb[0].mxu0
    %v132 = vadd.f32 0.0, %v131
    %v133 = vpop.f32.mrb[0].mxu0
    %134 = vdwg.mxu0
    %135 = vmatprep.subr.mxu0 0.0
    %136 = vmatpush1.msra.mxu0 %v58
    %137 = vmatprep.subr.mxu0 0.0
    %138 = vmatpush1.msra.mxu0 %v59
    %139 = vmatprep.subr.mxu0 0.0
    %140 = vmatpush1.msra.mxu0 %v60
    %141 = vmatprep.subr.mxu0 0.0
    %142 = vmatpush1.msra.mxu0 0.0
    %143 = vmatprep.subr.mxu0 0.0
    %144 = vmatpush1.msra.mxu0 0.0
    %145 = vmatprep.subr.mxu0 0.0
    %146 = vmatpush1.msra.mxu0 0.0
    %147 = vmatprep.subr.mxu0 0.0
    %148 = vmatpush1.msra.mxu0 0.0
    %149 = vmatprep.subr.mxu0 0.0
    %150 = vmatpush1.msra.mxu0 0.0
    %151 = vmatprep.subr.mxu0 0.0
    %152 = vmatpush1.msra.mxu0 0.0
    %153 = vmatprep.subr.mxu0 0.0
    %154 = vmatpush1.msra.mxu0 0.0
    %155 = vmatprep.subr.mxu0 0.0
    %156 = vmatpush1.msra.mxu0 0.0
    %157 = vmatprep.subr.mxu0 0.0
    %158 = vmatpush1.msra.mxu0 0.0
    %159 = vmatprep.subr.mxu0 0.0
    %160 = vmatpush1.msra.mxu0 0.0
    %161 = vmatprep.subr.mxu0 0.0
    %162 = vmatpush1.msra.mxu0 0.0
    %163 = vmatprep.subr.mxu0 0.0
    %164 = vmatpush1.msra.mxu0 0.0
    %165 = vmatprep.subr.mxu0 0.0
    %166 = vmatpush1.msra.mxu0 0.0
    %167 = vmatprep.subr.mxu0 0.0
    %168 = vmatpush1.msra.mxu0 0.0
    %169 = vmatprep.subr.mxu0 0.0
    %170 = vmatpush1.msra.mxu0 0.0
    %171 = vmatprep.subr.mxu0 0.0
    %172 = vmatpush1.msra.mxu0 0.0
    %173 = vmatprep.subr.mxu0 0.0
    %174 = vmatpush1.msra.mxu0 0.0
    %175 = vmatprep.subr.mxu0 0.0
    %176 = vmatpush1.msra.mxu0 0.0
    %177 = vmatprep.subr.mxu0 0.0
    %178 = vmatpush1.msra.mxu0 0.0
    %179 = vmatprep.subr.mxu0 0.0
    %180 = vmatpush1.msra.mxu0 0.0
    %181 = vmatprep.subr.mxu0 0.0
    %182 = vmatpush1.msra.mxu0 0.0
    %183 = vmatprep.subr.mxu0 0.0
    %184 = vmatpush1.msra.mxu0 0.0
    %185 = vmatprep.subr.mxu0 0.0
    %186 = vmatpush1.msra.mxu0 0.0
    %187 = vmatprep.subr.mxu0 0.0
    %188 = vmatpush1.msra.mxu0 0.0
    %189 = vmatprep.subr.mxu0 0.0
    %190 = vmatpush1.msra.mxu0 0.0
    %191 = vmatprep.subr.mxu0 0.0
    %192 = vmatpush1.msra.mxu0 0.0
    %193 = vmatprep.subr.mxu0 0.0
    %194 = vmatpush1.msra.mxu0 0.0
    %195 = vmatprep.subr.mxu0 0.0
    %196 = vmatpush1.msra.mxu0 0.0
    %197 = vmatprep.subr.mxu0 0.0
    %198 = vmatpush1.msra.mxu0 0.0
    %199 = vmatprep.mubr.f32.mxu0 0.0
    %200 = vmatmul.mubr.f32.gmra.mrb[0].mxu0 %v63
    %v201 = vpop.f32.mrb[0].mxu0
    %v202 = vadd.f32 0.0, %v201
    %v203 = vpop.f32.mrb[0].mxu0
    %204 = vdwg.mxu0
    %vm205 = vcmask 64512
    %v207 = vsel %vm205, %v52, 0
    %209 = vmatprep.subr.mxu0 0.0
    %210 = vmatpush1.msra.mxu0 %v132
    %211 = vmatprep.subr.mxu0 0.0
    %212 = vmatpush1.msra.mxu0 0.0
    %213 = vmatprep.subr.mxu0 0.0
    %214 = vmatpush1.msra.mxu0 0.0
    %215 = vmatprep.subr.mxu0 0.0
    %216 = vmatpush1.msra.mxu0 0.0
    %217 = vmatprep.subr.mxu0 0.0
    %218 = vmatpush1.msra.mxu0 0.0
    %219 = vmatprep.subr.mxu0 0.0
    %220 = vmatpush1.msra.mxu0 0.0
    %221 = vmatprep.subr.mxu0 0.0
    %222 = vmatpush1.msra.mxu0 0.0
    %223 = vmatprep.subr.mxu0 0.0
    %224 = vmatpush1.msra.mxu0 0.0
    %225 = vmatprep.subr.mxu0 0.0
    %226 = vmatpush1.msra.mxu0 0.0
    %227 = vmatprep.subr.mxu0 0.0
    %228 = vmatpush1.msra.mxu0 0.0
    %229 = vmatprep.subr.mxu0 0.0
    %230 = vmatpush1.msra.mxu0 0.0
    %231 = vmatprep.subr.mxu0 0.0
    %232 = vmatpush1.msra.mxu0 0.0
    %233 = vmatprep.subr.mxu0 0.0
    %234 = vmatpush1.msra.mxu0 0.0
    %235 = vmatprep.subr.mxu0 0.0
    %236 = vmatpush1.msra.mxu0 0.0
    %237 = vmatprep.subr.mxu0 0.0
    %238 = vmatpush1.msra.mxu0 0.0
    %239 = vmatprep.subr.mxu0 0.0
    %240 = vmatpush1.msra.mxu0 0.0
    %241 = vmatprep.subr.mxu0 0.0
    %242 = vmatpush1.msra.mxu0 0.0
    %243 = vmatprep.subr.mxu0 0.0
    %244 = vmatpush1.msra.mxu0 0.0
    %245 = vmatprep.subr.mxu0 0.0
    %246 = vmatpush1.msra.mxu0 0.0
    %247 = vmatprep.subr.mxu0 0.0
    %248 = vmatpush1.msra.mxu0 0.0
    %249 = vmatprep.subr.mxu0 0.0
    %250 = vmatpush1.msra.mxu0 0.0
    %251 = vmatprep.subr.mxu0 0.0
    %252 = vmatpush1.msra.mxu0 0.0
    %253 = vmatprep.subr.mxu0 0.0
    %254 = vmatpush1.msra.mxu0 0.0
    %255 = vmatprep.subr.mxu0 0.0
    %256 = vmatpush1.msra.mxu0 0.0
    %257 = vmatprep.subr.mxu0 0.0
    %258 = vmatpush1.msra.mxu0 0.0
    %259 = vmatprep.subr.mxu0 0.0
    %260 = vmatpush1.msra.mxu0 0.0
    %261 = vmatprep.subr.mxu0 0.0
    %262 = vmatpush1.msra.mxu0 0.0
    %263 = vmatprep.subr.mxu0 0.0
    %264 = vmatpush1.msra.mxu0 0.0
    %265 = vmatprep.subr.mxu0 0.0
    %266 = vmatpush1.msra.mxu0 0.0
    %267 = vmatprep.subr.mxu0 0.0
    %268 = vmatpush1.msra.mxu0 0.0
    %269 = vmatprep.subr.mxu0 0.0
    %270 = vmatpush1.msra.mxu0 0.0
    %271 = vmatprep.subr.mxu0 0.0
    %272 = vmatpush1.msra.mxu0 0.0
    %273 = vmatprep.mubr.f32.mxu0 0.0
    %274 = vmatmul.mubr.f32.gmra.mrb[0].mxu0 %v207
    %v275 = vpop.f32.mrb[0].mxu0
    %v276 = vadd.f32 0.0, %v275
    %v277 = vpop.f32.mrb[0].mxu0
    %278 = vdwg.mxu0
    %vm279 = vcmask 15360
    %v281 = vsel %vm279, %v53, 0
    %vm283 = vcmask 1041408
    %v285 = vsel %vm283, %v276, 0
    %287 = vmatprep.subr.mxu0 0.0
    %288 = vmatpush1.msra.mxu0 %v285
    %289 = vmatprep.subr.mxu0 0.0
    %290 = vmatpush1.msra.mxu0 0.0
    %291 = vmatprep.subr.mxu0 0.0
    %292 = vmatpush1.msra.mxu0 0.0
    %293 = vmatprep.subr.mxu0 0.0
    %294 = vmatpush1.msra.mxu0 0.0
    %295 = vmatprep.subr.mxu0 0.0
    %296 = vmatpush1.msra.mxu0 0.0
    %297 = vmatprep.subr.mxu0 0.0
    %298 = vmatpush1.msra.mxu0 0.0
    %299 = vmatprep.subr.mxu0 0.0
    %300 = vmatpush1.msra.mxu0 0.0
    %301 = vmatprep.subr.mxu0 0.0
    %302 = vmatpush1.msra.mxu0 0.0
    %303 = vmatprep.subr.mxu0 0.0
    %304 = vmatpush1.msra.mxu0 0.0
    %305 = vmatprep.subr.mxu0 0.0
    %306 = vmatpush1.msra.mxu0 0.0
    %307 = vmatprep.subr.mxu0 0.0
    %308 = vmatpush1.msra.mxu0 0.0
    %309 = vmatprep.subr.mxu0 0.0
    %310 = vmatpush1.msra.mxu0 0.0
    %311 = vmatprep.subr.mxu0 0.0
    %312 = vmatpush1.msra.mxu0 0.0
    %313 = vmatprep.subr.mxu0 0.0
    %314 = vmatpush1.msra.mxu0 0.0
    %315 = vmatprep.subr.mxu0 0.0
    %316 = vmatpush1.msra.mxu0 0.0
    %317 = vmatprep.subr.mxu0 0.0
    %318 = vmatpush1.msra.mxu0 0.0
    %319 = vmatprep.subr.mxu0 0.0
    %320 = vmatpush1.msra.mxu0 0.0
    %321 = vmatprep.subr.mxu0 0.0
    %322 = vmatpush1.msra.mxu0 0.0
    %323 = vmatprep.subr.mxu0 0.0
    %324 = vmatpush1.msra.mxu0 0.0
    %325 = vmatprep.subr.mxu0 0.0
    %326 = vmatpush1.msra.mxu0 0.0
    %327 = vmatprep.subr.mxu0 0.0
    %328 = vmatpush1.msra.mxu0 0.0
    %329 = vmatprep.subr.mxu0 0.0
    %330 = vmatpush1.msra.mxu0 0.0
    %331 = vmatprep.subr.mxu0 0.0
    %332 = vmatpush1.msra.mxu0 0.0
    %333 = vmatprep.subr.mxu0 0.0
    %334 = vmatpush1.msra.mxu0 0.0
    %335 = vmatprep.subr.mxu0 0.0
    %336 = vmatpush1.msra.mxu0 0.0
    %337 = vmatprep.subr.mxu0 0.0
    %338 = vmatpush1.msra.mxu0 0.0
    %339 = vmatprep.subr.mxu0 0.0
    %340 = vmatpush1.msra.mxu0 0.0
    %341 = vmatprep.subr.mxu0 0.0
    %342 = vmatpush1.msra.mxu0 0.0
    %343 = vmatprep.subr.mxu0 0.0
    %344 = vmatpush1.msra.mxu0 0.0
    %345 = vmatprep.subr.mxu0 0.0
    %346 = vmatpush1.msra.mxu0 0.0
    %347 = vmatprep.subr.mxu0 0.0
    %348 = vmatpush1.msra.mxu0 0.0
    %349 = vmatprep.subr.mxu0 0.0
    %350 = vmatpush1.msra.mxu0 0.0
    %351 = vmatprep.mubr.f32.mxu0 0.0
    %352 = vmatmul.mubr.f32.gmra.mrb[0].mxu0 %v281
    %v353 = vpop.f32.mrb[0].mxu0
    %v354 = vadd.f32 0.0, %v353
    %v355 = vpop.f32.mrb[0].mxu0
    %356 = vdwg.mxu0
    %v357 = vsub.f32 %v132, %v354
    %v358 = vmul.f32 %v357, %v357
    %359 = vmatprep.subr.mxu0 0.0
    %360 = vmatpush1.msra.mxu0 %v358
    %361 = vmatprep.subr.mxu0 0.0
    %362 = vmatpush1.msra.mxu0 0.0
    %363 = vmatprep.subr.mxu0 0.0
    %364 = vmatpush1.msra.mxu0 0.0
    %365 = vmatprep.subr.mxu0 0.0
    %366 = vmatpush1.msra.mxu0 0.0
    %367 = vmatprep.subr.mxu0 0.0
    %368 = vmatpush1.msra.mxu0 0.0
    %369 = vmatprep.subr.mxu0 0.0
    %370 = vmatpush1.msra.mxu0 0.0
    %371 = vmatprep.subr.mxu0 0.0
    %372 = vmatpush1.msra.mxu0 0.0
    %373 = vmatprep.subr.mxu0 0.0
    %374 = vmatpush1.msra.mxu0 0.0
    %375 = vmatprep.subr.mxu0 0.0
    %376 = vmatpush1.msra.mxu0 0.0
    %377 = vmatprep.subr.mxu0 0.0
    %378 = vmatpush1.msra.mxu0 0.0
    %379 = vmatprep.subr.mxu0 0.0
    %380 = vmatpush1.msra.mxu0 0.0
    %381 = vmatprep.subr.mxu0 0.0
    %382 = vmatpush1.msra.mxu0 0.0
    %383 = vmatprep.subr.mxu0 0.0
    %384 = vmatpush1.msra.mxu0 0.0
    %385 = vmatprep.subr.mxu0 0.0
    %386 = vmatpush1.msra.mxu0 0.0
    %387 = vmatprep.subr.mxu0 0.0
    %388 = vmatpush1.msra.mxu0 0.0
    %389 = vmatprep.subr.mxu0 0.0
    %390 = vmatpush1.msra.mxu0 0.0
    %391 = vmatprep.subr.mxu0 0.0
    %392 = vmatpush1.msra.mxu0 0.0
    %393 = vmatprep.subr.mxu0 0.0
    %394 = vmatpush1.msra.mxu0 0.0
    %395 = vmatprep.subr.mxu0 0.0
    %396 = vmatpush1.msra.mxu0 0.0
    %397 = vmatprep.subr.mxu0 0.0
    %398 = vmatpush1.msra.mxu0 0.0
    %399 = vmatprep.subr.mxu0 0.0
    %400 = vmatpush1.msra.mxu0 0.0
    %401 = vmatprep.subr.mxu0 0.0
    %402 = vmatpush1.msra.mxu0 0.0
    %403 = vmatprep.subr.mxu0 0.0
    %404 = vmatpush1.msra.mxu0 0.0
    %405 = vmatprep.subr.mxu0 0.0
    %406 = vmatpush1.msra.mxu0 0.0
    %407 = vmatprep.subr.mxu0 0.0
    %408 = vmatpush1.msra.mxu0 0.0
    %409 = vmatprep.subr.mxu0 0.0
    %410 = vmatpush1.msra.mxu0 0.0
    %411 = vmatprep.subr.mxu0 0.0
    %412 = vmatpush1.msra.mxu0 0.0
    %413 = vmatprep.subr.mxu0 0.0
    %414 = vmatpush1.msra.mxu0 0.0
    %415 = vmatprep.subr.mxu0 0.0
    %416 = vmatpush1.msra.mxu0 0.0
    %417 = vmatprep.subr.mxu0 0.0
    %418 = vmatpush1.msra.mxu0 0.0
    %419 = vmatprep.subr.mxu0 0.0
    %420 = vmatpush1.msra.mxu0 0.0
    %421 = vmatprep.subr.mxu0 0.0
    %422 = vmatpush1.msra.mxu0 0.0
    %423 = vmatprep.mubr.f32.mxu0 0.0
    %424 = vmatmul.mubr.f32.gmra.mrb[0].mxu0 %v207
    %v425 = vpop.f32.mrb[0].mxu0
    %v426 = vadd.f32 0.0, %v425
    %v427 = vpop.f32.mrb[0].mxu0
    %428 = vdwg.mxu0
    %v430 = vsel %vm283, %v426, 0
    %432 = vmatprep.subr.mxu0 0.0
    %433 = vmatpush1.msra.mxu0 %v430
    %434 = vmatprep.subr.mxu0 0.0
    %435 = vmatpush1.msra.mxu0 0.0
    %436 = vmatprep.subr.mxu0 0.0
    %437 = vmatpush1.msra.mxu0 0.0
    %438 = vmatprep.subr.mxu0 0.0
    %439 = vmatpush1.msra.mxu0 0.0
    %440 = vmatprep.subr.mxu0 0.0
    %441 = vmatpush1.msra.mxu0 0.0
    %442 = vmatprep.subr.mxu0 0.0
    %443 = vmatpush1.msra.mxu0 0.0
    %444 = vmatprep.subr.mxu0 0.0
    %445 = vmatpush1.msra.mxu0 0.0
    %446 = vmatprep.subr.mxu0 0.0
    %447 = vmatpush1.msra.mxu0 0.0
    %448 = vmatprep.subr.mxu0 0.0
    %449 = vmatpush1.msra.mxu0 0.0
    %450 = vmatprep.subr.mxu0 0.0
    %451 = vmatpush1.msra.mxu0 0.0
    %452 = vmatprep.subr.mxu0 0.0
    %453 = vmatpush1.msra.mxu0 0.0
    %454 = vmatprep.subr.mxu0 0.0
    %455 = vmatpush1.msra.mxu0 0.0
    %456 = vmatprep.subr.mxu0 0.0
    %457 = vmatpush1.msra.mxu0 0.0
    %458 = vmatprep.subr.mxu0 0.0
    %459 = vmatpush1.msra.mxu0 0.0
    %460 = vmatprep.subr.mxu0 0.0
    %461 = vmatpush1.msra.mxu0 0.0
    %462 = vmatprep.subr.mxu0 0.0
    %463 = vmatpush1.msra.mxu0 0.0
    %464 = vmatprep.subr.mxu0 0.0
    %465 = vmatpush1.msra.mxu0 0.0
    %466 = vmatprep.subr.mxu0 0.0
    %467 = vmatpush1.msra.mxu0 0.0
    %468 = vmatprep.subr.mxu0 0.0
    %469 = vmatpush1.msra.mxu0 0.0
    %470 = vmatprep.subr.mxu0 0.0
    %471 = vmatpush1.msra.mxu0 0.0
    %472 = vmatprep.subr.mxu0 0.0
    %473 = vmatpush1.msra.mxu0 0.0
    %474 = vmatprep.subr.mxu0 0.0
    %475 = vmatpush1.msra.mxu0 0.0
    %476 = vmatprep.subr.mxu0 0.0
    %477 = vmatpush1.msra.mxu0 0.0
    %478 = vmatprep.subr.mxu0 0.0
    %479 = vmatpush1.msra.mxu0 0.0
    %480 = vmatprep.subr.mxu0 0.0
    %481 = vmatpush1.msra.mxu0 0.0
    %482 = vmatprep.subr.mxu0 0.0
    %483 = vmatpush1.msra.mxu0 0.0
    %484 = vmatprep.subr.mxu0 0.0
    %485 = vmatpush1.msra.mxu0 0.0
    %486 = vmatprep.subr.mxu0 0.0
    %487 = vmatpush1.msra.mxu0 0.0
    %488 = vmatprep.subr.mxu0 0.0
    %489 = vmatpush1.msra.mxu0 0.0
    %490 = vmatprep.subr.mxu0 0.0
    %491 = vmatpush1.msra.mxu0 0.0
    %492 = vmatprep.subr.mxu0 0.0
    %493 = vmatpush1.msra.mxu0 0.0
    %494 = vmatprep.subr.mxu0 0.0
    %495 = vmatpush1.msra.mxu0 0.0
    %496 = vmatprep.mubr.f32.mxu0 0.0
    %497 = vmatmul.mubr.f32.gmra.mrb[0].mxu0 %v281
    %v498 = vpop.f32.mrb[0].mxu0
    %v499 = vadd.f32 1e-05, %v498
    %v500 = vpop.f32.mrb[0].mxu0
    %501 = vdwg.mxu0
    %v502 = vrsqrt.pop %v499
    %v503 = vmul.f32 %v357, %v502
    %504 = vmatprep.subr.mxu0 0.0
    %505 = vmatpush1.msra.mxu0 %v202
    %506 = vmatprep.subr.mxu0 0.0
    %507 = vmatpush1.msra.mxu0 0.0
    %508 = vmatprep.subr.mxu0 0.0
    %509 = vmatpush1.msra.mxu0 0.0
    %510 = vmatprep.subr.mxu0 0.0
    %511 = vmatpush1.msra.mxu0 0.0
    %512 = vmatprep.subr.mxu0 0.0
    %513 = vmatpush1.msra.mxu0 0.0
    %514 = vmatprep.subr.mxu0 0.0
    %515 = vmatpush1.msra.mxu0 0.0
    %516 = vmatprep.subr.mxu0 0.0
    %517 = vmatpush1.msra.mxu0 0.0
    %518 = vmatprep.subr.mxu0 0.0
    %519 = vmatpush1.msra.mxu0 0.0
    %520 = vmatprep.subr.mxu0 0.0
    %521 = vmatpush1.msra.mxu0 0.0
    %522 = vmatprep.subr.mxu0 0.0
    %523 = vmatpush1.msra.mxu0 0.0
    %524 = vmatprep.subr.mxu0 0.0
    %525 = vmatpush1.msra.mxu0 0.0
    %526 = vmatprep.subr.mxu0 0.0
    %527 = vmatpush1.msra.mxu0 0.0
    %528 = vmatprep.subr.mxu0 0.0
    %529 = vmatpush1.msra.mxu0 0.0
    %530 = vmatprep.subr.mxu0 0.0
    %531 = vmatpush1.msra.mxu0 0.0
    %532 = vmatprep.subr.mxu0 0.0
    %533 = vmatpush1.msra.mxu0 0.0
    %534 = vmatprep.subr.mxu0 0.0
    %535 = vmatpush1.msra.mxu0 0.0
    %536 = vmatprep.subr.mxu0 0.0
    %537 = vmatpush1.msra.mxu0 0.0
    %538 = vmatprep.subr.mxu0 0.0
    %539 = vmatpush1.msra.mxu0 0.0
    %540 = vmatprep.subr.mxu0 0.0
    %541 = vmatpush1.msra.mxu0 0.0
    %542 = vmatprep.subr.mxu0 0.0
    %543 = vmatpush1.msra.mxu0 0.0
    %544 = vmatprep.subr.mxu0 0.0
    %545 = vmatpush1.msra.mxu0 0.0
    %546 = vmatprep.subr.mxu0 0.0
    %547 = vmatpush1.msra.mxu0 0.0
    %548 = vmatprep.subr.mxu0 0.0
    %549 = vmatpush1.msra.mxu0 0.0
    %550 = vmatprep.subr.mxu0 0.0
    %551 = vmatpush1.msra.mxu0 0.0
    %552 = vmatprep.subr.mxu0 0.0
    %553 = vmatpush1.msra.mxu0 0.0
    %554 = vmatprep.subr.mxu0 0.0
    %555 = vmatpush1.msra.mxu0 0.0
    %556 = vmatprep.subr.mxu0 0.0
    %557 = vmatpush1.msra.mxu0 0.0
    %558 = vmatprep.subr.mxu0 0.0
    %559 = vmatpush1.msra.mxu0 0.0
    %560 = vmatprep.subr.mxu0 0.0
    %561 = vmatpush1.msra.mxu0 0.0
    %562 = vmatprep.subr.mxu0 0.0
    %563 = vmatpush1.msra.mxu0 0.0
    %564 = vmatprep.subr.mxu0 0.0
    %565 = vmatpush1.msra.mxu0 0.0
    %566 = vmatprep.subr.mxu0 0.0
    %567 = vmatpush1.msra.mxu0 0.0
    %568 = vmatprep.mubr.f32.mxu0 0.0
    %569 = vmatmul.mubr.f32.gmra.mrb[0].mxu0 %v207
    %v570 = vpop.f32.mrb[0].mxu0
    %v571 = vadd.f32 0.0, %v570
    %v572 = vpop.f32.mrb[0].mxu0
    %573 = vdwg.mxu0
    %v575 = vsel %vm283, %v571, 0
    %577 = vmatprep.subr.mxu0 0.0
    %578 = vmatpush1.msra.mxu0 %v575
    %579 = vmatprep.subr.mxu0 0.0
    %580 = vmatpush1.msra.mxu0 0.0
    %581 = vmatprep.subr.mxu0 0.0
    %582 = vmatpush1.msra.mxu0 0.0
    %583 = vmatprep.subr.mxu0 0.0
    %584 = vmatpush1.msra.mxu0 0.0
    %585 = vmatprep.subr.mxu0 0.0
    %586 = vmatpush1.msra.mxu0 0.0
    %587 = vmatprep.subr.mxu0 0.0
    %588 = vmatpush1.msra.mxu0 0.0
    %589 = vmatprep.subr.mxu0 0.0
    %590 = vmatpush1.msra.mxu0 0.0
    %591 = vmatprep.subr.mxu0 0.0
    %592 = vmatpush1.msra.mxu0 0.0
    %593 = vmatprep.subr.mxu0 0.0
    %594 = vmatpush1.msra.mxu0 0.0
    %595 = vmatprep.subr.mxu0 0.0
    %596 = vmatpush1.msra.mxu0 0.0
    %597 = vmatprep.subr.mxu0 0.0
    %598 = vmatpush1.msra.mxu0 0.0
    %599 = vmatprep.subr.mxu0 0.0
    %600 = vmatpush1.msra.mxu0 0.0
    %601 = vmatprep.subr.mxu0 0.0
    %602 = vmatpush1.msra.mxu0 0.0
    %603 = vmatprep.subr.mxu0 0.0
    %604 = vmatpush1.msra.mxu0 0.0
    %605 = vmatprep.subr.mxu0 0.0
    %606 = vmatpush1.msra.mxu0 0.0
    %607 = vmatprep.subr.mxu0 0.0
    %608 = vmatpush1.msra.mxu0 0.0
    %609 = vmatprep.subr.mxu0 0.0
    %610 = vmatpush1.msra.mxu0 0.0
    %611 = vmatprep.subr.mxu0 0.0
    %612 = vmatpush1.msra.mxu0 0.0
    %613 = vmatprep.subr.mxu0 0.0
    %614 = vmatpush1.msra.mxu0 0.0
    %615 = vmatprep.subr.mxu0 0.0
    %616 = vmatpush1.msra.mxu0 0.0
    %617 = vmatprep.subr.mxu0 0.0
    %618 = vmatpush1.msra.mxu0 0.0
    %619 = vmatprep.subr.mxu0 0.0
    %620 = vmatpush1.msra.mxu0 0.0
    %621 = vmatprep.subr.mxu0 0.0
    %622 = vmatpush1.msra.mxu0 0.0
    %623 = vmatprep.subr.mxu0 0.0
    %624 = vmatpush1.msra.mxu0 0.0
    %625 = vmatprep.subr.mxu0 0.0
    %626 = vmatpush1.msra.mxu0 0.0
    %627 = vmatprep.subr.mxu0 0.0
    %628 = vmatpush1.msra.mxu0 0.0
    %629 = vmatprep.subr.mxu0 0.0
    %630 = vmatpush1.msra.mxu0 0.0
    %631 = vmatprep.subr.mxu0 0.0
    %632 = vmatpush1.msra.mxu0 0.0
    %633 = vmatprep.subr.mxu0 0.0
    %634 = vmatpush1.msra.mxu0 0.0
    %635 = vmatprep.subr.mxu0 0.0
    %636 = vmatpush1.msra.mxu0 0.0
    %637 = vmatprep.subr.mxu0 0.0
    %638 = vmatpush1.msra.mxu0 0.0
    %639 = vmatprep.subr.mxu0 0.0
    %640 = vmatpush1.msra.mxu0 0.0
    %641 = vmatprep.mubr.f32.mxu0 0.0
    %642 = vmatmul.mubr.f32.gmra.mrb[0].mxu0 %v281
    %v643 = vpop.f32.mrb[0].mxu0
    %v644 = vadd.f32 0.0, %v643
    %v645 = vpop.f32.mrb[0].mxu0
    %646 = vdwg.mxu0
    %v647 = vsub.f32 %v202, %v644
    %v648 = vmul.f32 %v647, %v647
    %649 = vmatprep.subr.mxu0 0.0
    %650 = vmatpush1.msra.mxu0 %v648
    %651 = vmatprep.subr.mxu0 0.0
    %652 = vmatpush1.msra.mxu0 0.0
    %653 = vmatprep.subr.mxu0 0.0
    %654 = vmatpush1.msra.mxu0 0.0
    %655 = vmatprep.subr.mxu0 0.0
    %656 = vmatpush1.msra.mxu0 0.0
    %657 = vmatprep.subr.mxu0 0.0
    %658 = vmatpush1.msra.mxu0 0.0
    %659 = vmatprep.subr.mxu0 0.0
    %660 = vmatpush1.msra.mxu0 0.0
    %661 = vmatprep.subr.mxu0 0.0
    %662 = vmatpush1.msra.mxu0 0.0
    %663 = vmatprep.subr.mxu0 0.0
    %664 = vmatpush1.msra.mxu0 0.0
    %665 = vmatprep.subr.mxu0 0.0
    %666 = vmatpush1.msra.mxu0 0.0
    %667 = vmatprep.subr.mxu0 0.0
    %668 = vmatpush1.msra.mxu0 0.0
    %669 = vmatprep.subr.mxu0 0.0
    %670 = vmatpush1.msra.mxu0 0.0
    %671 = vmatprep.subr.mxu0 0.0
    %672 = vmatpush1.msra.mxu0 0.0
    %673 = vmatprep.subr.mxu0 0.0
    %674 = vmatpush1.msra.mxu0 0.0
    %675 = vmatprep.subr.mxu0 0.0
    %676 = vmatpush1.msra.mxu0 0.0
    %677 = vmatprep.subr.mxu0 0.0
    %678 = vmatpush1.msra.mxu0 0.0
    %679 = vmatprep.subr.mxu0 0.0
    %680 = vmatpush1.msra.mxu0 0.0
    %681 = vmatprep.subr.mxu0 0.0
    %682 = vmatpush1.msra.mxu0 0.0
    %683 = vmatprep.subr.mxu0 0.0
    %684 = vmatpush1.msra.mxu0 0.0
    %685 = vmatprep.subr.mxu0 0.0
    %686 = vmatpush1.msra.mxu0 0.0
    %687 = vmatprep.subr.mxu0 0.0
    %688 = vmatpush1.msra.mxu0 0.0
    %689 = vmatprep.subr.mxu0 0.0
    %690 = vmatpush1.msra.mxu0 0.0
    %691 = vmatprep.subr.mxu0 0.0
    %692 = vmatpush1.msra.mxu0 0.0
    %693 = vmatprep.subr.mxu0 0.0
    %694 = vmatpush1.msra.mxu0 0.0
    %695 = vmatprep.subr.mxu0 0.0
    %696 = vmatpush1.msra.mxu0 0.0
    %697 = vmatprep.subr.mxu0 0.0
    %698 = vmatpush1.msra.mxu0 0.0
    %699 = vmatprep.subr.mxu0 0.0
    %700 = vmatpush1.msra.mxu0 0.0
    %701 = vmatprep.subr.mxu0 0.0
    %702 = vmatpush1.msra.mxu0 0.0
    %703 = vmatprep.subr.mxu0 0.0
    %704 = vmatpush1.msra.mxu0 0.0
    %705 = vmatprep.subr.mxu0 0.0
    %706 = vmatpush1.msra.mxu0 0.0
    %707 = vmatprep.subr.mxu0 0.0
    %708 = vmatpush1.msra.mxu0 0.0
    %709 = vmatprep.subr.mxu0 0.0
    %710 = vmatpush1.msra.mxu0 0.0
    %711 = vmatprep.subr.mxu0 0.0
    %712 = vmatpush1.msra.mxu0 0.0
    %713 = vmatprep.mubr.f32.mxu0 0.0
    %714 = vmatmul.mubr.f32.gmra.mrb[0].mxu0 %v207
    %v715 = vpop.f32.mrb[0].mxu0
    %v716 = vadd.f32 0.0, %v715
    %v717 = vpop.f32.mrb[0].mxu0
    %718 = vdwg.mxu0
    %v720 = vsel %vm283, %v716, 0
    %722 = vmatprep.subr.mxu0 0.0
    %723 = vmatpush1.msra.mxu0 %v720
    %724 = vmatprep.subr.mxu0 0.0
    %725 = vmatpush1.msra.mxu0 0.0
    %726 = vmatprep.subr.mxu0 0.0
    %727 = vmatpush1.msra.mxu0 0.0
    %728 = vmatprep.subr.mxu0 0.0
    %729 = vmatpush1.msra.mxu0 0.0
    %730 = vmatprep.subr.mxu0 0.0
    %731 = vmatpush1.msra.mxu0 0.0
    %732 = vmatprep.subr.mxu0 0.0
    %733 = vmatpush1.msra.mxu0 0.0
    %734 = vmatprep.subr.mxu0 0.0
    %735 = vmatpush1.msra.mxu0 0.0
    %736 = vmatprep.subr.mxu0 0.0
    %737 = vmatpush1.msra.mxu0 0.0
    %738 = vmatprep.subr.mxu0 0.0
    %739 = vmatpush1.msra.mxu0 0.0
    %740 = vmatprep.subr.mxu0 0.0
    %741 = vmatpush1.msra.mxu0 0.0
    %742 = vmatprep.subr.mxu0 0.0
    %743 = vmatpush1.msra.mxu0 0.0
    %744 = vmatprep.subr.mxu0 0.0
    %745 = vmatpush1.msra.mxu0 0.0
    %746 = vmatprep.subr.mxu0 0.0
    %747 = vmatpush1.msra.mxu0 0.0
    %748 = vmatprep.subr.mxu0 0.0
    %749 = vmatpush1.msra.mxu0 0.0
    %750 = vmatprep.subr.mxu0 0.0
    %751 = vmatpush1.msra.mxu0 0.0
    %752 = vmatprep.subr.mxu0 0.0
    %753 = vmatpush1.msra.mxu0 0.0
    %754 = vmatprep.subr.mxu0 0.0
    %755 = vmatpush1.msra.mxu0 0.0
    %756 = vmatprep.subr.mxu0 0.0
    %757 = vmatpush1.msra.mxu0 0.0
    %758 = vmatprep.subr.mxu0 0.0
    %759 = vmatpush1.msra.mxu0 0.0
    %760 = vmatprep.subr.mxu0 0.0
    %761 = vmatpush1.msra.mxu0 0.0
    %762 = vmatprep.subr.mxu0 0.0
    %763 = vmatpush1.msra.mxu0 0.0
    %764 = vmatprep.subr.mxu0 0.0
    %765 = vmatpush1.msra.mxu0 0.0
    %766 = vmatprep.subr.mxu0 0.0
    %767 = vmatpush1.msra.mxu0 0.0
    %768 = vmatprep.subr.mxu0 0.0
    %769 = vmatpush1.msra.mxu0 0.0
    %770 = vmatprep.subr.mxu0 0.0
    %771 = vmatpush1.msra.mxu0 0.0
    %772 = vmatprep.subr.mxu0 0.0
    %773 = vmatpush1.msra.mxu0 0.0
    %774 = vmatprep.subr.mxu0 0.0
    %775 = vmatpush1.msra.mxu0 0.0
    %776 = vmatprep.subr.mxu0 0.0
    %777 = vmatpush1.msra.mxu0 0.0
    %778 = vmatprep.subr.mxu0 0.0
    %779 = vmatpush1.msra.mxu0 0.0
    %780 = vmatprep.subr.mxu0 0.0
    %781 = vmatpush1.msra.mxu0 0.0
    %782 = vmatprep.subr.mxu0 0.0
    %783 = vmatpush1.msra.mxu0 0.0
    %784 = vmatprep.subr.mxu0 0.0
    %785 = vmatpush1.msra.mxu0 0.0
    %786 = vmatprep.mubr.f32.mxu0 0.0
    %787 = vmatmul.mubr.f32.gmra.mrb[0].mxu0 %v281
    %v788 = vpop.f32.mrb[0].mxu0
    %v789 = vadd.f32 1e-05, %v788
    %v790 = vpop.f32.mrb[0].mxu0
    %791 = vdwg.mxu0
    %v792 = vrsqrt.pop %v789
    %v793 = vmul.f32 %v647, %v792
    %v794 = vxor.u32 %v793, 2147483648
    %v795 = vmul.f32 %v794, 1.442695
    %v796 = vpow.pop %v795
    %v797 = vadd.f32 %v796, 1.0
    %v798 = vrcp.pop %v797
    %v799 = vmul.f32 1.0, %v798
    %v800 = vmul.f32 %v503, %v799
    %s801 = scalar_lea.vmem [#allocation2], 24
    %v802 = vld [vmem:[%s801] sm:$0xff]
    %v803 = vld [vmem:[%s801 + $0x8] sm:$0xff]
    %v804 = vld [vmem:[%s801 + $0x10] sm:$0xff]
    %s805 = scalar_lea.vmem [#allocation5], 24
    %v806 = vld [vmem:[%s805] sm:$0xff]
    %v807 = vld [vmem:[%s805 + $0x8] sm:$0xff]
    %v808 = vld [vmem:[%s805 + $0x10] sm:$0xff]
    %v810 = vsel %vm61, %v800, 0
    %812 = vmatprep.subr.mxu0 0.0
    %813 = vmatpush1.msra.mxu0 %v802
    %814 = vmatprep.subr.mxu0 0.0
    %815 = vmatpush1.msra.mxu0 %v803
    %816 = vmatprep.subr.mxu0 0.0
    %817 = vmatpush1.msra.mxu0 %v804
    %818 = vmatprep.subr.mxu0 0.0
    %819 = vmatpush1.msra.mxu0 0.0
    %820 = vmatprep.subr.mxu0 0.0
    %821 = vmatpush1.msra.mxu0 0.0
    %822 = vmatprep.subr.mxu0 0.0
    %823 = vmatpush1.msra.mxu0 0.0
    %824 = vmatprep.subr.mxu0 0.0
    %825 = vmatpush1.msra.mxu0 0.0
    %826 = vmatprep.subr.mxu0 0.0
    %827 = vmatpush1.msra.mxu0 0.0
    %828 = vmatprep.subr.mxu0 0.0
    %829 = vmatpush1.msra.mxu0 0.0
    %830 = vmatprep.subr.mxu0 0.0
    %831 = vmatpush1.msra.mxu0 0.0
    %832 = vmatprep.subr.mxu0 0.0
    %833 = vmatpush1.msra.mxu0 0.0
    %834 = vmatprep.subr.mxu0 0.0
    %835 = vmatpush1.msra.mxu0 0.0
    %836 = vmatprep.subr.mxu0 0.0
    %837 = vmatpush1.msra.mxu0 0.0
    %838 = vmatprep.subr.mxu0 0.0
    %839 = vmatpush1.msra.mxu0 0.0
    %840 = vmatprep.subr.mxu0 0.0
    %841 = vmatpush1.msra.mxu0 0.0
    %842 = vmatprep.subr.mxu0 0.0
    %843 = vmatpush1.msra.mxu0 0.0
    %844 = vmatprep.subr.mxu0 0.0
    %845 = vmatpush1.msra.mxu0 0.0
    %846 = vmatprep.subr.mxu0 0.0
    %847 = vmatpush1.msra.mxu0 0.0
    %848 = vmatprep.subr.mxu0 0.0
    %849 = vmatpush1.msra.mxu0 0.0
    %850 = vmatprep.subr.mxu0 0.0
    %851 = vmatpush1.msra.mxu0 0.0
    %852 = vmatprep.subr.mxu0 0.0
    %853 = vmatpush1.msra.mxu0 0.0
    %854 = vmatprep.subr.mxu0 0.0
    %855 = vmatpush1.msra.mxu0 0.0
    %856 = vmatprep.subr.mxu0 0.0
    %857 = vmatpush1.msra.mxu0 0.0
    %858 = vmatprep.subr.mxu0 0.0
    %859 = vmatpush1.msra.mxu0 0.0
    %860 = vmatprep.subr.mxu0 0.0
    %861 = vmatpush1.msra.mxu0 0.0
    %862 = vmatprep.subr.mxu0 0.0
    %863 = vmatpush1.msra.mxu0 0.0
    %864 = vmatprep.subr.mxu0 0.0
    %865 = vmatpush1.msra.mxu0 0.0
    %866 = vmatprep.subr.mxu0 0.0
    %867 = vmatpush1.msra.mxu0 0.0
    %868 = vmatprep.subr.mxu0 0.0
    %869 = vmatpush1.msra.mxu0 0.0
    %870 = vmatprep.subr.mxu0 0.0
    %871 = vmatpush1.msra.mxu0 0.0
    %872 = vmatprep.subr.mxu0 0.0
    %873 = vmatpush1.msra.mxu0 0.0
    %874 = vmatprep.subr.mxu0 0.0
    %875 = vmatpush1.msra.mxu0 0.0
    %876 = vmatprep.mubr.f32.mxu0 0.0
    %877 = vmatmul.mubr.f32.gmra.mrb[0].mxu0 %v810
    %v878 = vpop.f32.mrb[0].mxu0
    %v879 = vadd.f32 0.0, %v878
    %v880 = vpop.f32.mrb[0].mxu0
    %881 = vdwg.mxu0
    %882 = vmatprep.subr.mxu0 0.0
    %883 = vmatpush1.msra.mxu0 %v806
    %884 = vmatprep.subr.mxu0 0.0
    %885 = vmatpush1.msra.mxu0 %v807
    %886 = vmatprep.subr.mxu0 0.0
    %887 = vmatpush1.msra.mxu0 %v808
    %888 = vmatprep.subr.mxu0 0.0
    %889 = vmatpush1.msra.mxu0 0.0
    %890 = vmatprep.subr.mxu0 0.0
    %891 = vmatpush1.msra.mxu0 0.0
    %892 = vmatprep.subr.mxu0 0.0
    %893 = vmatpush1.msra.mxu0 0.0
    %894 = vmatprep.subr.mxu0 0.0
    %895 = vmatpush1.msra.mxu0 0.0
    %896 = vmatprep.subr.mxu0 0.0
    %897 = vmatpush1.msra.mxu0 0.0
    %898 = vmatprep.subr.mxu0 0.0
    %899 = vmatpush1.msra.mxu0 0.0
    %900 = vmatprep.subr.mxu0 0.0
    %901 = vmatpush1.msra.mxu0 0.0
    %902 = vmatprep.subr.mxu0 0.0
    %903 = vmatpush1.msra.mxu0 0.0
    %904 = vmatprep.subr.mxu0 0.0
    %905 = vmatpush1.msra.mxu0 0.0
    %906 = vmatprep.subr.mxu0 0.0
    %907 = vmatpush1.msra.mxu0 0.0
    %908 = vmatprep.subr.mxu0 0.0
    %909 = vmatpush1.msra.mxu0 0.0
    %910 = vmatprep.subr.mxu0 0.0
    %911 = vmatpush1.msra.mxu0 0.0
    %912 = vmatprep.subr.mxu0 0.0
    %913 = vmatpush1.msra.mxu0 0.0
    %914 = vmatprep.subr.mxu0 0.0
    %915 = vmatpush1.msra.mxu0 0.0
    %916 = vmatprep.subr.mxu0 0.0
    %917 = vmatpush1.msra.mxu0 0.0
    %918 = vmatprep.subr.mxu0 0.0
    %919 = vmatpush1.msra.mxu0 0.0
    %920 = vmatprep.subr.mxu0 0.0
    %921 = vmatpush1.msra.mxu0 0.0
    %922 = vmatprep.subr.mxu0 0.0
    %923 = vmatpush1.msra.mxu0 0.0
    %924 = vmatprep.subr.mxu0 0.0
    %925 = vmatpush1.msra.mxu0 0.0
    %926 = vmatprep.subr.mxu0 0.0
    %927 = vmatpush1.msra.mxu0 0.0
    %928 = vmatprep.subr.mxu0 0.0
    %929 = vmatpush1.msra.mxu0 0.0
    %930 = vmatprep.subr.mxu0 0.0
    %931 = vmatpush1.msra.mxu0 0.0
    %932 = vmatprep.subr.mxu0 0.0
    %933 = vmatpush1.msra.mxu0 0.0
    %934 = vmatprep.subr.mxu0 0.0
    %935 = vmatpush1.msra.mxu0 0.0
    %936 = vmatprep.subr.mxu0 0.0
    %937 = vmatpush1.msra.mxu0 0.0
    %938 = vmatprep.subr.mxu0 0.0
    %939 = vmatpush1.msra.mxu0 0.0
    %940 = vmatprep.subr.mxu0 0.0
    %941 = vmatpush1.msra.mxu0 0.0
    %942 = vmatprep.subr.mxu0 0.0
    %943 = vmatpush1.msra.mxu0 0.0
    %944 = vmatprep.subr.mxu0 0.0
    %945 = vmatpush1.msra.mxu0 0.0
    %946 = vmatprep.mubr.f32.mxu0 0.0
    %947 = vmatmul.mubr.f32.gmra.mrb[0].mxu0 %v810
    %v948 = vpop.f32.mrb[0].mxu0
    %v949 = vadd.f32 0.0, %v948
    %v950 = vpop.f32.mrb[0].mxu0
    %951 = vdwg.mxu0
    %952 = vmatprep.subr.mxu0 0.0
    %953 = vmatpush1.msra.mxu0 %v879
    %954 = vmatprep.subr.mxu0 0.0
    %955 = vmatpush1.msra.mxu0 0.0
    %956 = vmatprep.subr.mxu0 0.0
    %957 = vmatpush1.msra.mxu0 0.0
    %958 = vmatprep.subr.mxu0 0.0
    %959 = vmatpush1.msra.mxu0 0.0
    %960 = vmatprep.subr.mxu0 0.0
    %961 = vmatpush1.msra.mxu0 0.0
    %962 = vmatprep.subr.mxu0 0.0
    %963 = vmatpush1.msra.mxu0 0.0
    %964 = vmatprep.subr.mxu0 0.0
    %965 = vmatpush1.msra.mxu0 0.0
    %966 = vmatprep.subr.mxu0 0.0
    %967 = vmatpush1.msra.mxu0 0.0
    %968 = vmatprep.subr.mxu0 0.0
    %969 = vmatpush1.msra.mxu0 0.0
    %970 = vmatprep.subr.mxu0 0.0
    %971 = vmatpush1.msra.mxu0 0.0
    %972 = vmatprep.subr.mxu0 0.0
    %973 = vmatpush1.msra.mxu0 0.0
    %974 = vmatprep.subr.mxu0 0.0
    %975 = vmatpush1.msra.mxu0 0.0
    %976 = vmatprep.subr.mxu0 0.0
    %977 = vmatpush1.msra.mxu0 0.0
    %978 = vmatprep.subr.mxu0 0.0
    %979 = vmatpush1.msra.mxu0 0.0
    %980 = vmatprep.subr.mxu0 0.0
    %981 = vmatpush1.msra.mxu0 0.0
    %982 = vmatprep.subr.mxu0 0.0
    %983 = vmatpush1.msra.mxu0 0.0
    %984 = vmatprep.subr.mxu0 0.0
    %985 = vmatpush1.msra.mxu0 0.0
    %986 = vmatprep.subr.mxu0 0.0
    %987 = vmatpush1.msra.mxu0 0.0
    %988 = vmatprep.subr.mxu0 0.0
    %989 = vmatpush1.msra.mxu0 0.0
    %990 = vmatprep.subr.mxu0 0.0
    %991 = vmatpush1.msra.mxu0 0.0
    %992 = vmatprep.subr.mxu0 0.0
    %993 = vmatpush1.msra.mxu0 0.0
    %994 = vmatprep.subr.mxu0 0.0
    %995 = vmatpush1.msra.mxu0 0.0
    %996 = vmatprep.subr.mxu0 0.0
    %997 = vmatpush1.msra.mxu0 0.0
    %998 = vmatprep.subr.mxu0 0.0
    %999 = vmatpush1.msra.mxu0 0.0
    %1000 = vmatprep.subr.mxu0 0.0
    %1001 = vmatpush1.msra.mxu0 0.0
    %1002 = vmatprep.subr.mxu0 0.0
    %1003 = vmatpush1.msra.mxu0 0.0
    %1004 = vmatprep.subr.mxu0 0.0
    %1005 = vmatpush1.msra.mxu0 0.0
    %1006 = vmatprep.subr.mxu0 0.0
    %1007 = vmatpush1.msra.mxu0 0.0
    %1008 = vmatprep.subr.mxu0 0.0
    %1009 = vmatpush1.msra.mxu0 0.0
    %1010 = vmatprep.subr.mxu0 0.0
    %1011 = vmatpush1.msra.mxu0 0.0
    %1012 = vmatprep.subr.mxu0 0.0
    %1013 = vmatpush1.msra.mxu0 0.0
    %1014 = vmatprep.subr.mxu0 0.0
    %1015 = vmatpush1.msra.mxu0 0.0
    %1016 = vmatprep.mubr.f32.mxu0 0.0
    %1017 = vmatmul.mubr.f32.gmra.mrb[0].mxu0 %v207
    %v1018 = vpop.f32.mrb[0].mxu0
    %v1019 = vadd.f32 0.0, %v1018
    %v1020 = vpop.f32.mrb[0].mxu0
    %1021 = vdwg.mxu0
    %v1023 = vsel %vm283, %v1019, 0
    %1025 = vmatprep.subr.mxu0 0.0
    %1026 = vmatpush1.msra.mxu0 %v1023
    %1027 = vmatprep.subr.mxu0 0.0
    %1028 = vmatpush1.msra.mxu0 0.0
    %1029 = vmatprep.subr.mxu0 0.0
    %1030 = vmatpush1.msra.mxu0 0.0
    %1031 = vmatprep.subr.mxu0 0.0
    %1032 = vmatpush1.msra.mxu0 0.0
    %1033 = vmatprep.subr.mxu0 0.0
    %1034 = vmatpush1.msra.mxu0 0.0
    %1035 = vmatprep.subr.mxu0 0.0
    %1036 = vmatpush1.msra.mxu0 0.0
    %1037 = vmatprep.subr.mxu0 0.0
    %1038 = vmatpush1.msra.mxu0 0.0
    %1039 = vmatprep.subr.mxu0 0.0
    %1040 = vmatpush1.msra.mxu0 0.0
    %1041 = vmatprep.subr.mxu0 0.0
    %1042 = vmatpush1.msra.mxu0 0.0
    %1043 = vmatprep.subr.mxu0 0.0
    %1044 = vmatpush1.msra.mxu0 0.0
    %1045 = vmatprep.subr.mxu0 0.0
    %1046 = vmatpush1.msra.mxu0 0.0
    %1047 = vmatprep.subr.mxu0 0.0
    %1048 = vmatpush1.msra.mxu0 0.0
    %1049 = vmatprep.subr.mxu0 0.0
    %1050 = vmatpush1.msra.mxu0 0.0
    %1051 = vmatprep.subr.mxu0 0.0
    %1052 = vmatpush1.msra.mxu0 0.0
    %1053 = vmatprep.subr.mxu0 0.0
    %1054 = vmatpush1.msra.mxu0 0.0
    %1055 = vmatprep.subr.mxu0 0.0
    %1056 = vmatpush1.msra.mxu0 0.0
    %1057 = vmatprep.subr.mxu0 0.0
    %1058 = vmatpush1.msra.mxu0 0.0
    %1059 = vmatprep.subr.mxu0 0.0
    %1060 = vmatpush1.msra.mxu0 0.0
    %1061 = vmatprep.subr.mxu0 0.0
    %1062 = vmatpush1.msra.mxu0 0.0
    %1063 = vmatprep.subr.mxu0 0.0
    %1064 = vmatpush1.msra.mxu0 0.0
    %1065 = vmatprep.subr.mxu0 0.0
    %1066 = vmatpush1.msra.mxu0 0.0
    %1067 = vmatprep.subr.mxu0 0.0
    %1068 = vmatpush1.msra.mxu0 0.0
    %1069 = vmatprep.subr.mxu0 0.0
    %1070 = vmatpush1.msra.mxu0 0.0
    %1071 = vmatprep.subr.mxu0 0.0
    %1072 = vmatpush1.msra.mxu0 0.0
    %1073 = vmatprep.subr.mxu0 0.0
    %1074 = vmatpush1.msra.mxu0 0.0
    %1075 = vmatprep.subr.mxu0 0.0
    %1076 = vmatpush1.msra.mxu0 0.0
    %1077 = vmatprep.subr.mxu0 0.0
    %1078 = vmatpush1.msra.mxu0 0.0
    %1079 = vmatprep.subr.mxu0 0.0
    %1080 = vmatpush1.msra.mxu0 0.0
    %1081 = vmatprep.subr.mxu0 0.0
    %1082 = vmatpush1.msra.mxu0 0.0
    %1083 = vmatprep.subr.mxu0 0.0
    %1084 = vmatpush1.msra.mxu0 0.0
    %1085 = vmatprep.subr.mxu0 0.0
    %1086 = vmatpush1.msra.mxu0 0.0
    %1087 = vmatprep.subr.mxu0 0.0
    %1088 = vmatpush1.msra.mxu0 0.0
    %1089 = vmatprep.mubr.f32.mxu0 0.0
    %1090 = vmatmul.mubr.f32.gmra.mrb[0].mxu0 %v281
    %v1091 = vpop.f32.mrb[0].mxu0
    %v1092 = vadd.f32 0.0, %v1091
    %v1093 = vpop.f32.mrb[0].mxu0
    %1094 = vdwg.mxu0
    %v1095 = vsub.f32 %v879, %v1092
    %v1096 = vmul.f32 %v1095, %v1095
    %1097 = vmatprep.subr.mxu0 0.0
    %1098 = vmatpush1.msra.mxu0 %v1096
    %1099 = vmatprep.subr.mxu0 0.0
    %1100 = vmatpush1.msra.mxu0 0.0
    %1101 = vmatprep.subr.mxu0 0.0
    %1102 = vmatpush1.msra.mxu0 0.0
    %1103 = vmatprep.subr.mxu0 0.0
    %1104 = vmatpush1.msra.mxu0 0.0
    %1105 = vmatprep.subr.mxu0 0.0
    %1106 = vmatpush1.msra.mxu0 0.0
    %1107 = vmatprep.subr.mxu0 0.0
    %1108 = vmatpush1.msra.mxu0 0.0
    %1109 = vmatprep.subr.mxu0 0.0
    %1110 = vmatpush1.msra.mxu0 0.0
    %1111 = vmatprep.subr.mxu0 0.0
    %1112 = vmatpush1.msra.mxu0 0.0
    %1113 = vmatprep.subr.mxu0 0.0
    %1114 = vmatpush1.msra.mxu0 0.0
    %1115 = vmatprep.subr.mxu0 0.0
    %1116 = vmatpush1.msra.mxu0 0.0
    %1117 = vmatprep.subr.mxu0 0.0
    %1118 = vmatpush1.msra.mxu0 0.0
    %1119 = vmatprep.subr.mxu0 0.0
    %1120 = vmatpush1.msra.mxu0 0.0
    %1121 = vmatprep.subr.mxu0 0.0
    %1122 = vmatpush1.msra.mxu0 0.0
    %1123 = vmatprep.subr.mxu0 0.0
    %1124 = vmatpush1.msra.mxu0 0.0
    %1125 = vmatprep.subr.mxu0 0.0
    %1126 = vmatpush1.msra.mxu0 0.0
    %1127 = vmatprep.subr.mxu0 0.0
    %1128 = vmatpush1.msra.mxu0 0.0
    %1129 = vmatprep.subr.mxu0 0.0
    %1130 = vmatpush1.msra.mxu0 0.0
    %1131 = vmatprep.subr.mxu0 0.0
    %1132 = vmatpush1.msra.mxu0 0.0
    %1133 = vmatprep.subr.mxu0 0.0
    %1134 = vmatpush1.msra.mxu0 0.0
    %1135 = vmatprep.subr.mxu0 0.0
    %1136 = vmatpush1.msra.mxu0 0.0
    %1137 = vmatprep.subr.mxu0 0.0
    %1138 = vmatpush1.msra.mxu0 0.0
    %1139 = vmatprep.subr.mxu0 0.0
    %1140 = vmatpush1.msra.mxu0 0.0
    %1141 = vmatprep.subr.mxu0 0.0
    %1142 = vmatpush1.msra.mxu0 0.0
    %1143 = vmatprep.subr.mxu0 0.0
    %1144 = vmatpush1.msra.mxu0 0.0
    %1145 = vmatprep.subr.mxu0 0.0
    %1146 = vmatpush1.msra.mxu0 0.0
    %1147 = vmatprep.subr.mxu0 0.0
    %1148 = vmatpush1.msra.mxu0 0.0
    %1149 = vmatprep.subr.mxu0 0.0
    %1150 = vmatpush1.msra.mxu0 0.0
    %1151 = vmatprep.subr.mxu0 0.0
    %1152 = vmatpush1.msra.mxu0 0.0
    %1153 = vmatprep.subr.mxu0 0.0
    %1154 = vmatpush1.msra.mxu0 0.0
    %1155 = vmatprep.subr.mxu0 0.0
    %1156 = vmatpush1.msra.mxu0 0.0
    %1157 = vmatprep.subr.mxu0 0.0
    %1158 = vmatpush1.msra.mxu0 0.0
    %1159 = vmatprep.subr.mxu0 0.0
    %1160 = vmatpush1.msra.mxu0 0.0
    %1161 = vmatprep.mubr.f32.mxu0 0.0
    %1162 = vmatmul.mubr.f32.gmra.mrb[0].mxu0 %v207
    %v1163 = vpop.f32.mrb[0].mxu0
    %v1164 = vadd.f32 0.0, %v1163
    %v1165 = vpop.f32.mrb[0].mxu0
    %1166 = vdwg.mxu0
    %v1168 = vsel %vm283, %v1164, 0
    %1170 = vmatprep.subr.mxu0 0.0
    %1171 = vmatpush1.msra.mxu0 %v1168
    %1172 = vmatprep.subr.mxu0 0.0
    %1173 = vmatpush1.msra.mxu0 0.0
    %1174 = vmatprep.subr.mxu0 0.0
    %1175 = vmatpush1.msra.mxu0 0.0
    %1176 = vmatprep.subr.mxu0 0.0
    %1177 = vmatpush1.msra.mxu0 0.0
    %1178 = vmatprep.subr.mxu0 0.0
    %1179 = vmatpush1.msra.mxu0 0.0
    %1180 = vmatprep.subr.mxu0 0.0
    %1181 = vmatpush1.msra.mxu0 0.0
    %1182 = vmatprep.subr.mxu0 0.0
    %1183 = vmatpush1.msra.mxu0 0.0
    %1184 = vmatprep.subr.mxu0 0.0
    %1185 = vmatpush1.msra.mxu0 0.0
    %1186 = vmatprep.subr.mxu0 0.0
    %1187 = vmatpush1.msra.mxu0 0.0
    %1188 = vmatprep.subr.mxu0 0.0
    %1189 = vmatpush1.msra.mxu0 0.0
    %1190 = vmatprep.subr.mxu0 0.0
    %1191 = vmatpush1.msra.mxu0 0.0
    %1192 = vmatprep.subr.mxu0 0.0
    %1193 = vmatpush1.msra.mxu0 0.0
    %1194 = vmatprep.subr.mxu0 0.0
    %1195 = vmatpush1.msra.mxu0 0.0
    %1196 = vmatprep.subr.mxu0 0.0
    %1197 = vmatpush1.msra.mxu0 0.0
    %1198 = vmatprep.subr.mxu0 0.0
    %1199 = vmatpush1.msra.mxu0 0.0
    %1200 = vmatprep.subr.mxu0 0.0
    %1201 = vmatpush1.msra.mxu0 0.0
    %1202 = vmatprep.subr.mxu0 0.0
    %1203 = vmatpush1.msra.mxu0 0.0
    %1204 = vmatprep.subr.mxu0 0.0
    %1205 = vmatpush1.msra.mxu0 0.0
    %1206 = vmatprep.subr.mxu0 0.0
    %1207 = vmatpush1.msra.mxu0 0.0
    %1208 = vmatprep.subr.mxu0 0.0
    %1209 = vmatpush1.msra.mxu0 0.0
    %1210 = vmatprep.subr.mxu0 0.0
    %1211 = vmatpush1.msra.mxu0 0.0
    %1212 = vmatprep.subr.mxu0 0.0
    %1213 = vmatpush1.msra.mxu0 0.0
    %1214 = vmatprep.subr.mxu0 0.0
    %1215 = vmatpush1.msra.mxu0 0.0
    %1216 = vmatprep.subr.mxu0 0.0
    %1217 = vmatpush1.msra.mxu0 0.0
    %1218 = vmatprep.subr.mxu0 0.0
    %1219 = vmatpush1.msra.mxu0 0.0
    %1220 = vmatprep.subr.mxu0 0.0
    %1221 = vmatpush1.msra.mxu0 0.0
    %1222 = vmatprep.subr.mxu0 0.0
    %1223 = vmatpush1.msra.mxu0 0.0
    %1224 = vmatprep.subr.mxu0 0.0
    %1225 = vmatpush1.msra.mxu0 0.0
    %1226 = vmatprep.subr.mxu0 0.0
    %1227 = vmatpush1.msra.mxu0 0.0
    %1228 = vmatprep.subr.mxu0 0.0
    %1229 = vmatpush1.msra.mxu0 0.0
    %1230 = vmatprep.subr.mxu0 0.0
    %1231 = vmatpush1.msra.mxu0 0.0
    %1232 = vmatprep.subr.mxu0 0.0
    %1233 = vmatpush1.msra.mxu0 0.0
    %1234 = vmatprep.mubr.f32.mxu0 0.0
    %1235 = vmatmul.mubr.f32.gmra.mrb[0].mxu0 %v281
    %v1236 = vpop.f32.mrb[0].mxu0
    %v1237 = vadd.f32 1e-05, %v1236
    %v1238 = vpop.f32.mrb[0].mxu0
    %1239 = vdwg.mxu0
    %v1240 = vrsqrt.pop %v1237
    %v1241 = vmul.f32 %v1095, %v1240
    %1242 = vmatprep.subr.mxu0 0.0
    %1243 = vmatpush1.msra.mxu0 %v949
    %1244 = vmatprep.subr.mxu0 0.0
    %1245 = vmatpush1.msra.mxu0 0.0
    %1246 = vmatprep.subr.mxu0 0.0
    %1247 = vmatpush1.msra.mxu0 0.0
    %1248 = vmatprep.subr.mxu0 0.0
    %1249 = vmatpush1.msra.mxu0 0.0
    %1250 = vmatprep.subr.mxu0 0.0
    %1251 = vmatpush1.msra.mxu0 0.0
    %1252 = vmatprep.subr.mxu0 0.0
    %1253 = vmatpush1.msra.mxu0 0.0
    %1254 = vmatprep.subr.mxu0 0.0
    %1255 = vmatpush1.msra.mxu0 0.0
    %1256 = vmatprep.subr.mxu0 0.0
    %1257 = vmatpush1.msra.mxu0 0.0
    %1258 = vmatprep.subr.mxu0 0.0
    %1259 = vmatpush1.msra.mxu0 0.0
    %1260 = vmatprep.subr.mxu0 0.0
    %1261 = vmatpush1.msra.mxu0 0.0
    %1262 = vmatprep.subr.mxu0 0.0
    %1263 = vmatpush1.msra.mxu0 0.0
    %1264 = vmatprep.subr.mxu0 0.0
    %1265 = vmatpush1.msra.mxu0 0.0
    %1266 = vmatprep.subr.mxu0 0.0
    %1267 = vmatpush1.msra.mxu0 0.0
    %1268 = vmatprep.subr.mxu0 0.0
    %1269 = vmatpush1.msra.mxu0 0.0
    %1270 = vmatprep.subr.mxu0 0.0
    %1271 = vmatpush1.msra.mxu0 0.0
    %1272 = vmatprep.subr.mxu0 0.0
    %1273 = vmatpush1.msra.mxu0 0.0
    %1274 = vmatprep.subr.mxu0 0.0
    %1275 = vmatpush1.msra.mxu0 0.0
    %1276 = vmatprep.subr.mxu0 0.0
    %1277 = vmatpush1.msra.mxu0 0.0
    %1278 = vmatprep.subr.mxu0 0.0
    %1279 = vmatpush1.msra.mxu0 0.0
    %1280 = vmatprep.subr.mxu0 0.0
    %1281 = vmatpush1.msra.mxu0 0.0
    %1282 = vmatprep.subr.mxu0 0.0
    %1283 = vmatpush1.msra.mxu0 0.0
    %1284 = vmatprep.subr.mxu0 0.0
    %1285 = vmatpush1.msra.mxu0 0.0
    %1286 = vmatprep.subr.mxu0 0.0
    %1287 = vmatpush1.msra.mxu0 0.0
    %1288 = vmatprep.subr.mxu0 0.0
    %1289 = vmatpush1.msra.mxu0 0.0
    %1290 = vmatprep.subr.mxu0 0.0
    %1291 = vmatpush1.msra.mxu0 0.0
    %1292 = vmatprep.subr.mxu0 0.0
    %1293 = vmatpush1.msra.mxu0 0.0
    %1294 = vmatprep.subr.mxu0 0.0
    %1295 = vmatpush1.msra.mxu0 0.0
    %1296 = vmatprep.subr.mxu0 0.0
    %1297 = vmatpush1.msra.mxu0 0.0
    %1298 = vmatprep.subr.mxu0 0.0
    %1299 = vmatpush1.msra.mxu0 0.0
    %1300 = vmatprep.subr.mxu0 0.0
    %1301 = vmatpush1.msra.mxu0 0.0
    %1302 = vmatprep.subr.mxu0 0.0
    %1303 = vmatpush1.msra.mxu0 0.0
    %1304 = vmatprep.subr.mxu0 0.0
    %1305 = vmatpush1.msra.mxu0 0.0
    %1306 = vmatprep.mubr.f32.mxu0 0.0
    %1307 = vmatmul.mubr.f32.gmra.mrb[0].mxu0 %v207
    %v1308 = vpop.f32.mrb[0].mxu0
    %v1309 = vadd.f32 0.0, %v1308
    %v1310 = vpop.f32.mrb[0].mxu0
    %1311 = vdwg.mxu0
    %v1313 = vsel %vm283, %v1309, 0
    %1315 = vmatprep.subr.mxu0 0.0
    %1316 = vmatpush1.msra.mxu0 %v1313
    %1317 = vmatprep.subr.mxu0 0.0
    %1318 = vmatpush1.msra.mxu0 0.0
    %1319 = vmatprep.subr.mxu0 0.0
    %1320 = vmatpush1.msra.mxu0 0.0
    %1321 = vmatprep.subr.mxu0 0.0
    %1322 = vmatpush1.msra.mxu0 0.0
    %1323 = vmatprep.subr.mxu0 0.0
    %1324 = vmatpush1.msra.mxu0 0.0
    %1325 = vmatprep.subr.mxu0 0.0
    %1326 = vmatpush1.msra.mxu0 0.0
    %1327 = vmatprep.subr.mxu0 0.0
    %1328 = vmatpush1.msra.mxu0 0.0
    %1329 = vmatprep.subr.mxu0 0.0
    %1330 = vmatpush1.msra.mxu0 0.0
    %1331 = vmatprep.subr.mxu0 0.0
    %1332 = vmatpush1.msra.mxu0 0.0
    %1333 = vmatprep.subr.mxu0 0.0
    %1334 = vmatpush1.msra.mxu0 0.0
    %1335 = vmatprep.subr.mxu0 0.0
    %1336 = vmatpush1.msra.mxu0 0.0
    %1337 = vmatprep.subr.mxu0 0.0
    %1338 = vmatpush1.msra.mxu0 0.0
    %1339 = vmatprep.subr.mxu0 0.0
    %1340 = vmatpush1.msra.mxu0 0.0
    %1341 = vmatprep.subr.mxu0 0.0
    %1342 = vmatpush1.msra.mxu0 0.0
    %1343 = vmatprep.subr.mxu0 0.0
    %1344 = vmatpush1.msra.mxu0 0.0
    %1345 = vmatprep.subr.mxu0 0.0
    %1346 = vmatpush1.msra.mxu0 0.0
    %1347 = vmatprep.subr.mxu0 0.0
    %1348 = vmatpush1.msra.mxu0 0.0
    %1349 = vmatprep.subr.mxu0 0.0
    %1350 = vmatpush1.msra.mxu0 0.0
    %1351 = vmatprep.subr.mxu0 0.0
    %1352 = vmatpush1.msra.mxu0 0.0
    %1353 = vmatprep.subr.mxu0 0.0
    %1354 = vmatpush1.msra.mxu0 0.0
    %1355 = vmatprep.subr.mxu0 0.0
    %1356 = vmatpush1.msra.mxu0 0.0
    %1357 = vmatprep.subr.mxu0 0.0
    %1358 = vmatpush1.msra.mxu0 0.0
    %1359 = vmatprep.subr.mxu0 0.0
    %1360 = vmatpush1.msra.mxu0 0.0
    %1361 = vmatprep.subr.mxu0 0.0
    %1362 = vmatpush1.msra.mxu0 0.0
    %1363 = vmatprep.subr.mxu0 0.0
    %1364 = vmatpush1.msra.mxu0 0.0
    %1365 = vmatprep.subr.mxu0 0.0
    %1366 = vmatpush1.msra.mxu0 0.0
    %1367 = vmatprep.subr.mxu0 0.0
    %1368 = vmatpush1.msra.mxu0 0.0
    %1369 = vmatprep.subr.mxu0 0.0
    %1370 = vmatpush1.msra.mxu0 0.0
    %1371 = vmatprep.subr.mxu0 0.0
    %1372 = vmatpush1.msra.mxu0 0.0
    %1373 = vmatprep.subr.mxu0 0.0
    %1374 = vmatpush1.msra.mxu0 0.0
    %1375 = vmatprep.subr.mxu0 0.0
    %1376 = vmatpush1.msra.mxu0 0.0
    %1377 = vmatprep.subr.mxu0 0.0
    %1378 = vmatpush1.msra.mxu0 0.0
    %1379 = vmatprep.mubr.f32.mxu0 0.0
    %1380 = vmatmul.mubr.f32.gmra.mrb[0].mxu0 %v281
    %v1381 = vpop.f32.mrb[0].mxu0
    %v1382 = vadd.f32 0.0, %v1381
    %v1383 = vpop.f32.mrb[0].mxu0
    %1384 = vdwg.mxu0
    %v1385 = vsub.f32 %v949, %v1382
    %v1386 = vmul.f32 %v1385, %v1385
    %1387 = vmatprep.subr.mxu0 0.0
    %1388 = vmatpush1.msra.mxu0 %v1386
    %1389 = vmatprep.subr.mxu0 0.0
    %1390 = vmatpush1.msra.mxu0 0.0
    %1391 = vmatprep.subr.mxu0 0.0
    %1392 = vmatpush1.msra.mxu0 0.0
    %1393 = vmatprep.subr.mxu0 0.0
    %1394 = vmatpush1.msra.mxu0 0.0
    %1395 = vmatprep.subr.mxu0 0.0
    %1396 = vmatpush1.msra.mxu0 0.0
    %1397 = vmatprep.subr.mxu0 0.0
    %1398 = vmatpush1.msra.mxu0 0.0
    %1399 = vmatprep.subr.mxu0 0.0
    %1400 = vmatpush1.msra.mxu0 0.0
    %1401 = vmatprep.subr.mxu0 0.0
    %1402 = vmatpush1.msra.mxu0 0.0
    %1403 = vmatprep.subr.mxu0 0.0
    %1404 = vmatpush1.msra.mxu0 0.0
    %1405 = vmatprep.subr.mxu0 0.0
    %1406 = vmatpush1.msra.mxu0 0.0
    %1407 = vmatprep.subr.mxu0 0.0
    %1408 = vmatpush1.msra.mxu0 0.0
    %1409 = vmatprep.subr.mxu0 0.0
    %1410 = vmatpush1.msra.mxu0 0.0
    %1411 = vmatprep.subr.mxu0 0.0
    %1412 = vmatpush1.msra.mxu0 0.0
    %1413 = vmatprep.subr.mxu0 0.0
    %1414 = vmatpush1.msra.mxu0 0.0
    %1415 = vmatprep.subr.mxu0 0.0
    %1416 = vmatpush1.msra.mxu0 0.0
    %1417 = vmatprep.subr.mxu0 0.0
    %1418 = vmatpush1.msra.mxu0 0.0
    %1419 = vmatprep.subr.mxu0 0.0
    %1420 = vmatpush1.msra.mxu0 0.0
    %1421 = vmatprep.subr.mxu0 0.0
    %1422 = vmatpush1.msra.mxu0 0.0
    %1423 = vmatprep.subr.mxu0 0.0
    %1424 = vmatpush1.msra.mxu0 0.0
    %1425 = vmatprep.subr.mxu0 0.0
    %1426 = vmatpush1.msra.mxu0 0.0
    %1427 = vmatprep.subr.mxu0 0.0
    %1428 = vmatpush1.msra.mxu0 0.0
    %1429 = vmatprep.subr.mxu0 0.0
    %1430 = vmatpush1.msra.mxu0 0.0
    %1431 = vmatprep.subr.mxu0 0.0
    %1432 = vmatpush1.msra.mxu0 0.0
    %1433 = vmatprep.subr.mxu0 0.0
    %1434 = vmatpush1.msra.mxu0 0.0
    %1435 = vmatprep.subr.mxu0 0.0
    %1436 = vmatpush1.msra.mxu0 0.0
    %1437 = vmatprep.subr.mxu0 0.0
    %1438 = vmatpush1.msra.mxu0 0.0
    %1439 = vmatprep.subr.mxu0 0.0
    %1440 = vmatpush1.msra.mxu0 0.0
    %1441 = vmatprep.subr.mxu0 0.0
    %1442 = vmatpush1.msra.mxu0 0.0
    %1443 = vmatprep.subr.mxu0 0.0
    %1444 = vmatpush1.msra.mxu0 0.0
    %1445 = vmatprep.subr.mxu0 0.0
    %1446 = vmatpush1.msra.mxu0 0.0
    %1447 = vmatprep.subr.mxu0 0.0
    %1448 = vmatpush1.msra.mxu0 0.0
    %1449 = vmatprep.subr.mxu0 0.0
    %1450 = vmatpush1.msra.mxu0 0.0
    %1451 = vmatprep.mubr.f32.mxu0 0.0
    %1452 = vmatmul.mubr.f32.gmra.mrb[0].mxu0 %v207
    %v1453 = vpop.f32.mrb[0].mxu0
    %v1454 = vadd.f32 0.0, %v1453
    %v1455 = vpop.f32.mrb[0].mxu0
    %1456 = vdwg.mxu0
    %v1458 = vsel %vm283, %v1454, 0
    %1460 = vmatprep.subr.mxu0 0.0
    %1461 = vmatpush1.msra.mxu0 %v1458
    %1462 = vmatprep.subr.mxu0 0.0
    %1463 = vmatpush1.msra.mxu0 0.0
    %1464 = vmatprep.subr.mxu0 0.0
    %1465 = vmatpush1.msra.mxu0 0.0
    %1466 = vmatprep.subr.mxu0 0.0
    %1467 = vmatpush1.msra.mxu0 0.0
    %1468 = vmatprep.subr.mxu0 0.0
    %1469 = vmatpush1.msra.mxu0 0.0
    %1470 = vmatprep.subr.mxu0 0.0
    %1471 = vmatpush1.msra.mxu0 0.0
    %1472 = vmatprep.subr.mxu0 0.0
    %1473 = vmatpush1.msra.mxu0 0.0
    %1474 = vmatprep.subr.mxu0 0.0
    %1475 = vmatpush1.msra.mxu0 0.0
    %1476 = vmatprep.subr.mxu0 0.0
    %1477 = vmatpush1.msra.mxu0 0.0
    %1478 = vmatprep.subr.mxu0 0.0
    %1479 = vmatpush1.msra.mxu0 0.0
    %1480 = vmatprep.subr.mxu0 0.0
    %1481 = vmatpush1.msra.mxu0 0.0
    %1482 = vmatprep.subr.mxu0 0.0
    %1483 = vmatpush1.msra.mxu0 0.0
    %1484 = vmatprep.subr.mxu0 0.0
    %1485 = vmatpush1.msra.mxu0 0.0
    %1486 = vmatprep.subr.mxu0 0.0
    %1487 = vmatpush1.msra.mxu0 0.0
    %1488 = vmatprep.subr.mxu0 0.0
    %1489 = vmatpush1.msra.mxu0 0.0
    %1490 = vmatprep.subr.mxu0 0.0
    %1491 = vmatpush1.msra.mxu0 0.0
    %1492 = vmatprep.subr.mxu0 0.0
    %1493 = vmatpush1.msra.mxu0 0.0
    %1494 = vmatprep.subr.mxu0 0.0
    %1495 = vmatpush1.msra.mxu0 0.0
    %1496 = vmatprep.subr.mxu0 0.0
    %1497 = vmatpush1.msra.mxu0 0.0
    %1498 = vmatprep.subr.mxu0 0.0
    %1499 = vmatpush1.msra.mxu0 0.0
    %1500 = vmatprep.subr.mxu0 0.0
    %1501 = vmatpush1.msra.mxu0 0.0
    %1502 = vmatprep.subr.mxu0 0.0
    %1503 = vmatpush1.msra.mxu0 0.0
    %1504 = vmatprep.subr.mxu0 0.0
    %1505 = vmatpush1.msra.mxu0 0.0
    %1506 = vmatprep.subr.mxu0 0.0
    %1507 = vmatpush1.msra.mxu0 0.0
    %1508 = vmatprep.subr.mxu0 0.0
    %1509 = vmatpush1.msra.mxu0 0.0
    %1510 = vmatprep.subr.mxu0 0.0
    %1511 = vmatpush1.msra.mxu0 0.0
    %1512 = vmatprep.subr.mxu0 0.0
    %1513 = vmatpush1.msra.mxu0 0.0
    %1514 = vmatprep.subr.mxu0 0.0
    %1515 = vmatpush1.msra.mxu0 0.0
    %1516 = vmatprep.subr.mxu0 0.0
    %1517 = vmatpush1.msra.mxu0 0.0
    %1518 = vmatprep.subr.mxu0 0.0
    %1519 = vmatpush1.msra.mxu0 0.0
    %1520 = vmatprep.subr.mxu0 0.0
    %1521 = vmatpush1.msra.mxu0 0.0
    %1522 = vmatprep.subr.mxu0 0.0
    %1523 = vmatpush1.msra.mxu0 0.0
    %1524 = vmatprep.mubr.f32.mxu0 0.0
    %1525 = vmatmul.mubr.f32.gmra.mrb[0].mxu0 %v281
    %v1526 = vpop.f32.mrb[0].mxu0
    %v1527 = vadd.f32 1e-05, %v1526
    %v1528 = vpop.f32.mrb[0].mxu0
    %1529 = vdwg.mxu0
    %v1530 = vrsqrt.pop %v1527
    %v1531 = vmul.f32 %v1385, %v1530
    %v1532 = vxor.u32 %v1531, 2147483648
    %v1533 = vmul.f32 %v1532, 1.442695
    %v1534 = vpow.pop %v1533
    %v1535 = vadd.f32 %v1534, 1.0
    %v1536 = vrcp.pop %v1535
    %v1537 = vmul.f32 1.0, %v1536
    %v1538 = vmul.f32 %v1241, %v1537
    %v1539 = vadd.f32 %v800, %v1538
    %v1540 = vmul.f32 %v1539, 0.70710677
    %s1541 = scalar_lea.vmem [#allocation2], 48
    %v1542 = vld [vmem:[%s1541] sm:$0xff]
    %v1543 = vld [vmem:[%s1541 + $0x8] sm:$0xff]
    %v1544 = vld [vmem:[%s1541 + $0x10] sm:$0xff]
    %s1545 = scalar_lea.vmem [#allocation5], 48
    %v1546 = vld [vmem:[%s1545] sm:$0xff]
    %v1547 = vld [vmem:[%s1545 + $0x8] sm:$0xff]
    %v1548 = vld [vmem:[%s1545 + $0x10] sm:$0xff]
    %v1550 = vsel %vm61, %v1540, 0
    %1552 = vmatprep.subr.mxu0 0.0
    %1553 = vmatpush1.msra.mxu0 %v1542
    %1554 = vmatprep.subr.mxu0 0.0
    %1555 = vmatpush1.msra.mxu0 %v1543
    %1556 = vmatprep.subr.mxu0 0.0
    %1557 = vmatpush1.msra.mxu0 %v1544
    %1558 = vmatprep.subr.mxu0 0.0
    %1559 = vmatpush1.msra.mxu0 0.0
    %1560 = vmatprep.subr.mxu0 0.0
    %1561 = vmatpush1.msra.mxu0 0.0
    %1562 = vmatprep.subr.mxu0 0.0
    %1563 = vmatpush1.msra.mxu0 0.0
    %1564 = vmatprep.subr.mxu0 0.0
    %1565 = vmatpush1.msra.mxu0 0.0
    %1566 = vmatprep.subr.mxu0 0.0
    %1567 = vmatpush1.msra.mxu0 0.0
    %1568 = vmatprep.subr.mxu0 0.0
    %1569 = vmatpush1.msra.mxu0 0.0
    %1570 = vmatprep.subr.mxu0 0.0
    %1571 = vmatpush1.msra.mxu0 0.0
    %1572 = vmatprep.subr.mxu0 0.0
    %1573 = vmatpush1.msra.mxu0 0.0
    %1574 = vmatprep.subr.mxu0 0.0
    %1575 = vmatpush1.msra.mxu0 0.0
    %1576 = vmatprep.subr.mxu0 0.0
    %1577 = vmatpush1.msra.mxu0 0.0
    %1578 = vmatprep.subr.mxu0 0.0
    %1579 = vmatpush1.msra.mxu0 0.0
    %1580 = vmatprep.subr.mxu0 0.0
    %1581 = vmatpush1.msra.mxu0 0.0
    %1582 = vmatprep.subr.mxu0 0.0
    %1583 = vmatpush1.msra.mxu0 0.0
    %1584 = vmatprep.subr.mxu0 0.0
    %1585 = vmatpush1.msra.mxu0 0.0
    %1586 = vmatprep.subr.mxu0 0.0
    %1587 = vmatpush1.msra.mxu0 0.0
    %1588 = vmatprep.subr.mxu0 0.0
    %1589 = vmatpush1.msra.mxu0 0.0
    %1590 = vmatprep.subr.mxu0 0.0
    %1591 = vmatpush1.msra.mxu0 0.0
    %1592 = vmatprep.subr.mxu0 0.0
    %1593 = vmatpush1.msra.mxu0 0.0
    %1594 = vmatprep.subr.mxu0 0.0
    %1595 = vmatpush1.msra.mxu0 0.0
    %1596 = vmatprep.subr.mxu0 0.0
    %1597 = vmatpush1.msra.mxu0 0.0
    %1598 = vmatprep.subr.mxu0 0.0
    %1599 = vmatpush1.msra.mxu0 0.0
    %1600 = vmatprep.subr.mxu0 0.0
    %1601 = vmatpush1.msra.mxu0 0.0
    %1602 = vmatprep.subr.mxu0 0.0
    %1603 = vmatpush1.msra.mxu0 0.0
    %1604 = vmatprep.subr.mxu0 0.0
    %1605 = vmatpush1.msra.mxu0 0.0
    %1606 = vmatprep.subr.mxu0 0.0
    %1607 = vmatpush1.msra.mxu0 0.0
    %1608 = vmatprep.subr.mxu0 0.0
    %1609 = vmatpush1.msra.mxu0 0.0
    %1610 = vmatprep.subr.mxu0 0.0
    %1611 = vmatpush1.msra.mxu0 0.0
    %1612 = vmatprep.subr.mxu0 0.0
    %1613 = vmatpush1.msra.mxu0 0.0
    %1614 = vmatprep.subr.mxu0 0.0
    %1615 = vmatpush1.msra.mxu0 0.0
    %1616 = vmatprep.mubr.f32.mxu0 0.0
    %1617 = vmatmul.mubr.f32.gmra.mrb[0].mxu0 %v1550
    %v1618 = vpop.f32.mrb[0].mxu0
    %v1619 = vadd.f32 0.0, %v1618
    %v1620 = vpop.f32.mrb[0].mxu0
    %1621 = vdwg.mxu0
    %1622 = vmatprep.subr.mxu0 0.0
    %1623 = vmatpush1.msra.mxu0 %v1546
    %1624 = vmatprep.subr.mxu0 0.0
    %1625 = vmatpush1.msra.mxu0 %v1547
    %1626 = vmatprep.subr.mxu0 0.0
    %1627 = vmatpush1.msra.mxu0 %v1548
    %1628 = vmatprep.subr.mxu0 0.0
    %1629 = vmatpush1.msra.mxu0 0.0
    %1630 = vmatprep.subr.mxu0 0.0
    %1631 = vmatpush1.msra.mxu0 0.0
    %1632 = vmatprep.subr.mxu0 0.0
    %1633 = vmatpush1.msra.mxu0 0.0
    %1634 = vmatprep.subr.mxu0 0.0
    %1635 = vmatpush1.msra.mxu0 0.0
    %1636 = vmatprep.subr.mxu0 0.0
    %1637 = vmatpush1.msra.mxu0 0.0
    %1638 = vmatprep.subr.mxu0 0.0
    %1639 = vmatpush1.msra.mxu0 0.0
    %1640 = vmatprep.subr.mxu0 0.0
    %1641 = vmatpush1.msra.mxu0 0.0
    %1642 = vmatprep.subr.mxu0 0.0
    %1643 = vmatpush1.msra.mxu0 0.0
    %1644 = vmatprep.subr.mxu0 0.0
    %1645 = vmatpush1.msra.mxu0 0.0
    %1646 = vmatprep.subr.mxu0 0.0
    %1647 = vmatpush1.msra.mxu0 0.0
    %1648 = vmatprep.subr.mxu0 0.0
    %1649 = vmatpush1.msra.mxu0 0.0
    %1650 = vmatprep.subr.mxu0 0.0
    %1651 = vmatpush1.msra.mxu0 0.0
    %1652 = vmatprep.subr.mxu0 0.0
    %1653 = vmatpush1.msra.mxu0 0.0
    %1654 = vmatprep.subr.mxu0 0.0
    %1655 = vmatpush1.msra.mxu0 0.0
    %1656 = vmatprep.subr.mxu0 0.0
    %1657 = vmatpush1.msra.mxu0 0.0
    %1658 = vmatprep.subr.mxu0 0.0
    %1659 = vmatpush1.msra.mxu0 0.0
    %1660 = vmatprep.subr.mxu0 0.0
    %1661 = vmatpush1.msra.mxu0 0.0
    %1662 = vmatprep.subr.mxu0 0.0
    %1663 = vmatpush1.msra.mxu0 0.0
    %1664 = vmatprep.subr.mxu0 0.0
    %1665 = vmatpush1.msra.mxu0 0.0
    %1666 = vmatprep.subr.mxu0 0.0
    %1667 = vmatpush1.msra.mxu0 0.0
    %1668 = vmatprep.subr.mxu0 0.0
    %1669 = vmatpush1.msra.mxu0 0.0
    %1670 = vmatprep.subr.mxu0 0.0
    %1671 = vmatpush1.msra.mxu0 0.0
    %1672 = vmatprep.subr.mxu0 0.0
    %1673 = vmatpush1.msra.mxu0 0.0
    %1674 = vmatprep.subr.mxu0 0.0
    %1675 = vmatpush1.msra.mxu0 0.0
    %1676 = vmatprep.subr.mxu0 0.0
    %1677 = vmatpush1.msra.mxu0 0.0
    %1678 = vmatprep.subr.mxu0 0.0
    %1679 = vmatpush1.msra.mxu0 0.0
    %1680 = vmatprep.subr.mxu0 0.0
    %1681 = vmatpush1.msra.mxu0 0.0
    %1682 = vmatprep.subr.mxu0 0.0
    %1683 = vmatpush1.msra.mxu0 0.0
    %1684 = vmatprep.subr.mxu0 0.0
    %1685 = vmatpush1.msra.mxu0 0.0
    %1686 = vmatprep.mubr.f32.mxu0 0.0
    %1687 = vmatmul.mubr.f32.gmra.mrb[0].mxu0 %v1550
    %v1688 = vpop.f32.mrb[0].mxu0
    %v1689 = vadd.f32 0.0, %v1688
    %v1690 = vpop.f32.mrb[0].mxu0
    %1691 = vdwg.mxu0
    %1692 = vmatprep.subr.mxu0 0.0
    %1693 = vmatpush1.msra.mxu0 %v1619
    %1694 = vmatprep.subr.mxu0 0.0
    %1695 = vmatpush1.msra.mxu0 0.0
    %1696 = vmatprep.subr.mxu0 0.0
    %1697 = vmatpush1.msra.mxu0 0.0
    %1698 = vmatprep.subr.mxu0 0.0
    %1699 = vmatpush1.msra.mxu0 0.0
    %1700 = vmatprep.subr.mxu0 0.0
    %1701 = vmatpush1.msra.mxu0 0.0
    %1702 = vmatprep.subr.mxu0 0.0
    %1703 = vmatpush1.msra.mxu0 0.0
    %1704 = vmatprep.subr.mxu0 0.0
    %1705 = vmatpush1.msra.mxu0 0.0
    %1706 = vmatprep.subr.mxu0 0.0
    %1707 = vmatpush1.msra.mxu0 0.0
    %1708 = vmatprep.subr.mxu0 0.0
    %1709 = vmatpush1.msra.mxu0 0.0
    %1710 = vmatprep.subr.mxu0 0.0
    %1711 = vmatpush1.msra.mxu0 0.0
    %1712 = vmatprep.subr.mxu0 0.0
    %1713 = vmatpush1.msra.mxu0 0.0
    %1714 = vmatprep.subr.mxu0 0.0
    %1715 = vmatpush1.msra.mxu0 0.0
    %1716 = vmatprep.subr.mxu0 0.0
    %1717 = vmatpush1.msra.mxu0 0.0
    %1718 = vmatprep.subr.mxu0 0.0
    %1719 = vmatpush1.msra.mxu0 0.0
    %1720 = vmatprep.subr.mxu0 0.0
    %1721 = vmatpush1.msra.mxu0 0.0
    %1722 = vmatprep.subr.mxu0 0.0
    %1723 = vmatpush1.msra.mxu0 0.0
    %1724 = vmatprep.subr.mxu0 0.0
    %1725 = vmatpush1.msra.mxu0 0.0
    %1726 = vmatprep.subr.mxu0 0.0
    %1727 = vmatpush1.msra.mxu0 0.0
    %1728 = vmatprep.subr.mxu0 0.0
    %1729 = vmatpush1.msra.mxu0 0.0
    %1730 = vmatprep.subr.mxu0 0.0
    %1731 = vmatpush1.msra.mxu0 0.0
    %1732 = vmatprep.subr.mxu0 0.0
    %1733 = vmatpush1.msra.mxu0 0.0
    %1734 = vmatprep.subr.mxu0 0.0
    %1735 = vmatpush1.msra.mxu0 0.0
    %1736 = vmatprep.subr.mxu0 0.0
    %1737 = vmatpush1.msra.mxu0 0.0
    %1738 = vmatprep.subr.mxu0 0.0
    %1739 = vmatpush1.msra.mxu0 0.0
    %1740 = vmatprep.subr.mxu0 0.0
    %1741 = vmatpush1.msra.mxu0 0.0
    %1742 = vmatprep.subr.mxu0 0.0
    %1743 = vmatpush1.msra.mxu0 0.0
    %1744 = vmatprep.subr.mxu0 0.0
    %1745 = vmatpush1.msra.mxu0 0.0
    %1746 = vmatprep.subr.mxu0 0.0
    %1747 = vmatpush1.msra.mxu0 0.0
    %1748 = vmatprep.subr.mxu0 0.0
    %1749 = vmatpush1.msra.mxu0 0.0
    %1750 = vmatprep.subr.mxu0 0.0
    %1751 = vmatpush1.msra.mxu0 0.0
    %1752 = vmatprep.subr.mxu0 0.0
    %1753 = vmatpush1.msra.mxu0 0.0
    %1754 = vmatprep.subr.mxu0 0.0
    %1755 = vmatpush1.msra.mxu0 0.0
    %1756 = vmatprep.mubr.f32.mxu0 0.0
    %1757 = vmatmul.mubr.f32.gmra.mrb[0].mxu0 %v207
    %v1758 = vpop.f32.mrb[0].mxu0
    %v1759 = vadd.f32 0.0, %v1758
    %v1760 = vpop.f32.mrb[0].mxu0
    %1761 = vdwg.mxu0
    %v1763 = vsel %vm283, %v1759, 0
    %1765 = vmatprep.subr.mxu0 0.0
    %1766 = vmatpush1.msra.mxu0 %v1763
    %1767 = vmatprep.subr.mxu0 0.0
    %1768 = vmatpush1.msra.mxu0 0.0
    %1769 = vmatprep.subr.mxu0 0.0
    %1770 = vmatpush1.msra.mxu0 0.0
    %1771 = vmatprep.subr.mxu0 0.0
    %1772 = vmatpush1.msra.mxu0 0.0
    %1773 = vmatprep.subr.mxu0 0.0
    %1774 = vmatpush1.msra.mxu0 0.0
    %1775 = vmatprep.subr.mxu0 0.0
    %1776 = vmatpush1.msra.mxu0 0.0
    %1777 = vmatprep.subr.mxu0 0.0
    %1778 = vmatpush1.msra.mxu0 0.0
    %1779 = vmatprep.subr.mxu0 0.0
    %1780 = vmatpush1.msra.mxu0 0.0
    %1781 = vmatprep.subr.mxu0 0.0
    %1782 = vmatpush1.msra.mxu0 0.0
    %1783 = vmatprep.subr.mxu0 0.0
    %1784 = vmatpush1.msra.mxu0 0.0
    %1785 = vmatprep.subr.mxu0 0.0
    %1786 = vmatpush1.msra.mxu0 0.0
    %1787 = vmatprep.subr.mxu0 0.0
    %1788 = vmatpush1.msra.mxu0 0.0
    %1789 = vmatprep.subr.mxu0 0.0
    %1790 = vmatpush1.msra.mxu0 0.0
    %1791 = vmatprep.subr.mxu0 0.0
    %1792 = vmatpush1.msra.mxu0 0.0
    %1793 = vmatprep.subr.mxu0 0.0
    %1794 = vmatpush1.msra.mxu0 0.0
    %1795 = vmatprep.subr.mxu0 0.0
    %1796 = vmatpush1.msra.mxu0 0.0
    %1797 = vmatprep.subr.mxu0 0.0
    %1798 = vmatpush1.msra.mxu0 0.0
    %1799 = vmatprep.subr.mxu0 0.0
    %1800 = vmatpush1.msra.mxu0 0.0
    %1801 = vmatprep.subr.mxu0 0.0
    %1802 = vmatpush1.msra.mxu0 0.0
    %1803 = vmatprep.subr.mxu0 0.0
    %1804 = vmatpush1.msra.mxu0 0.0
    %1805 = vmatprep.subr.mxu0 0.0
    %1806 = vmatpush1.msra.mxu0 0.0
    %1807 = vmatprep.subr.mxu0 0.0
    %1808 = vmatpush1.msra.mxu0 0.0
    %1809 = vmatprep.subr.mxu0 0.0
    %1810 = vmatpush1.msra.mxu0 0.0
    %1811 = vmatprep.subr.mxu0 0.0
    %1812 = vmatpush1.msra.mxu0 0.0
    %1813 = vmatprep.subr.mxu0 0.0
    %1814 = vmatpush1.msra.mxu0 0.0
    %1815 = vmatprep.subr.mxu0 0.0
    %1816 = vmatpush1.msra.mxu0 0.0
    %1817 = vmatprep.subr.mxu0 0.0
    %1818 = vmatpush1.msra.mxu0 0.0
    %1819 = vmatprep.subr.mxu0 0.0
    %1820 = vmatpush1.msra.mxu0 0.0
    %1821 = vmatprep.subr.mxu0 0.0
    %1822 = vmatpush1.msra.mxu0 0.0
    %1823 = vmatprep.subr.mxu0 0.0
    %1824 = vmatpush1.msra.mxu0 0.0
    %1825 = vmatprep.subr.mxu0 0.0
    %1826 = vmatpush1.msra.mxu0 0.0
    %1827 = vmatprep.subr.mxu0 0.0
    %1828 = vmatpush1.msra.mxu0 0.0
    %1829 = vmatprep.mubr.f32.mxu0 0.0
    %1830 = vmatmul.mubr.f32.gmra.mrb[0].mxu0 %v281
    %v1831 = vpop.f32.mrb[0].mxu0
    %v1832 = vadd.f32 0.0, %v1831
    %v1833 = vpop.f32.mrb[0].mxu0
    %1834 = vdwg.mxu0
    %v1835 = vsub.f32 %v1619, %v1832
    %v1836 = vmul.f32 %v1835, %v1835
    %1837 = vmatprep.subr.mxu0 0.0
    %1838 = vmatpush1.msra.mxu0 %v1836
    %1839 = vmatprep.subr.mxu0 0.0
    %1840 = vmatpush1.msra.mxu0 0.0
    %1841 = vmatprep.subr.mxu0 0.0
    %1842 = vmatpush1.msra.mxu0 0.0
    %1843 = vmatprep.subr.mxu0 0.0
    %1844 = vmatpush1.msra.mxu0 0.0
    %1845 = vmatprep.subr.mxu0 0.0
    %1846 = vmatpush1.msra.mxu0 0.0
    %1847 = vmatprep.subr.mxu0 0.0
    %1848 = vmatpush1.msra.mxu0 0.0
    %1849 = vmatprep.subr.mxu0 0.0
    %1850 = vmatpush1.msra.mxu0 0.0
    %1851 = vmatprep.subr.mxu0 0.0
    %1852 = vmatpush1.msra.mxu0 0.0
    %1853 = vmatprep.subr.mxu0 0.0
    %1854 = vmatpush1.msra.mxu0 0.0
    %1855 = vmatprep.subr.mxu0 0.0
    %1856 = vmatpush1.msra.mxu0 0.0
    %1857 = vmatprep.subr.mxu0 0.0
    %1858 = vmatpush1.msra.mxu0 0.0
    %1859 = vmatprep.subr.mxu0 0.0
    %1860 = vmatpush1.msra.mxu0 0.0
    %1861 = vmatprep.subr.mxu0 0.0
    %1862 = vmatpush1.msra.mxu0 0.0
    %1863 = vmatprep.subr.mxu0 0.0
    %1864 = vmatpush1.msra.mxu0 0.0
    %1865 = vmatprep.subr.mxu0 0.0
    %1866 = vmatpush1.msra.mxu0 0.0
    %1867 = vmatprep.subr.mxu0 0.0
    %1868 = vmatpush1.msra.mxu0 0.0
    %1869 = vmatprep.subr.mxu0 0.0
    %1870 = vmatpush1.msra.mxu0 0.0
    %1871 = vmatprep.subr.mxu0 0.0
    %1872 = vmatpush1.msra.mxu0 0.0
    %1873 = vmatprep.subr.mxu0 0.0
    %1874 = vmatpush1.msra.mxu0 0.0
    %1875 = vmatprep.subr.mxu0 0.0
    %1876 = vmatpush1.msra.mxu0 0.0
    %1877 = vmatprep.subr.mxu0 0.0
    %1878 = vmatpush1.msra.mxu0 0.0
    %1879 = vmatprep.subr.mxu0 0.0
    %1880 = vmatpush1.msra.mxu0 0.0
    %1881 = vmatprep.subr.mxu0 0.0
    %1882 = vmatpush1.msra.mxu0 0.0
    %1883 = vmatprep.subr.mxu0 0.0
    %1884 = vmatpush1.msra.mxu0 0.0
    %1885 = vmatprep.subr.mxu0 0.0
    %1886 = vmatpush1.msra.mxu0 0.0
    %1887 = vmatprep.subr.mxu0 0.0
    %1888 = vmatpush1.msra.mxu0 0.0
    %1889 = vmatprep.subr.mxu0 0.0
    %1890 = vmatpush1.msra.mxu0 0.0
    %1891 = vmatprep.subr.mxu0 0.0
    %1892 = vmatpush1.msra.mxu0 0.0
    %1893 = vmatprep.subr.mxu0 0.0
    %1894 = vmatpush1.msra.mxu0 0.0
    %1895 = vmatprep.subr.mxu0 0.0
    %1896 = vmatpush1.msra.mxu0 0.0
    %1897 = vmatprep.subr.mxu0 0.0
    %1898 = vmatpush1.msra.mxu0 0.0
    %1899 = vmatprep.subr.mxu0 0.0
    %1900 = vmatpush1.msra.mxu0 0.0
    %1901 = vmatprep.mubr.f32.mxu0 0.0
    %1902 = vmatmul.mubr.f32.gmra.mrb[0].mxu0 %v207
    %v1903 = vpop.f32.mrb[0].mxu0
    %v1904 = vadd.f32 0.0, %v1903
    %v1905 = vpop.f32.mrb[0].mxu0
    %1906 = vdwg.mxu0
    %v1908 = vsel %vm283, %v1904, 0
    %1910 = vmatprep.subr.mxu0 0.0
    %1911 = vmatpush1.msra.mxu0 %v1908
    %1912 = vmatprep.subr.mxu0 0.0
    %1913 = vmatpush1.msra.mxu0 0.0
    %1914 = vmatprep.subr.mxu0 0.0
    %1915 = vmatpush1.msra.mxu0 0.0
    %1916 = vmatprep.subr.mxu0 0.0
    %1917 = vmatpush1.msra.mxu0 0.0
    %1918 = vmatprep.subr.mxu0 0.0
    %1919 = vmatpush1.msra.mxu0 0.0
    %1920 = vmatprep.subr.mxu0 0.0
    %1921 = vmatpush1.msra.mxu0 0.0
    %1922 = vmatprep.subr.mxu0 0.0
    %1923 = vmatpush1.msra.mxu0 0.0
    %1924 = vmatprep.subr.mxu0 0.0
    %1925 = vmatpush1.msra.mxu0 0.0
    %1926 = vmatprep.subr.mxu0 0.0
    %1927 = vmatpush1.msra.mxu0 0.0
    %1928 = vmatprep.subr.mxu0 0.0
    %1929 = vmatpush1.msra.mxu0 0.0
    %1930 = vmatprep.subr.mxu0 0.0
    %1931 = vmatpush1.msra.mxu0 0.0
    %1932 = vmatprep.subr.mxu0 0.0
    %1933 = vmatpush1.msra.mxu0 0.0
    %1934 = vmatprep.subr.mxu0 0.0
    %1935 = vmatpush1.msra.mxu0 0.0
    %1936 = vmatprep.subr.mxu0 0.0
    %1937 = vmatpush1.msra.mxu0 0.0
    %1938 = vmatprep.subr.mxu0 0.0
    %1939 = vmatpush1.msra.mxu0 0.0
    %1940 = vmatprep.subr.mxu0 0.0
    %1941 = vmatpush1.msra.mxu0 0.0
    %1942 = vmatprep.subr.mxu0 0.0
    %1943 = vmatpush1.msra.mxu0 0.0
    %1944 = vmatprep.subr.mxu0 0.0
    %1945 = vmatpush1.msra.mxu0 0.0
    %1946 = vmatprep.subr.mxu0 0.0
    %1947 = vmatpush1.msra.mxu0 0.0
    %1948 = vmatprep.subr.mxu0 0.0
    %1949 = vmatpush1.msra.mxu0 0.0
    %1950 = vmatprep.subr.mxu0 0.0
    %1951 = vmatpush1.msra.mxu0 0.0
    %1952 = vmatprep.subr.mxu0 0.0
    %1953 = vmatpush1.msra.mxu0 0.0
    %1954 = vmatprep.subr.mxu0 0.0
    %1955 = vmatpush1.msra.mxu0 0.0
    %1956 = vmatprep.subr.mxu0 0.0
    %1957 = vmatpush1.msra.mxu0 0.0
    %1958 = vmatprep.subr.mxu0 0.0
    %1959 = vmatpush1.msra.mxu0 0.0
    %1960 = vmatprep.subr.mxu0 0.0
    %1961 = vmatpush1.msra.mxu0 0.0
    %1962 = vmatprep.subr.mxu0 0.0
    %1963 = vmatpush1.msra.mxu0 0.0
    %1964 = vmatprep.subr.mxu0 0.0
    %1965 = vmatpush1.msra.mxu0 0.0
    %1966 = vmatprep.subr.mxu0 0.0
    %1967 = vmatpush1.msra.mxu0 0.0
    %1968 = vmatprep.subr.mxu0 0.0
    %1969 = vmatpush1.msra.mxu0 0.0
    %1970 = vmatprep.subr.mxu0 0.0
    %1971 = vmatpush1.msra.mxu0 0.0
    %1972 = vmatprep.subr.mxu0 0.0
    %1973 = vmatpush1.msra.mxu0 0.0
    %1974 = vmatprep.mubr.f32.mxu0 0.0
    %1975 = vmatmul.mubr.f32.gmra.mrb[0].mxu0 %v281
    %v1976 = vpop.f32.mrb[0].mxu0
    %v1977 = vadd.f32 1e-05, %v1976
    %v1978 = vpop.f32.mrb[0].mxu0
    %1979 = vdwg.mxu0
    %v1980 = vrsqrt.pop %v1977
    %v1981 = vmul.f32 %v1835, %v1980
    %1982 = vmatprep.subr.mxu0 0.0
    %1983 = vmatpush1.msra.mxu0 %v1689
    %1984 = vmatprep.subr.mxu0 0.0
    %1985 = vmatpush1.msra.mxu0 0.0
    %1986 = vmatprep.subr.mxu0 0.0
    %1987 = vmatpush1.msra.mxu0 0.0
    %1988 = vmatprep.subr.mxu0 0.0
    %1989 = vmatpush1.msra.mxu0 0.0
    %1990 = vmatprep.subr.mxu0 0.0
    %1991 = vmatpush1.msra.mxu0 0.0
    %1992 = vmatprep.subr.mxu0 0.0
    %1993 = vmatpush1.msra.mxu0 0.0
    %1994 = vmatprep.subr.mxu0 0.0
    %1995 = vmatpush1.msra.mxu0 0.0
    %1996 = vmatprep.subr.mxu0 0.0
    %1997 = vmatpush1.msra.mxu0 0.0
    %1998 = vmatprep.subr.mxu0 0.0
    %1999 = vmatpush1.msra.mxu0 0.0
    %2000 = vmatprep.subr.mxu0 0.0
    %2001 = vmatpush1.msra.mxu0 0.0
    %2002 = vmatprep.subr.mxu0 0.0
    %2003 = vmatpush1.msra.mxu0 0.0
    %2004 = vmatprep.subr.mxu0 0.0
    %2005 = vmatpush1.msra.mxu0 0.0
    %2006 = vmatprep.subr.mxu0 0.0
    %2007 = vmatpush1.msra.mxu0 0.0
    %2008 = vmatprep.subr.mxu0 0.0
    %2009 = vmatpush1.msra.mxu0 0.0
    %2010 = vmatprep.subr.mxu0 0.0
    %2011 = vmatpush1.msra.mxu0 0.0
    %2012 = vmatprep.subr.mxu0 0.0
    %2013 = vmatpush1.msra.mxu0 0.0
    %2014 = vmatprep.subr.mxu0 0.0
    %2015 = vmatpush1.msra.mxu0 0.0
    %2016 = vmatprep.subr.mxu0 0.0
    %2017 = vmatpush1.msra.mxu0 0.0
    %2018 = vmatprep.subr.mxu0 0.0
    %2019 = vmatpush1.msra.mxu0 0.0
    %2020 = vmatprep.subr.mxu0 0.0
    %2021 = vmatpush1.msra.mxu0 0.0
    %2022 = vmatprep.subr.mxu0 0.0
    %2023 = vmatpush1.msra.mxu0 0.0
    %2024 = vmatprep.subr.mxu0 0.0
    %2025 = vmatpush1.msra.mxu0 0.0
    %2026 = vmatprep.subr.mxu0 0.0
    %2027 = vmatpush1.msra.mxu0 0.0
    %2028 = vmatprep.subr.mxu0 0.0
    %2029 = vmatpush1.msra.mxu0 0.0
    %2030 = vmatprep.subr.mxu0 0.0
    %2031 = vmatpush1.msra.mxu0 0.0
    %2032 = vmatprep.subr.mxu0 0.0
    %2033 = vmatpush1.msra.mxu0 0.0
    %2034 = vmatprep.subr.mxu0 0.0
    %2035 = vmatpush1.msra.mxu0 0.0
    %2036 = vmatprep.subr.mxu0 0.0
    %2037 = vmatpush1.msra.mxu0 0.0
    %2038 = vmatprep.subr.mxu0 0.0
    %2039 = vmatpush1.msra.mxu0 0.0
    %2040 = vmatprep.subr.mxu0 0.0
    %2041 = vmatpush1.msra.mxu0 0.0
    %2042 = vmatprep.subr.mxu0 0.0
    %2043 = vmatpush1.msra.mxu0 0.0
    %2044 = vmatprep.subr.mxu0 0.0
    %2045 = vmatpush1.msra.mxu0 0.0
    %2046 = vmatprep.mubr.f32.mxu0 0.0
    %2047 = vmatmul.mubr.f32.gmra.mrb[0].mxu0 %v207
    %v2048 = vpop.f32.mrb[0].mxu0
    %v2049 = vadd.f32 0.0, %v2048
    %v2050 = vpop.f32.mrb[0].mxu0
    %2051 = vdwg.mxu0
    %v2053 = vsel %vm283, %v2049, 0
    %2055 = vmatprep.subr.mxu0 0.0
    %2056 = vmatpush1.msra.mxu0 %v2053
    %2057 = vmatprep.subr.mxu0 0.0
    %2058 = vmatpush1.msra.mxu0 0.0
    %2059 = vmatprep.subr.mxu0 0.0
    %2060 = vmatpush1.msra.mxu0 0.0
    %2061 = vmatprep.subr.mxu0 0.0
    %2062 = vmatpush1.msra.mxu0 0.0
    %2063 = vmatprep.subr.mxu0 0.0
    %2064 = vmatpush1.msra.mxu0 0.0
    %2065 = vmatprep.subr.mxu0 0.0
    %2066 = vmatpush1.msra.mxu0 0.0
    %2067 = vmatprep.subr.mxu0 0.0
    %2068 = vmatpush1.msra.mxu0 0.0
    %2069 = vmatprep.subr.mxu0 0.0
    %2070 = vmatpush1.msra.mxu0 0.0
    %2071 = vmatprep.subr.mxu0 0.0
    %2072 = vmatpush1.msra.mxu0 0.0
    %2073 = vmatprep.subr.mxu0 0.0
    %2074 = vmatpush1.msra.mxu0 0.0
    %2075 = vmatprep.subr.mxu0 0.0
    %2076 = vmatpush1.msra.mxu0 0.0
    %2077 = vmatprep.subr.mxu0 0.0
    %2078 = vmatpush1.msra.mxu0 0.0
    %2079 = vmatprep.subr.mxu0 0.0
    %2080 = vmatpush1.msra.mxu0 0.0
    %2081 = vmatprep.subr.mxu0 0.0
    %2082 = vmatpush1.msra.mxu0 0.0
    %2083 = vmatprep.subr.mxu0 0.0
    %2084 = vmatpush1.msra.mxu0 0.0
    %2085 = vmatprep.subr.mxu0 0.0
    %2086 = vmatpush1.msra.mxu0 0.0
    %2087 = vmatprep.subr.mxu0 0.0
    %2088 = vmatpush1.msra.mxu0 0.0
    %2089 = vmatprep.subr.mxu0 0.0
    %2090 = vmatpush1.msra.mxu0 0.0
    %2091 = vmatprep.subr.mxu0 0.0
    %2092 = vmatpush1.msra.mxu0 0.0
    %2093 = vmatprep.subr.mxu0 0.0
    %2094 = vmatpush1.msra.mxu0 0.0
    %2095 = vmatprep.subr.mxu0 0.0
    %2096 = vmatpush1.msra.mxu0 0.0
    %2097 = vmatprep.subr.mxu0 0.0
    %2098 = vmatpush1.msra.mxu0 0.0
    %2099 = vmatprep.subr.mxu0 0.0
    %2100 = vmatpush1.msra.mxu0 0.0
    %2101 = vmatprep.subr.mxu0 0.0
    %2102 = vmatpush1.msra.mxu0 0.0
    %2103 = vmatprep.subr.mxu0 0.0
    %2104 = vmatpush1.msra.mxu0 0.0
    %2105 = vmatprep.subr.mxu0 0.0
    %2106 = vmatpush1.msra.mxu0 0.0
    %2107 = vmatprep.subr.mxu0 0.0
    %2108 = vmatpush1.msra.mxu0 0.0
    %2109 = vmatprep.subr.mxu0 0.0
    %2110 = vmatpush1.msra.mxu0 0.0
    %2111 = vmatprep.subr.mxu0 0.0
    %2112 = vmatpush1.msra.mxu0 0.0
    %2113 = vmatprep.subr.mxu0 0.0
    %2114 = vmatpush1.msra.mxu0 0.0
    %2115 = vmatprep.subr.mxu0 0.0
    %2116 = vmatpush1.msra.mxu0 0.0
    %2117 = vmatprep.subr.mxu0 0.0
    %2118 = vmatpush1.msra.mxu0 0.0
    %2119 = vmatprep.mubr.f32.mxu0 0.0
    %2120 = vmatmul.mubr.f32.gmra.mrb[0].mxu0 %v281
    %v2121 = vpop.f32.mrb[0].mxu0
    %v2122 = vadd.f32 0.0, %v2121
    %v2123 = vpop.f32.mrb[0].mxu0
    %2124 = vdwg.mxu0
    %v2125 = vsub.f32 %v1689, %v2122
    %v2126 = vmul.f32 %v2125, %v2125
    %2127 = vmatprep.subr.mxu0 0.0
    %2128 = vmatpush1.msra.mxu0 %v2126
    %2129 = vmatprep.subr.mxu0 0.0
    %2130 = vmatpush1.msra.mxu0 0.0
    %2131 = vmatprep.subr.mxu0 0.0
    %2132 = vmatpush1.msra.mxu0 0.0
    %2133 = vmatprep.subr.mxu0 0.0
    %2134 = vmatpush1.msra.mxu0 0.0
    %2135 = vmatprep.subr.mxu0 0.0
    %2136 = vmatpush1.msra.mxu0 0.0
    %2137 = vmatprep.subr.mxu0 0.0
    %2138 = vmatpush1.msra.mxu0 0.0
    %2139 = vmatprep.subr.mxu0 0.0
    %2140 = vmatpush1.msra.mxu0 0.0
    %2141 = vmatprep.subr.mxu0 0.0
    %2142 = vmatpush1.msra.mxu0 0.0
    %2143 = vmatprep.subr.mxu0 0.0
    %2144 = vmatpush1.msra.mxu0 0.0
    %2145 = vmatprep.subr.mxu0 0.0
    %2146 = vmatpush1.msra.mxu0 0.0
    %2147 = vmatprep.subr.mxu0 0.0
    %2148 = vmatpush1.msra.mxu0 0.0
    %2149 = vmatprep.subr.mxu0 0.0
    %2150 = vmatpush1.msra.mxu0 0.0
    %2151 = vmatprep.subr.mxu0 0.0
    %2152 = vmatpush1.msra.mxu0 0.0
    %2153 = vmatprep.subr.mxu0 0.0
    %2154 = vmatpush1.msra.mxu0 0.0
    %2155 = vmatprep.subr.mxu0 0.0
    %2156 = vmatpush1.msra.mxu0 0.0
    %2157 = vmatprep.subr.mxu0 0.0
    %2158 = vmatpush1.msra.mxu0 0.0
    %2159 = vmatprep.subr.mxu0 0.0
    %2160 = vmatpush1.msra.mxu0 0.0
    %2161 = vmatprep.subr.mxu0 0.0
    %2162 = vmatpush1.msra.mxu0 0.0
    %2163 = vmatprep.subr.mxu0 0.0
    %2164 = vmatpush1.msra.mxu0 0.0
    %2165 = vmatprep.subr.mxu0 0.0
    %2166 = vmatpush1.msra.mxu0 0.0
    %2167 = vmatprep.subr.mxu0 0.0
    %2168 = vmatpush1.msra.mxu0 0.0
    %2169 = vmatprep.subr.mxu0 0.0
    %2170 = vmatpush1.msra.mxu0 0.0
    %2171 = vmatprep.subr.mxu0 0.0
    %2172 = vmatpush1.msra.mxu0 0.0
    %2173 = vmatprep.subr.mxu0 0.0
    %2174 = vmatpush1.msra.mxu0 0.0
    %2175 = vmatprep.subr.mxu0 0.0
    %2176 = vmatpush1.msra.mxu0 0.0
    %2177 = vmatprep.subr.mxu0 0.0
    %2178 = vmatpush1.msra.mxu0 0.0
    %2179 = vmatprep.subr.mxu0 0.0
    %2180 = vmatpush1.msra.mxu0 0.0
    %2181 = vmatprep.subr.mxu0 0.0
    %2182 = vmatpush1.msra.mxu0 0.0
    %2183 = vmatprep.subr.mxu0 0.0
    %2184 = vmatpush1.msra.mxu0 0.0
    %2185 = vmatprep.subr.mxu0 0.0
    %2186 = vmatpush1.msra.mxu0 0.0
    %2187 = vmatprep.subr.mxu0 0.0
    %2188 = vmatpush1.msra.mxu0 0.0
    %2189 = vmatprep.subr.mxu0 0.0
    %2190 = vmatpush1.msra.mxu0 0.0
    %2191 = vmatprep.mubr.f32.mxu0 0.0
    %2192 = vmatmul.mubr.f32.gmra.mrb[0].mxu0 %v207
    %v2193 = vpop.f32.mrb[0].mxu0
    %v2194 = vadd.f32 0.0, %v2193
    %v2195 = vpop.f32.mrb[0].mxu0
    %2196 = vdwg.mxu0
    %v2198 = vsel %vm283, %v2194, 0
    %2200 = vmatprep.subr.mxu0 0.0
    %2201 = vmatpush1.msra.mxu0 %v2198
    %2202 = vmatprep.subr.mxu0 0.0
    %2203 = vmatpush1.msra.mxu0 0.0
    %2204 = vmatprep.subr.mxu0 0.0
    %2205 = vmatpush1.msra.mxu0 0.0
    %2206 = vmatprep.subr.mxu0 0.0
    %2207 = vmatpush1.msra.mxu0 0.0
    %2208 = vmatprep.subr.mxu0 0.0
    %2209 = vmatpush1.msra.mxu0 0.0
    %2210 = vmatprep.subr.mxu0 0.0
    %2211 = vmatpush1.msra.mxu0 0.0
    %2212 = vmatprep.subr.mxu0 0.0
    %2213 = vmatpush1.msra.mxu0 0.0
    %2214 = vmatprep.subr.mxu0 0.0
    %2215 = vmatpush1.msra.mxu0 0.0
    %2216 = vmatprep.subr.mxu0 0.0
    %2217 = vmatpush1.msra.mxu0 0.0
    %2218 = vmatprep.subr.mxu0 0.0
    %2219 = vmatpush1.msra.mxu0 0.0
    %2220 = vmatprep.subr.mxu0 0.0
    %2221 = vmatpush1.msra.mxu0 0.0
    %2222 = vmatprep.subr.mxu0 0.0
    %2223 = vmatpush1.msra.mxu0 0.0
    %2224 = vmatprep.subr.mxu0 0.0
    %2225 = vmatpush1.msra.mxu0 0.0
    %2226 = vmatprep.subr.mxu0 0.0
    %2227 = vmatpush1.msra.mxu0 0.0
    %2228 = vmatprep.subr.mxu0 0.0
    %2229 = vmatpush1.msra.mxu0 0.0
    %2230 = vmatprep.subr.mxu0 0.0
    %2231 = vmatpush1.msra.mxu0 0.0
    %2232 = vmatprep.subr.mxu0 0.0
    %2233 = vmatpush1.msra.mxu0 0.0
    %2234 = vmatprep.subr.mxu0 0.0
    %2235 = vmatpush1.msra.mxu0 0.0
    %2236 = vmatprep.subr.mxu0 0.0
    %2237 = vmatpush1.msra.mxu0 0.0
    %2238 = vmatprep.subr.mxu0 0.0
    %2239 = vmatpush1.msra.mxu0 0.0
    %2240 = vmatprep.subr.mxu0 0.0
    %2241 = vmatpush1.msra.mxu0 0.0
    %2242 = vmatprep.subr.mxu0 0.0
    %2243 = vmatpush1.msra.mxu0 0.0
    %2244 = vmatprep.subr.mxu0 0.0
    %2245 = vmatpush1.msra.mxu0 0.0
    %2246 = vmatprep.subr.mxu0 0.0
    %2247 = vmatpush1.msra.mxu0 0.0
    %2248 = vmatprep.subr.mxu0 0.0
    %2249 = vmatpush1.msra.mxu0 0.0
    %2250 = vmatprep.subr.mxu0 0.0
    %2251 = vmatpush1.msra.mxu0 0.0
    %2252 = vmatprep.subr.mxu0 0.0
    %2253 = vmatpush1.msra.mxu0 0.0
    %2254 = vmatprep.subr.mxu0 0.0
    %2255 = vmatpush1.msra.mxu0 0.0
    %2256 = vmatprep.subr.mxu0 0.0
    %2257 = vmatpush1.msra.mxu0 0.0
    %2258 = vmatprep.subr.mxu0 0.0
    %2259 = vmatpush1.msra.mxu0 0.0
    %2260 = vmatprep.subr.mxu0 0.0
    %2261 = vmatpush1.msra.mxu0 0.0
    %2262 = vmatprep.subr.mxu0 0.0
    %2263 = vmatpush1.msra.mxu0 0.0
    %2264 = vmatprep.mubr.f32.mxu0 0.0
    %2265 = vmatmul.mubr.f32.gmra.mrb[0].mxu0 %v281
    %v2266 = vpop.f32.mrb[0].mxu0
    %v2267 = vadd.f32 1e-05, %v2266
    %v2268 = vpop.f32.mrb[0].mxu0
    %2269 = vdwg.mxu0
    %v2270 = vrsqrt.pop %v2267
    %v2271 = vmul.f32 %v2125, %v2270
    %v2272 = vxor.u32 %v2271, 2147483648
    %v2273 = vmul.f32 %v2272, 1.442695
    %v2274 = vpow.pop %v2273
    %v2275 = vadd.f32 %v2274, 1.0
    %v2276 = vrcp.pop %v2275
    %v2277 = vmul.f32 1.0, %v2276
    %v2278 = vmul.f32 %v1981, %v2277
    %v2279 = vadd.f32 %v1540, %v2278
    %v2280 = vmul.f32 %v2279, 0.70710677
    %s2281 = scalar_lea.vmem [#allocation2], 72
    %v2282 = vld [vmem:[%s2281] sm:$0xff]
    %v2283 = vld [vmem:[%s2281 + $0x8] sm:$0xff]
    %v2284 = vld [vmem:[%s2281 + $0x10] sm:$0xff]
    %s2285 = scalar_lea.vmem [#allocation5], 72
    %v2286 = vld [vmem:[%s2285] sm:$0xff]
    %v2287 = vld [vmem:[%s2285 + $0x8] sm:$0xff]
    %v2288 = vld [vmem:[%s2285 + $0x10] sm:$0xff]
    %v2290 = vsel %vm61, %v2280, 0
    %2292 = vmatprep.subr.mxu0 0.0
    %2293 = vmatpush1.msra.mxu0 %v2282
    %2294 = vmatprep.subr.mxu0 0.0
    %2295 = vmatpush1.msra.mxu0 %v2283
    %2296 = vmatprep.subr.mxu0 0.0
    %2297 = vmatpush1.msra.mxu0 %v2284
    %2298 = vmatprep.subr.mxu0 0.0
    %2299 = vmatpush1.msra.mxu0 0.0
    %2300 = vmatprep.subr.mxu0 0.0
    %2301 = vmatpush1.msra.mxu0 0.0
    %2302 = vmatprep.subr.mxu0 0.0
    %2303 = vmatpush1.msra.mxu0 0.0
    %2304 = vmatprep.subr.mxu0 0.0
    %2305 = vmatpush1.msra.mxu0 0.0
    %2306 = vmatprep.subr.mxu0 0.0
    %2307 = vmatpush1.msra.mxu0 0.0
    %2308 = vmatprep.subr.mxu0 0.0
    %2309 = vmatpush1.msra.mxu0 0.0
    %2310 = vmatprep.subr.mxu0 0.0
    %2311 = vmatpush1.msra.mxu0 0.0
    %2312 = vmatprep.subr.mxu0 0.0
    %2313 = vmatpush1.msra.mxu0 0.0
    %2314 = vmatprep.subr.mxu0 0.0
    %2315 = vmatpush1.msra.mxu0 0.0
    %2316 = vmatprep.subr.mxu0 0.0
    %2317 = vmatpush1.msra.mxu0 0.0
    %2318 = vmatprep.subr.mxu0 0.0
    %2319 = vmatpush1.msra.mxu0 0.0
    %2320 = vmatprep.subr.mxu0 0.0
    %2321 = vmatpush1.msra.mxu0 0.0
    %2322 = vmatprep.subr.mxu0 0.0
    %2323 = vmatpush1.msra.mxu0 0.0
    %2324 = vmatprep.subr.mxu0 0.0
    %2325 = vmatpush1.msra.mxu0 0.0
    %2326 = vmatprep.subr.mxu0 0.0
    %2327 = vmatpush1.msra.mxu0 0.0
    %2328 = vmatprep.subr.mxu0 0.0
    %2329 = vmatpush1.msra.mxu0 0.0
    %2330 = vmatprep.subr.mxu0 0.0
    %2331 = vmatpush1.msra.mxu0 0.0
    %2332 = vmatprep.subr.mxu0 0.0
    %2333 = vmatpush1.msra.mxu0 0.0
    %2334 = vmatprep.subr.mxu0 0.0
    %2335 = vmatpush1.msra.mxu0 0.0
    %2336 = vmatprep.subr.mxu0 0.0
    %2337 = vmatpush1.msra.mxu0 0.0
    %2338 = vmatprep.subr.mxu0 0.0
    %2339 = vmatpush1.msra.mxu0 0.0
    %2340 = vmatprep.subr.mxu0 0.0
    %2341 = vmatpush1.msra.mxu0 0.0
    %2342 = vmatprep.subr.mxu0 0.0
    %2343 = vmatpush1.msra.mxu0 0.0
    %2344 = vmatprep.subr.mxu0 0.0
    %2345 = vmatpush1.msra.mxu0 0.0
    %2346 = vmatprep.subr.mxu0 0.0
    %2347 = vmatpush1.msra.mxu0 0.0
    %2348 = vmatprep.subr.mxu0 0.0
    %2349 = vmatpush1.msra.mxu0 0.0
    %2350 = vmatprep.subr.mxu0 0.0
    %2351 = vmatpush1.msra.mxu0 0.0
    %2352 = vmatprep.subr.mxu0 0.0
    %2353 = vmatpush1.msra.mxu0 0.0
    %2354 = vmatprep.subr.mxu0 0.0
    %2355 = vmatpush1.msra.mxu0 0.0
    %2356 = vmatprep.mubr.f32.mxu0 0.0
    %2357 = vmatmul.mubr.f32.gmra.mrb[0].mxu0 %v2290
    %v2358 = vpop.f32.mrb[0].mxu0
    %v2359 = vadd.f32 0.0, %v2358
    %v2360 = vpop.f32.mrb[0].mxu0
    %2361 = vdwg.mxu0
    %2362 = vmatprep.subr.mxu0 0.0
    %2363 = vmatpush1.msra.mxu0 %v2286
    %2364 = vmatprep.subr.mxu0 0.0
    %2365 = vmatpush1.msra.mxu0 %v2287
    %2366 = vmatprep.subr.mxu0 0.0
    %2367 = vmatpush1.msra.mxu0 %v2288
    %2368 = vmatprep.subr.mxu0 0.0
    %2369 = vmatpush1.msra.mxu0 0.0
    %2370 = vmatprep.subr.mxu0 0.0
    %2371 = vmatpush1.msra.mxu0 0.0
    %2372 = vmatprep.subr.mxu0 0.0
    %2373 = vmatpush1.msra.mxu0 0.0
    %2374 = vmatprep.subr.mxu0 0.0
    %2375 = vmatpush1.msra.mxu0 0.0
    %2376 = vmatprep.subr.mxu0 0.0
    %2377 = vmatpush1.msra.mxu0 0.0
    %2378 = vmatprep.subr.mxu0 0.0
    %2379 = vmatpush1.msra.mxu0 0.0
    %2380 = vmatprep.subr.mxu0 0.0
    %2381 = vmatpush1.msra.mxu0 0.0
    %2382 = vmatprep.subr.mxu0 0.0
    %2383 = vmatpush1.msra.mxu0 0.0
    %2384 = vmatprep.subr.mxu0 0.0
    %2385 = vmatpush1.msra.mxu0 0.0
    %2386 = vmatprep.subr.mxu0 0.0
    %2387 = vmatpush1.msra.mxu0 0.0
    %2388 = vmatprep.subr.mxu0 0.0
    %2389 = vmatpush1.msra.mxu0 0.0
    %2390 = vmatprep.subr.mxu0 0.0
    %2391 = vmatpush1.msra.mxu0 0.0
    %2392 = vmatprep.subr.mxu0 0.0
    %2393 = vmatpush1.msra.mxu0 0.0
    %2394 = vmatprep.subr.mxu0 0.0
    %2395 = vmatpush1.msra.mxu0 0.0
    %2396 = vmatprep.subr.mxu0 0.0
    %2397 = vmatpush1.msra.mxu0 0.0
    %2398 = vmatprep.subr.mxu0 0.0
    %2399 = vmatpush1.msra.mxu0 0.0
    %2400 = vmatprep.subr.mxu0 0.0
    %2401 = vmatpush1.msra.mxu0 0.0
    %2402 = vmatprep.subr.mxu0 0.0
    %2403 = vmatpush1.msra.mxu0 0.0
    %2404 = vmatprep.subr.mxu0 0.0
    %2405 = vmatpush1.msra.mxu0 0.0
    %2406 = vmatprep.subr.mxu0 0.0
    %2407 = vmatpush1.msra.mxu0 0.0
    %2408 = vmatprep.subr.mxu0 0.0
    %2409 = vmatpush1.msra.mxu0 0.0
    %2410 = vmatprep.subr.mxu0 0.0
    %2411 = vmatpush1.msra.mxu0 0.0
    %2412 = vmatprep.subr.mxu0 0.0
    %2413 = vmatpush1.msra.mxu0 0.0
    %2414 = vmatprep.subr.mxu0 0.0
    %2415 = vmatpush1.msra.mxu0 0.0
    %2416 = vmatprep.subr.mxu0 0.0
    %2417 = vmatpush1.msra.mxu0 0.0
    %2418 = vmatprep.subr.mxu0 0.0
    %2419 = vmatpush1.msra.mxu0 0.0
    %2420 = vmatprep.subr.mxu0 0.0
    %2421 = vmatpush1.msra.mxu0 0.0
    %2422 = vmatprep.subr.mxu0 0.0
    %2423 = vmatpush1.msra.mxu0 0.0
    %2424 = vmatprep.subr.mxu0 0.0
    %2425 = vmatpush1.msra.mxu0 0.0
    %2426 = vmatprep.mubr.f32.mxu0 0.0
    %2427 = vmatmul.mubr.f32.gmra.mrb[0].mxu0 %v2290
    %v2428 = vpop.f32.mrb[0].mxu0
    %v2429 = vadd.f32 0.0, %v2428
    %v2430 = vpop.f32.mrb[0].mxu0
    %2431 = vdwg.mxu0
    %2432 = vmatprep.subr.mxu0 0.0
    %2433 = vmatpush1.msra.mxu0 %v2359
    %2434 = vmatprep.subr.mxu0 0.0
    %2435 = vmatpush1.msra.mxu0 0.0
    %2436 = vmatprep.subr.mxu0 0.0
    %2437 = vmatpush1.msra.mxu0 0.0
    %2438 = vmatprep.subr.mxu0 0.0
    %2439 = vmatpush1.msra.mxu0 0.0
    %2440 = vmatprep.subr.mxu0 0.0
    %2441 = vmatpush1.msra.mxu0 0.0
    %2442 = vmatprep.subr.mxu0 0.0
    %2443 = vmatpush1.msra.mxu0 0.0
    %2444 = vmatprep.subr.mxu0 0.0
    %2445 = vmatpush1.msra.mxu0 0.0
    %2446 = vmatprep.subr.mxu0 0.0
    %2447 = vmatpush1.msra.mxu0 0.0
    %2448 = vmatprep.subr.mxu0 0.0
    %2449 = vmatpush1.msra.mxu0 0.0
    %2450 = vmatprep.subr.mxu0 0.0
    %2451 = vmatpush1.msra.mxu0 0.0
    %2452 = vmatprep.subr.mxu0 0.0
    %2453 = vmatpush1.msra.mxu0 0.0
    %2454 = vmatprep.subr.mxu0 0.0
    %2455 = vmatpush1.msra.mxu0 0.0
    %2456 = vmatprep.subr.mxu0 0.0
    %2457 = vmatpush1.msra.mxu0 0.0
    %2458 = vmatprep.subr.mxu0 0.0
    %2459 = vmatpush1.msra.mxu0 0.0
    %2460 = vmatprep.subr.mxu0 0.0
    %2461 = vmatpush1.msra.mxu0 0.0
    %2462 = vmatprep.subr.mxu0 0.0
    %2463 = vmatpush1.msra.mxu0 0.0
    %2464 = vmatprep.subr.mxu0 0.0
    %2465 = vmatpush1.msra.mxu0 0.0
    %2466 = vmatprep.subr.mxu0 0.0
    %2467 = vmatpush1.msra.mxu0 0.0
    %2468 = vmatprep.subr.mxu0 0.0
    %2469 = vmatpush1.msra.mxu0 0.0
    %2470 = vmatprep.subr.mxu0 0.0
    %2471 = vmatpush1.msra.mxu0 0.0
    %2472 = vmatprep.subr.mxu0 0.0
    %2473 = vmatpush1.msra.mxu0 0.0
    %2474 = vmatprep.subr.mxu0 0.0
    %2475 = vmatpush1.msra.mxu0 0.0
    %2476 = vmatprep.subr.mxu0 0.0
    %2477 = vmatpush1.msra.mxu0 0.0
    %2478 = vmatprep.subr.mxu0 0.0
    %2479 = vmatpush1.msra.mxu0 0.0
    %2480 = vmatprep.subr.mxu0 0.0
    %2481 = vmatpush1.msra.mxu0 0.0
    %2482 = vmatprep.subr.mxu0 0.0
    %2483 = vmatpush1.msra.mxu0 0.0
    %2484 = vmatprep.subr.mxu0 0.0
    %2485 = vmatpush1.msra.mxu0 0.0
    %2486 = vmatprep.subr.mxu0 0.0
    %2487 = vmatpush1.msra.mxu0 0.0
    %2488 = vmatprep.subr.mxu0 0.0
    %2489 = vmatpush1.msra.mxu0 0.0
    %2490 = vmatprep.subr.mxu0 0.0
    %2491 = vmatpush1.msra.mxu0 0.0
    %2492 = vmatprep.subr.mxu0 0.0
    %2493 = vmatpush1.msra.mxu0 0.0
    %2494 = vmatprep.subr.mxu0 0.0
    %2495 = vmatpush1.msra.mxu0 0.0
    %2496 = vmatprep.mubr.f32.mxu0 0.0
    %2497 = vmatmul.mubr.f32.gmra.mrb[0].mxu0 %v207
    %v2498 = vpop.f32.mrb[0].mxu0
    %v2499 = vadd.f32 0.0, %v2498
    %v2500 = vpop.f32.mrb[0].mxu0
    %2501 = vdwg.mxu0
    %v2503 = vsel %vm283, %v2499, 0
    %2505 = vmatprep.subr.mxu0 0.0
    %2506 = vmatpush1.msra.mxu0 %v2503
    %2507 = vmatprep.subr.mxu0 0.0
    %2508 = vmatpush1.msra.mxu0 0.0
    %2509 = vmatprep.subr.mxu0 0.0
    %2510 = vmatpush1.msra.mxu0 0.0
    %2511 = vmatprep.subr.mxu0 0.0
    %2512 = vmatpush1.msra.mxu0 0.0
    %2513 = vmatprep.subr.mxu0 0.0
    %2514 = vmatpush1.msra.mxu0 0.0
    %2515 = vmatprep.subr.mxu0 0.0
    %2516 = vmatpush1.msra.mxu0 0.0
    %2517 = vmatprep.subr.mxu0 0.0
    %2518 = vmatpush1.msra.mxu0 0.0
    %2519 = vmatprep.subr.mxu0 0.0
    %2520 = vmatpush1.msra.mxu0 0.0
    %2521 = vmatprep.subr.mxu0 0.0
    %2522 = vmatpush1.msra.mxu0 0.0
    %2523 = vmatprep.subr.mxu0 0.0
    %2524 = vmatpush1.msra.mxu0 0.0
    %2525 = vmatprep.subr.mxu0 0.0
    %2526 = vmatpush1.msra.mxu0 0.0
    %2527 = vmatprep.subr.mxu0 0.0
    %2528 = vmatpush1.msra.mxu0 0.0
    %2529 = vmatprep.subr.mxu0 0.0
    %2530 = vmatpush1.msra.mxu0 0.0
    %2531 = vmatprep.subr.mxu0 0.0
    %2532 = vmatpush1.msra.mxu0 0.0
    %2533 = vmatprep.subr.mxu0 0.0
    %2534 = vmatpush1.msra.mxu0 0.0
    %2535 = vmatprep.subr.mxu0 0.0
    %2536 = vmatpush1.msra.mxu0 0.0
    %2537 = vmatprep.subr.mxu0 0.0
    %2538 = vmatpush1.msra.mxu0 0.0
    %2539 = vmatprep.subr.mxu0 0.0
    %2540 = vmatpush1.msra.mxu0 0.0
    %2541 = vmatprep.subr.mxu0 0.0
    %2542 = vmatpush1.msra.mxu0 0.0
    %2543 = vmatprep.subr.mxu0 0.0
    %2544 = vmatpush1.msra.mxu0 0.0
    %2545 = vmatprep.subr.mxu0 0.0
    %2546 = vmatpush1.msra.mxu0 0.0
    %2547 = vmatprep.subr.mxu0 0.0
    %2548 = vmatpush1.msra.mxu0 0.0
    %2549 = vmatprep.subr.mxu0 0.0
    %2550 = vmatpush1.msra.mxu0 0.0
    %2551 = vmatprep.subr.mxu0 0.0
    %2552 = vmatpush1.msra.mxu0 0.0
    %2553 = vmatprep.subr.mxu0 0.0
    %2554 = vmatpush1.msra.mxu0 0.0
    %2555 = vmatprep.subr.mxu0 0.0
    %2556 = vmatpush1.msra.mxu0 0.0
    %2557 = vmatprep.subr.mxu0 0.0
    %2558 = vmatpush1.msra.mxu0 0.0
    %2559 = vmatprep.subr.mxu0 0.0
    %2560 = vmatpush1.msra.mxu0 0.0
    %2561 = vmatprep.subr.mxu0 0.0
    %2562 = vmatpush1.msra.mxu0 0.0
    %2563 = vmatprep.subr.mxu0 0.0
    %2564 = vmatpush1.msra.mxu0 0.0
    %2565 = vmatprep.subr.mxu0 0.0
    %2566 = vmatpush1.msra.mxu0 0.0
    %2567 = vmatprep.subr.mxu0 0.0
    %2568 = vmatpush1.msra.mxu0 0.0
    %2569 = vmatprep.mubr.f32.mxu0 0.0
    %2570 = vmatmul.mubr.f32.gmra.mrb[0].mxu0 %v281
    %v2571 = vpop.f32.mrb[0].mxu0
    %v2572 = vadd.f32 0.0, %v2571
    %v2573 = vpop.f32.mrb[0].mxu0
    %2574 = vdwg.mxu0
    %v2575 = vsub.f32 %v2359, %v2572
    %v2576 = vmul.f32 %v2575, %v2575
    %2577 = vmatprep.subr.mxu0 0.0
    %2578 = vmatpush1.msra.mxu0 %v2576
    %2579 = vmatprep.subr.mxu0 0.0
    %2580 = vmatpush1.msra.mxu0 0.0
    %2581 = vmatprep.subr.mxu0 0.0
    %2582 = vmatpush1.msra.mxu0 0.0
    %2583 = vmatprep.subr.mxu0 0.0
    %2584 = vmatpush1.msra.mxu0 0.0
    %2585 = vmatprep.subr.mxu0 0.0
    %2586 = vmatpush1.msra.mxu0 0.0
    %2587 = vmatprep.subr.mxu0 0.0
    %2588 = vmatpush1.msra.mxu0 0.0
    %2589 = vmatprep.subr.mxu0 0.0
    %2590 = vmatpush1.msra.mxu0 0.0
    %2591 = vmatprep.subr.mxu0 0.0
    %2592 = vmatpush1.msra.mxu0 0.0
    %2593 = vmatprep.subr.mxu0 0.0
    %2594 = vmatpush1.msra.mxu0 0.0
    %2595 = vmatprep.subr.mxu0 0.0
    %2596 = vmatpush1.msra.mxu0 0.0
    %2597 = vmatprep.subr.mxu0 0.0
    %2598 = vmatpush1.msra.mxu0 0.0
    %2599 = vmatprep.subr.mxu0 0.0
    %2600 = vmatpush1.msra.mxu0 0.0
    %2601 = vmatprep.subr.mxu0 0.0
    %2602 = vmatpush1.msra.mxu0 0.0
    %2603 = vmatprep.subr.mxu0 0.0
    %2604 = vmatpush1.msra.mxu0 0.0
    %2605 = vmatprep.subr.mxu0 0.0
    %2606 = vmatpush1.msra.mxu0 0.0
    %2607 = vmatprep.subr.mxu0 0.0
    %2608 = vmatpush1.msra.mxu0 0.0
    %2609 = vmatprep.subr.mxu0 0.0
    %2610 = vmatpush1.msra.mxu0 0.0
    %2611 = vmatprep.subr.mxu0 0.0
    %2612 = vmatpush1.msra.mxu0 0.0
    %2613 = vmatprep.subr.mxu0 0.0
    %2614 = vmatpush1.msra.mxu0 0.0
    %2615 = vmatprep.subr.mxu0 0.0
    %2616 = vmatpush1.msra.mxu0 0.0
    %2617 = vmatprep.subr.mxu0 0.0
    %2618 = vmatpush1.msra.mxu0 0.0
    %2619 = vmatprep.subr.mxu0 0.0
    %2620 = vmatpush1.msra.mxu0 0.0
    %2621 = vmatprep.subr.mxu0 0.0
    %2622 = vmatpush1.msra.mxu0 0.0
    %2623 = vmatprep.subr.mxu0 0.0
    %2624 = vmatpush1.msra.mxu0 0.0
    %2625 = vmatprep.subr.mxu0 0.0
    %2626 = vmatpush1.msra.mxu0 0.0
    %2627 = vmatprep.subr.mxu0 0.0
    %2628 = vmatpush1.msra.mxu0 0.0
    %2629 = vmatprep.subr.mxu0 0.0
    %2630 = vmatpush1.msra.mxu0 0.0
    %2631 = vmatprep.subr.mxu0 0.0
    %2632 = vmatpush1.msra.mxu0 0.0
    %2633 = vmatprep.subr.mxu0 0.0
    %2634 = vmatpush1.msra.mxu0 0.0
    %2635 = vmatprep.subr.mxu0 0.0
    %2636 = vmatpush1.msra.mxu0 0.0
    %2637 = vmatprep.subr.mxu0 0.0
    %2638 = vmatpush1.msra.mxu0 0.0
    %2639 = vmatprep.subr.mxu0 0.0
    %2640 = vmatpush1.msra.mxu0 0.0
    %2641 = vmatprep.mubr.f32.mxu0 0.0
    %2642 = vmatmul.mubr.f32.gmra.mrb[0].mxu0 %v207
    %v2643 = vpop.f32.mrb[0].mxu0
    %v2644 = vadd.f32 0.0, %v2643
    %v2645 = vpop.f32.mrb[0].mxu0
    %2646 = vdwg.mxu0
    %v2648 = vsel %vm283, %v2644, 0
    %2650 = vmatprep.subr.mxu0 0.0
    %2651 = vmatpush1.msra.mxu0 %v2648
    %2652 = vmatprep.subr.mxu0 0.0
    %2653 = vmatpush1.msra.mxu0 0.0
    %2654 = vmatprep.subr.mxu0 0.0
    %2655 = vmatpush1.msra.mxu0 0.0
    %2656 = vmatprep.subr.mxu0 0.0
    %2657 = vmatpush1.msra.mxu0 0.0
    %2658 = vmatprep.subr.mxu0 0.0
    %2659 = vmatpush1.msra.mxu0 0.0
    %2660 = vmatprep.subr.mxu0 0.0
    %2661 = vmatpush1.msra.mxu0 0.0
    %2662 = vmatprep.subr.mxu0 0.0
    %2663 = vmatpush1.msra.mxu0 0.0
    %2664 = vmatprep.subr.mxu0 0.0
    %2665 = vmatpush1.msra.mxu0 0.0
    %2666 = vmatprep.subr.mxu0 0.0
    %2667 = vmatpush1.msra.mxu0 0.0
    %2668 = vmatprep.subr.mxu0 0.0
    %2669 = vmatpush1.msra.mxu0 0.0
    %2670 = vmatprep.subr.mxu0 0.0
    %2671 = vmatpush1.msra.mxu0 0.0
    %2672 = vmatprep.subr.mxu0 0.0
    %2673 = vmatpush1.msra.mxu0 0.0
    %2674 = vmatprep.subr.mxu0 0.0
    %2675 = vmatpush1.msra.mxu0 0.0
    %2676 = vmatprep.subr.mxu0 0.0
    %2677 = vmatpush1.msra.mxu0 0.0
    %2678 = vmatprep.subr.mxu0 0.0
    %2679 = vmatpush1.msra.mxu0 0.0
    %2680 = vmatprep.subr.mxu0 0.0
    %2681 = vmatpush1.msra.mxu0 0.0
    %2682 = vmatprep.subr.mxu0 0.0
    %2683 = vmatpush1.msra.mxu0 0.0
    %2684 = vmatprep.subr.mxu0 0.0
    %2685 = vmatpush1.msra.mxu0 0.0
    %2686 = vmatprep.subr.mxu0 0.0
    %2687 = vmatpush1.msra.mxu0 0.0
    %2688 = vmatprep.subr.mxu0 0.0
    %2689 = vmatpush1.msra.mxu0 0.0
    %2690 = vmatprep.subr.mxu0 0.0
    %2691 = vmatpush1.msra.mxu0 0.0
    %2692 = vmatprep.subr.mxu0 0.0
    %2693 = vmatpush1.msra.mxu0 0.0
    %2694 = vmatprep.subr.mxu0 0.0
    %2695 = vmatpush1.msra.mxu0 0.0
    %2696 = vmatprep.subr.mxu0 0.0
    %2697 = vmatpush1.msra.mxu0 0.0
    %2698 = vmatprep.subr.mxu0 0.0
    %2699 = vmatpush1.msra.mxu0 0.0
    %2700 = vmatprep.subr.mxu0 0.0
    %2701 = vmatpush1.msra.mxu0 0.0
    %2702 = vmatprep.subr.mxu0 0.0
    %2703 = vmatpush1.msra.mxu0 0.0
    %2704 = vmatprep.subr.mxu0 0.0
    %2705 = vmatpush1.msra.mxu0 0.0
    %2706 = vmatprep.subr.mxu0 0.0
    %2707 = vmatpush1.msra.mxu0 0.0
    %2708 = vmatprep.subr.mxu0 0.0
    %2709 = vmatpush1.msra.mxu0 0.0
    %2710 = vmatprep.subr.mxu0 0.0
    %2711 = vmatpush1.msra.mxu0 0.0
    %2712 = vmatprep.subr.mxu0 0.0
    %2713 = vmatpush1.msra.mxu0 0.0
    %2714 = vmatprep.mubr.f32.mxu0 0.0
    %2715 = vmatmul.mubr.f32.gmra.mrb[0].mxu0 %v281
    %v2716 = vpop.f32.mrb[0].mxu0
    %v2717 = vadd.f32 1e-05, %v2716
    %v2718 = vpop.f32.mrb[0].mxu0
    %2719 = vdwg.mxu0
    %v2720 = vrsqrt.pop %v2717
    %v2721 = vmul.f32 %v2575, %v2720
    %2722 = vmatprep.subr.mxu0 0.0
    %2723 = vmatpush1.msra.mxu0 %v2429
    %2724 = vmatprep.subr.mxu0 0.0
    %2725 = vmatpush1.msra.mxu0 0.0
    %2726 = vmatprep.subr.mxu0 0.0
    %2727 = vmatpush1.msra.mxu0 0.0
    %2728 = vmatprep.subr.mxu0 0.0
    %2729 = vmatpush1.msra.mxu0 0.0
    %2730 = vmatprep.subr.mxu0 0.0
    %2731 = vmatpush1.msra.mxu0 0.0
    %2732 = vmatprep.subr.mxu0 0.0
    %2733 = vmatpush1.msra.mxu0 0.0
    %2734 = vmatprep.subr.mxu0 0.0
    %2735 = vmatpush1.msra.mxu0 0.0
    %2736 = vmatprep.subr.mxu0 0.0
    %2737 = vmatpush1.msra.mxu0 0.0
    %2738 = vmatprep.subr.mxu0 0.0
    %2739 = vmatpush1.msra.mxu0 0.0
    %2740 = vmatprep.subr.mxu0 0.0
    %2741 = vmatpush1.msra.mxu0 0.0
    %2742 = vmatprep.subr.mxu0 0.0
    %2743 = vmatpush1.msra.mxu0 0.0
    %2744 = vmatprep.subr.mxu0 0.0
    %2745 = vmatpush1.msra.mxu0 0.0
    %2746 = vmatprep.subr.mxu0 0.0
    %2747 = vmatpush1.msra.mxu0 0.0
    %2748 = vmatprep.subr.mxu0 0.0
    %2749 = vmatpush1.msra.mxu0 0.0
    %2750 = vmatprep.subr.mxu0 0.0
    %2751 = vmatpush1.msra.mxu0 0.0
    %2752 = vmatprep.subr.mxu0 0.0
    %2753 = vmatpush1.msra.mxu0 0.0
    %2754 = vmatprep.subr.mxu0 0.0
    %2755 = vmatpush1.msra.mxu0 0.0
    %2756 = vmatprep.subr.mxu0 0.0
    %2757 = vmatpush1.msra.mxu0 0.0
    %2758 = vmatprep.subr.mxu0 0.0
    %2759 = vmatpush1.msra.mxu0 0.0
    %2760 = vmatprep.subr.mxu0 0.0
    %2761 = vmatpush1.msra.mxu0 0.0
    %2762 = vmatprep.subr.mxu0 0.0
    %2763 = vmatpush1.msra.mxu0 0.0
    %2764 = vmatprep.subr.mxu0 0.0
    %2765 = vmatpush1.msra.mxu0 0.0
    %2766 = vmatprep.subr.mxu0 0.0
    %2767 = vmatpush1.msra.mxu0 0.0
    %2768 = vmatprep.subr.mxu0 0.0
    %2769 = vmatpush1.msra.mxu0 0.0
    %2770 = vmatprep.subr.mxu0 0.0
    %2771 = vmatpush1.msra.mxu0 0.0
    %2772 = vmatprep.subr.mxu0 0.0
    %2773 = vmatpush1.msra.mxu0 0.0
    %2774 = vmatprep.subr.mxu0 0.0
    %2775 = vmatpush1.msra.mxu0 0.0
    %2776 = vmatprep.subr.mxu0 0.0
    %2777 = vmatpush1.msra.mxu0 0.0
    %2778 = vmatprep.subr.mxu0 0.0
    %2779 = vmatpush1.msra.mxu0 0.0
    %2780 = vmatprep.subr.mxu0 0.0
    %2781 = vmatpush1.msra.mxu0 0.0
    %2782 = vmatprep.subr.mxu0 0.0
    %2783 = vmatpush1.msra.mxu0 0.0
    %2784 = vmatprep.subr.mxu0 0.0
    %2785 = vmatpush1.msra.mxu0 0.0
    %2786 = vmatprep.mubr.f32.mxu0 0.0
    %2787 = vmatmul.mubr.f32.gmra.mrb[0].mxu0 %v207
    %v2788 = vpop.f32.mrb[0].mxu0
    %v2789 = vadd.f32 0.0, %v2788
    %v2790 = vpop.f32.mrb[0].mxu0
    %2791 = vdwg.mxu0
    %v2793 = vsel %vm283, %v2789, 0
    %2795 = vmatprep.subr.mxu0 0.0
    %2796 = vmatpush1.msra.mxu0 %v2793
    %2797 = vmatprep.subr.mxu0 0.0
    %2798 = vmatpush1.msra.mxu0 0.0
    %2799 = vmatprep.subr.mxu0 0.0
    %2800 = vmatpush1.msra.mxu0 0.0
    %2801 = vmatprep.subr.mxu0 0.0
    %2802 = vmatpush1.msra.mxu0 0.0
    %2803 = vmatprep.subr.mxu0 0.0
    %2804 = vmatpush1.msra.mxu0 0.0
    %2805 = vmatprep.subr.mxu0 0.0
    %2806 = vmatpush1.msra.mxu0 0.0
    %2807 = vmatprep.subr.mxu0 0.0
    %2808 = vmatpush1.msra.mxu0 0.0
    %2809 = vmatprep.subr.mxu0 0.0
    %2810 = vmatpush1.msra.mxu0 0.0
    %2811 = vmatprep.subr.mxu0 0.0
    %2812 = vmatpush1.msra.mxu0 0.0
    %2813 = vmatprep.subr.mxu0 0.0
    %2814 = vmatpush1.msra.mxu0 0.0
    %2815 = vmatprep.subr.mxu0 0.0
    %2816 = vmatpush1.msra.mxu0 0.0
    %2817 = vmatprep.subr.mxu0 0.0
    %2818 = vmatpush1.msra.mxu0 0.0
    %2819 = vmatprep.subr.mxu0 0.0
    %2820 = vmatpush1.msra.mxu0 0.0
    %2821 = vmatprep.subr.mxu0 0.0
    %2822 = vmatpush1.msra.mxu0 0.0
    %2823 = vmatprep.subr.mxu0 0.0
    %2824 = vmatpush1.msra.mxu0 0.0
    %2825 = vmatprep.subr.mxu0 0.0
    %2826 = vmatpush1.msra.mxu0 0.0
    %2827 = vmatprep.subr.mxu0 0.0
    %2828 = vmatpush1.msra.mxu0 0.0
    %2829 = vmatprep.subr.mxu0 0.0
    %2830 = vmatpush1.msra.mxu0 0.0
    %2831 = vmatprep.subr.mxu0 0.0
    %2832 = vmatpush1.msra.mxu0 0.0
    %2833 = vmatprep.subr.mxu0 0.0
    %2834 = vmatpush1.msra.mxu0 0.0
    %2835 = vmatprep.subr.mxu0 0.0
    %2836 = vmatpush1.msra.mxu0 0.0
    %2837 = vmatprep.subr.mxu0 0.0
    %2838 = vmatpush1.msra.mxu0 0.0
    %2839 = vmatprep.subr.mxu0 0.0
    %2840 = vmatpush1.msra.mxu0 0.0
    %2841 = vmatprep.subr.mxu0 0.0
    %2842 = vmatpush1.msra.mxu0 0.0
    %2843 = vmatprep.subr.mxu0 0.0
    %2844 = vmatpush1.msra.mxu0 0.0
    %2845 = vmatprep.subr.mxu0 0.0
    %2846 = vmatpush1.msra.mxu0 0.0
    %2847 = vmatprep.subr.mxu0 0.0
    %2848 = vmatpush1.msra.mxu0 0.0
    %2849 = vmatprep.subr.mxu0 0.0
    %2850 = vmatpush1.msra.mxu0 0.0
    %2851 = vmatprep.subr.mxu0 0.0
    %2852 = vmatpush1.msra.mxu0 0.0
    %2853 = vmatprep.subr.mxu0 0.0
    %2854 = vmatpush1.msra.mxu0 0.0
    %2855 = vmatprep.subr.mxu0 0.0
    %2856 = vmatpush1.msra.mxu0 0.0
    %2857 = vmatprep.subr.mxu0 0.0
    %2858 = vmatpush1.msra.mxu0 0.0
    %2859 = vmatprep.mubr.f32.mxu0 0.0
    %2860 = vmatmul.mubr.f32.gmra.mrb[0].mxu0 %v281
    %v2861 = vpop.f32.mrb[0].mxu0
    %v2862 = vadd.f32 0.0, %v2861
    %v2863 = vpop.f32.mrb[0].mxu0
    %2864 = vdwg.mxu0
    %v2865 = vsub.f32 %v2429, %v2862
    %v2866 = vmul.f32 %v2865, %v2865
    %2867 = vmatprep.subr.mxu0 0.0
    %2868 = vmatpush1.msra.mxu0 %v2866
    %2869 = vmatprep.subr.mxu0 0.0
    %2870 = vmatpush1.msra.mxu0 0.0
    %2871 = vmatprep.subr.mxu0 0.0
    %2872 = vmatpush1.msra.mxu0 0.0
    %2873 = vmatprep.subr.mxu0 0.0
    %2874 = vmatpush1.msra.mxu0 0.0
    %2875 = vmatprep.subr.mxu0 0.0
    %2876 = vmatpush1.msra.mxu0 0.0
    %2877 = vmatprep.subr.mxu0 0.0
    %2878 = vmatpush1.msra.mxu0 0.0
    %2879 = vmatprep.subr.mxu0 0.0
    %2880 = vmatpush1.msra.mxu0 0.0
    %2881 = vmatprep.subr.mxu0 0.0
    %2882 = vmatpush1.msra.mxu0 0.0
    %2883 = vmatprep.subr.mxu0 0.0
    %2884 = vmatpush1.msra.mxu0 0.0
    %2885 = vmatprep.subr.mxu0 0.0
    %2886 = vmatpush1.msra.mxu0 0.0
    %2887 = vmatprep.subr.mxu0 0.0
    %2888 = vmatpush1.msra.mxu0 0.0
    %2889 = vmatprep.subr.mxu0 0.0
    %2890 = vmatpush1.msra.mxu0 0.0
    %2891 = vmatprep.subr.mxu0 0.0
    %2892 = vmatpush1.msra.mxu0 0.0
    %2893 = vmatprep.subr.mxu0 0.0
    %2894 = vmatpush1.msra.mxu0 0.0
    %2895 = vmatprep.subr.mxu0 0.0
    %2896 = vmatpush1.msra.mxu0 0.0
    %2897 = vmatprep.subr.mxu0 0.0
    %2898 = vmatpush1.msra.mxu0 0.0
    %2899 = vmatprep.subr.mxu0 0.0
    %2900 = vmatpush1.msra.mxu0 0.0
    %2901 = vmatprep.subr.mxu0 0.0
    %2902 = vmatpush1.msra.mxu0 0.0
    %2903 = vmatprep.subr.mxu0 0.0
    %2904 = vmatpush1.msra.mxu0 0.0
    %2905 = vmatprep.subr.mxu0 0.0
    %2906 = vmatpush1.msra.mxu0 0.0
    %2907 = vmatprep.subr.mxu0 0.0
    %2908 = vmatpush1.msra.mxu0 0.0
    %2909 = vmatprep.subr.mxu0 0.0
    %2910 = vmatpush1.msra.mxu0 0.0
    %2911 = vmatprep.subr.mxu0 0.0
    %2912 = vmatpush1.msra.mxu0 0.0
    %2913 = vmatprep.subr.mxu0 0.0
    %2914 = vmatpush1.msra.mxu0 0.0
    %2915 = vmatprep.subr.mxu0 0.0
    %2916 = vmatpush1.msra.mxu0 0.0
    %2917 = vmatprep.subr.mxu0 0.0
    %2918 = vmatpush1.msra.mxu0 0.0
    %2919 = vmatprep.subr.mxu0 0.0
    %2920 = vmatpush1.msra.mxu0 0.0
    %2921 = vmatprep.subr.mxu0 0.0
    %2922 = vmatpush1.msra.mxu0 0.0
    %2923 = vmatprep.subr.mxu0 0.0
    %2924 = vmatpush1.msra.mxu0 0.0
    %2925 = vmatprep.subr.mxu0 0.0
    %2926 = vmatpush1.msra.mxu0 0.0
    %2927 = vmatprep.subr.mxu0 0.0
    %2928 = vmatpush1.msra.mxu0 0.0
    %2929 = vmatprep.subr.mxu0 0.0
    %2930 = vmatpush1.msra.mxu0 0.0
    %2931 = vmatprep.mubr.f32.mxu0 0.0
    %2932 = vmatmul.mubr.f32.gmra.mrb[0].mxu0 %v207
    %v2933 = vpop.f32.mrb[0].mxu0
    %v2934 = vadd.f32 0.0, %v2933
    %v2935 = vpop.f32.mrb[0].mxu0
    %2936 = vdwg.mxu0
    %v2938 = vsel %vm283, %v2934, 0
    %2940 = vmatprep.subr.mxu0 0.0
    %2941 = vmatpush1.msra.mxu0 %v2938
    %2942 = vmatprep.subr.mxu0 0.0
    %2943 = vmatpush1.msra.mxu0 0.0
    %2944 = vmatprep.subr.mxu0 0.0
    %2945 = vmatpush1.msra.mxu0 0.0
    %2946 = vmatprep.subr.mxu0 0.0
    %2947 = vmatpush1.msra.mxu0 0.0
    %2948 = vmatprep.subr.mxu0 0.0
    %2949 = vmatpush1.msra.mxu0 0.0
    %2950 = vmatprep.subr.mxu0 0.0
    %2951 = vmatpush1.msra.mxu0 0.0
    %2952 = vmatprep.subr.mxu0 0.0
    %2953 = vmatpush1.msra.mxu0 0.0
    %2954 = vmatprep.subr.mxu0 0.0
    %2955 = vmatpush1.msra.mxu0 0.0
    %2956 = vmatprep.subr.mxu0 0.0
    %2957 = vmatpush1.msra.mxu0 0.0
    %2958 = vmatprep.subr.mxu0 0.0
    %2959 = vmatpush1.msra.mxu0 0.0
    %2960 = vmatprep.subr.mxu0 0.0
    %2961 = vmatpush1.msra.mxu0 0.0
    %2962 = vmatprep.subr.mxu0 0.0
    %2963 = vmatpush1.msra.mxu0 0.0
    %2964 = vmatprep.subr.mxu0 0.0
    %2965 = vmatpush1.msra.mxu0 0.0
    %2966 = vmatprep.subr.mxu0 0.0
    %2967 = vmatpush1.msra.mxu0 0.0
    %2968 = vmatprep.subr.mxu0 0.0
    %2969 = vmatpush1.msra.mxu0 0.0
    %2970 = vmatprep.subr.mxu0 0.0
    %2971 = vmatpush1.msra.mxu0 0.0
    %2972 = vmatprep.subr.mxu0 0.0
    %2973 = vmatpush1.msra.mxu0 0.0
    %2974 = vmatprep.subr.mxu0 0.0
    %2975 = vmatpush1.msra.mxu0 0.0
    %2976 = vmatprep.subr.mxu0 0.0
    %2977 = vmatpush1.msra.mxu0 0.0
    %2978 = vmatprep.subr.mxu0 0.0
    %2979 = vmatpush1.msra.mxu0 0.0
    %2980 = vmatprep.subr.mxu0 0.0
    %2981 = vmatpush1.msra.mxu0 0.0
    %2982 = vmatprep.subr.mxu0 0.0
    %2983 = vmatpush1.msra.mxu0 0.0
    %2984 = vmatprep.subr.mxu0 0.0
    %2985 = vmatpush1.msra.mxu0 0.0
    %2986 = vmatprep.subr.mxu0 0.0
    %2987 = vmatpush1.msra.mxu0 0.0
    %2988 = vmatprep.subr.mxu0 0.0
    %2989 = vmatpush1.msra.mxu0 0.0
    %2990 = vmatprep.subr.mxu0 0.0
    %2991 = vmatpush1.msra.mxu0 0.0
    %2992 = vmatprep.subr.mxu0 0.0
    %2993 = vmatpush1.msra.mxu0 0.0
    %2994 = vmatprep.subr.mxu0 0.0
    %2995 = vmatpush1.msra.mxu0 0.0
    %2996 = vmatprep.subr.mxu0 0.0
    %2997 = vmatpush1.msra.mxu0 0.0
    %2998 = vmatprep.subr.mxu0 0.0
    %2999 = vmatpush1.msra.mxu0 0.0
    %3000 = vmatprep.subr.mxu0 0.0
    %3001 = vmatpush1.msra.mxu0 0.0
    %3002 = vmatprep.subr.mxu0 0.0
    %3003 = vmatpush1.msra.mxu0 0.0
    %3004 = vmatprep.mubr.f32.mxu0 0.0
    %3005 = vmatmul.mubr.f32.gmra.mrb[0].mxu0 %v281
    %v3006 = vpop.f32.mrb[0].mxu0
    %v3007 = vadd.f32 1e-05, %v3006
    %v3008 = vpop.f32.mrb[0].mxu0
    %3009 = vdwg.mxu0
    %v3010 = vrsqrt.pop %v3007
    %v3011 = vmul.f32 %v2865, %v3010
    %v3012 = vxor.u32 %v3011, 2147483648
    %v3013 = vmul.f32 %v3012, 1.442695
    %v3014 = vpow.pop %v3013
    %v3015 = vadd.f32 %v3014, 1.0
    %v3016 = vrcp.pop %v3015
    %v3017 = vmul.f32 1.0, %v3016
    %v3018 = vmul.f32 %v2721, %v3017
    %v3019 = vadd.f32 %v2280, %v3018
    %v3020 = vmul.f32 %v3019, 0.70710677
    %v3021 = vld [vmem:[%s3] sm:$0xff]
    %v3022 = vld [vmem:[%s3 + $0x8] sm:$0xff]
    %v3023 = vld [vmem:[%s3 + $0x10] sm:$0xff]
    %v3025 = vsel %vm61, %v3020, 0
    %3027 = vmatprep.subr.mxu0 0.0
    %3028 = vmatpush1.msra.mxu0 %v3021
    %3029 = vmatprep.subr.mxu0 0.0
    %3030 = vmatpush1.msra.mxu0 %v3022
    %3031 = vmatprep.subr.mxu0 0.0
    %3032 = vmatpush1.msra.mxu0 %v3023
    %3033 = vmatprep.subr.mxu0 0.0
    %3034 = vmatpush1.msra.mxu0 0.0
    %3035 = vmatprep.subr.mxu0 0.0
    %3036 = vmatpush1.msra.mxu0 0.0
    %3037 = vmatprep.subr.mxu0 0.0
    %3038 = vmatpush1.msra.mxu0 0.0
    %3039 = vmatprep.subr.mxu0 0.0
    %3040 = vmatpush1.msra.mxu0 0.0
    %3041 = vmatprep.subr.mxu0 0.0
    %3042 = vmatpush1.msra.mxu0 0.0
    %3043 = vmatprep.subr.mxu0 0.0
    %3044 = vmatpush1.msra.mxu0 0.0
    %3045 = vmatprep.subr.mxu0 0.0
    %3046 = vmatpush1.msra.mxu0 0.0
    %3047 = vmatprep.subr.mxu0 0.0
    %3048 = vmatpush1.msra.mxu0 0.0
    %3049 = vmatprep.subr.mxu0 0.0
    %3050 = vmatpush1.msra.mxu0 0.0
    %3051 = vmatprep.subr.mxu0 0.0
    %3052 = vmatpush1.msra.mxu0 0.0
    %3053 = vmatprep.subr.mxu0 0.0
    %3054 = vmatpush1.msra.mxu0 0.0
    %3055 = vmatprep.subr.mxu0 0.0
    %3056 = vmatpush1.msra.mxu0 0.0
    %3057 = vmatprep.subr.mxu0 0.0
    %3058 = vmatpush1.msra.mxu0 0.0
    %3059 = vmatprep.subr.mxu0 0.0
    %3060 = vmatpush1.msra.mxu0 0.0
    %3061 = vmatprep.subr.mxu0 0.0
    %3062 = vmatpush1.msra.mxu0 0.0
    %3063 = vmatprep.subr.mxu0 0.0
    %3064 = vmatpush1.msra.mxu0 0.0
    %3065 = vmatprep.subr.mxu0 0.0
    %3066 = vmatpush1.msra.mxu0 0.0
    %3067 = vmatprep.subr.mxu0 0.0
    %3068 = vmatpush1.msra.mxu0 0.0
    %3069 = vmatprep.subr.mxu0 0.0
    %3070 = vmatpush1.msra.mxu0 0.0
    %3071 = vmatprep.subr.mxu0 0.0
    %3072 = vmatpush1.msra.mxu0 0.0
    %3073 = vmatprep.subr.mxu0 0.0
    %3074 = vmatpush1.msra.mxu0 0.0
    %3075 = vmatprep.subr.mxu0 0.0
    %3076 = vmatpush1.msra.mxu0 0.0
    %3077 = vmatprep.subr.mxu0 0.0
    %3078 = vmatpush1.msra.mxu0 0.0
    %3079 = vmatprep.subr.mxu0 0.0
    %3080 = vmatpush1.msra.mxu0 0.0
    %3081 = vmatprep.subr.mxu0 0.0
    %3082 = vmatpush1.msra.mxu0 0.0
    %3083 = vmatprep.subr.mxu0 0.0
    %3084 = vmatpush1.msra.mxu0 0.0
    %3085 = vmatprep.subr.mxu0 0.0
    %3086 = vmatpush1.msra.mxu0 0.0
    %3087 = vmatprep.subr.mxu0 0.0
    %3088 = vmatpush1.msra.mxu0 0.0
    %3089 = vmatprep.subr.mxu0 0.0
    %3090 = vmatpush1.msra.mxu0 0.0
    %3091 = vmatprep.mubr.f32.mxu0 0.0
    %3092 = vmatmul.mubr.f32.gmra.mrb[0].mxu0 %v3025
    %v3093 = vpop.f32.mrb[0].mxu0
    %v3094 = vadd.f32 0.0, %v3093
    %v3095 = vpop.f32.mrb[0].mxu0
    %3096 = vdwg.mxu0
    %vm3097 = vcmask 130048
    %3098 = vst.msk [vmem:[#allocation7] sm:$0xff] %vm3097, %v3094
    // Predicated region
    $region34: #{tpu_custom_call.1} parent=1 // pred_check
      _
    $region35: #{tpu_custom_call.1} parent=1 // pred_check_branch
      %3100 = sbr.rel (0) target = $region37
    $region36: #{tpu_custom_call.1} parent=1 // pred_region
      %s3102 = ssub.s32 128, 128
      %3103 = vsyncadd [#allocation4], %s3102
      %s3105 = sshll.u32 [#allocation7], 4
      %s3106 = int_to_ptr.vmem [resolvable:$true] %s3105
      %3108 = dma.vmem_to_hbm [thread:$0]  %s3106, 128, %s6, [#allocation4]
    $region37: #{tpu_custom_call.1} parent=1 // pred_fallthru
      _
    // Predicated region
    $region38: #{tpu_custom_call.1} parent=1 // pred_check
      _
    $region39: #{tpu_custom_call.1} parent=1 // pred_check_branch
      %3110 = sbr.rel (0) target = $region41
    $region40: #{tpu_custom_call.1} parent=1 // pred_region
      %3111 = dma.done [#allocation4], 128
    $region41: #{tpu_custom_call.1} parent=1 // pred_fallthru
      _
    %3112 = vsyncpa [#allocation3], 1
    %3113 = vsyncpa [#allocation6], 1
    %3114 = vsyncpa [#allocation4], 1

</llo_original>
